<compile_context>
chip_gen: v7x
topology: tpu7x:2x2x1
jax: 0.10.0
libtpu: 0.0.40
codegen_flags: <defaults>
</compile_context>

<pallas_src>
import math

import numpy as np
import jax
import jax.numpy as jnp
from jax.experimental import pallas as pl
from jax.experimental.pallas import tpu as pltpu

NEG_SLOPE = 0.1            # nanodet act_layers("LeakyReLU") -> negative_slope=0.1
BN_EPS = 1e-5
VMEM_LIMIT = 32 * 1024 * 1024   # safe on v5e/v6e/v7x; raise toward 64-96MiB on
                                # v5e/v6e if blocks ever grow, keep <=48MiB on v7x.


# ---------------------------------------------------------------------------
# in-kernel building blocks (operate on lane-packed (H, W*C) f32 values)
# ---------------------------------------------------------------------------
def _conv_block(x2, wm_ref, sb_ref, cfg):
    """Conv2d + folded BN + LeakyReLU on a lane-packed (H, W*Cin) value.

    wm_ref: (k, Wp*Cin, Wo*Cout)  width-Toeplitz weight matrices (one per kh).
    sb_ref: (2, Wo*Cout)          row 0 = tiled BN scale, row 1 = tiled BN bias.
    Returns a lane-packed (Ho, Wo*Cout) value.
    """
    k, s, p = cfg["k"], cfg["stride"], cfg["pad"]
    cin = cfg["cin"]
    ho, wo, cout = cfg["ho"], cfg["wo"], cfg["cout"]
    h, wc = x2.shape
    dt = x2.dtype

    # zero padding done in-register (rows = sublanes, cols = lanes)
    if p:
        zr = jnp.zeros((p, wc), dt)
        x2 = jnp.concatenate([zr, x2, zr], axis=0)
        zc = jnp.zeros((h + 2 * p, p * cin), dt)
        x2 = jnp.concatenate([zc, x2, zc], axis=1)

    if s == 1:
        acc = None
        for kh in range(k):                      # k row-shifted MXU matmuls
            part = jnp.dot(x2[kh:kh + ho, :], wm_ref[kh],
                           preferred_element_type=jnp.float32)
            acc = part if acc is None else acc + part
    else:
        # stride-2: matmul all padded rows, then statically gather rows s*i+kh
        ys = [jnp.dot(x2, wm_ref[kh], preferred_element_type=jnp.float32)
              for kh in range(k)]
        rows = []
        for i in range(ho):
            r = None
            for kh in range(k):
                piece = ys[kh][s * i + kh: s * i + kh + 1, :]
                r = piece if r is None else r + piece
            rows.append(r)
        acc = rows[0] if ho == 1 else jnp.concatenate(rows, axis=0)

    sb = sb_ref[...]                              # (2, Wo*Cout), f32 epilogue
    y = acc * sb[0:1, :] + sb[1:2, :]             # folded BN
    return jnp.where(y >= 0.0, y, NEG_SLOPE * y)  # LeakyReLU(0.1)


def _maxpool_block(x2, cfg):
    """nn.MaxPool2d(k, s, p) on a lane-packed (H, W*C) value."""
    k, s, p, c = cfg["k"], cfg["stride"], cfg["pad"], cfg["c"]
    ho, wo = cfg["ho"], cfg["wo"]
    h, wc = x2.shape
    dt = x2.dtype

    if p:
        pr = jnp.full((p, wc), -jnp.inf, dt)
        x2 = jnp.concatenate([pr, x2, pr], axis=0)
        pc = jnp.full((h + 2 * p, p * c), -jnp.inf, dt)
        x2 = jnp.concatenate([pc, x2, pc], axis=1)

    rows = []
    for i in range(ho):
        rm = None
        for kh in range(k):                       # reduce over kh (rows)
            r = x2[s * i + kh: s * i + kh + 1, :]
            rm = r if rm is None else jnp.maximum(rm, r)
        cols = []
        for j in range(wo):                       # reduce over kw (lane blocks)
            cm = None
            for kw in range(k):
                v = rm[:, (s * j + kw) * c: (s * j + kw) * c + c]
                cm = v if cm is None else jnp.maximum(cm, v)
            cols.append(cm)
        rows.append(cols[0] if wo == 1 else jnp.concatenate(cols, axis=1))
    return rows[0] if ho == 1 else jnp.concatenate(rows, axis=0)


def _channel_cat(a, b, ca, cb, w):
    """torch.cat((a, b), dim=1) in lane-packed layout (per-pixel interleave)."""
    pieces = []
    for j in range(w):
        pieces.append(a[:, j * ca:(j + 1) * ca])
        pieces.append(b[:, j * cb:(j + 1) * cb])
    return jnp.concatenate(pieces, axis=1)


# ---------------------------------------------------------------------------
# fused whole-network kernel
# ---------------------------------------------------------------------------
def _iter_convs(stages):
    for kind, p in stages:
        if kind == "Conv":
            yield p
        elif kind == "CspBlock":
            yield p["in_conv"]
            for rb in p["res_blocks"]:
                yield rb["in"]
                yield rb["mid"]
            yield p["res_out"]


def _make_net_kernel(stages, out_stage_ids):
    n_out = len(out_stage_ids)

    def kernel(x_ref, *refs):
        param_refs = refs[: len(refs) - n_out]
        out_refs = refs[len(refs) - n_out:]
        pit = iter(param_refs)

        def conv(x2, cfg):
            wm = next(pit)
            sb = next(pit)
            return _conv_block(x2, wm, sb, cfg)

        x = x_ref[0]                               # (H, W*Cin) lane-packed
        oi = 0
        for si, (kind, p) in enumerate(stages):
            if kind == "Conv":
                x = conv(x, p)
            elif kind == "MaxPool":
                x = _maxpool_block(x, p)
            else:                                  # CspBlock
                xin = conv(x, p["in_conv"])
                x1 = xin
                for rb in p["res_blocks"]:         # TinyResBlock (res_type='concat')
                    h = conv(x1, rb["in"])
                    h1 = conv(h, rb["mid"])
                    x1 = _channel_cat(h1, h, rb["mid"]["cout"],
                                      rb["in"]["cout"], rb["mid"]["wo"])
                x1 = conv(x1, p["res_out"])
                x = _channel_cat(x1, xin, p["res_out"]["cout"],
                                 p["in_conv"]["cout"], p["res_out"]["wo"])
            if si in out_stage_ids:
                out_refs[oi][0] = x.astype(out_refs[oi].dtype)
                oi += 1

    return kernel


def custom_csp_forward(model, x_nchw):
    stages = model["stages"]
    out_stage_ids = model["out_stages"]
    out_meta = [model["stage_out_shapes"][i] for i in out_stage_ids]

    n, cin, h, w = x_nchw.shape
    # NCHW -> lane-packed (N, H, W*Cin); the only XLA-side layout op per call.
    x2 = jnp.transpose(x_nchw, (0, 2, 3, 1)).reshape(n, h, w * cin)
    x2 = x2.astype(jnp.float32)

    flat_params = []
    for c in _iter_convs(stages):
        flat_params.append(c["wmat"])
        flat_params.append(c["sb"])

    in_specs = [pl.BlockSpec((1, h, w * cin), lambda b: (b, 0, 0))]
    for arr in flat_params:                        # grid-invariant tiny weights
        in_specs.append(pl.BlockSpec(arr.shape, lambda b, _z=(0,) * arr.ndim: _z))

    out_specs = tuple(pl.BlockSpec((1, ho, wo * c), lambda b: (b, 0, 0))
                      for (ho, wo, c) in out_meta)
    out_shape = tuple(jax.ShapeDtypeStruct((n, ho, wo * c), jnp.float32)
                      for (ho, wo, c) in out_meta)

    outs = pl.pallas_call(
        _make_net_kernel(stages, out_stage_ids),
        grid=(n,),                                 # >=2 grid units -> v7x megacore
        in_specs=in_specs,
        out_specs=out_specs,
        out_shape=out_shape,
        compiler_params=pltpu.CompilerParams(
            dimension_semantics=("parallel",),
            vmem_limit_bytes=VMEM_LIMIT),
    )(x2, *flat_params)

    results = []
    for o, (ho, wo, c) in zip(outs, out_meta):     # lane-packed -> NCHW
        results.append(jnp.transpose(o.reshape(n, ho, wo, c), (0, 3, 1, 2)))
    return tuple(results)


# ---------------------------------------------------------------------------
# deterministic parameter init (matches __init__ shapes / _init_weight)
# ---------------------------------------------------------------------------
def _init_conv(key, cin, cout, k, s, h, w):
    p = (k - 1) // 2
    ho = (h + 2 * p - k) // s + 1
    wo = (w + 2 * p - k) // s + 1
    wp = w + 2 * p

    # Conv2d: kaiming_normal_(mode='fan_out', nonlinearity='leaky_relu'), a=0
    std = math.sqrt(2.0) / math.sqrt(cout * k * k)
    w_raw = std * jax.random.normal(key, (k, k, cin, cout), jnp.float32)  # HWIO
    w_np = np.asarray(w_raw, np.float32)

    # Width-Toeplitz repack: W_kh[(s*j+kw)*Cin + c, j*Cout + co] = w[kh,kw,c,co]
    wmat = np.zeros((k, wp * cin, wo * cout), np.float32)
    for kh in range(k):
        for kw in range(k):
            for j in range(wo):
                r = (s * j + kw) * cin
                c0 = j * cout
                wmat[kh, r:r + cin, c0:c0 + cout] = w_np[kh, kw]

    # BN at init: gamma=1, beta=0, running_mean=0, running_var=1  -> fold.
    scale = np.full((cout,), 1.0 / math.sqrt(1.0 + BN_EPS), np.float32)
    bias = np.zeros((cout,), np.float32)
    sb = np.stack([np.tile(scale, wo), np.tile(bias, wo)], axis=0)

    return {"k": k, "stride": s, "pad": p, "cin": cin, "cout": cout,
            "ho": ho, "wo": wo,
            "wmat": jnp.asarray(wmat), "sb": jnp.asarray(sb),
            "w_raw": w_raw,
            "scale": jnp.asarray(scale), "bias": jnp.asarray(bias)}


def build_custom_csp(key, net_cfg, out_stages, in_channels, input_hw):
    H, W = input_hw
    C = in_channels
    stages, stage_out = [], []
    for cfg in net_cfg:
        if cfg[0] == "Conv":
            _, cin, cout, k, s = cfg
            assert cin == C
            key, sub = jax.random.split(key)
            conv = _init_conv(sub, cin, cout, k, s, H, W)
            H, W, C = conv["ho"], conv["wo"], cout
            stages.append(("Conv", conv))
        elif cfg[0] == "MaxPool":
            _, k, s = cfg
            p = (k - 1) // 2
            ho = (H + 2 * p - k) // s + 1
            wo = (W + 2 * p - k) // s + 1
            stages.append(("MaxPool", {"k": k, "stride": s, "pad": p,
                                       "ho": ho, "wo": wo, "c": C}))
            H, W = ho, wo
        elif cfg[0] == "CspBlock":
            _, cin, num_res, k, s = cfg
            assert cin == C and cin % 2 == 0
            key, sub = jax.random.split(key)
            in_conv = _init_conv(sub, cin, cin, k, s, H, W)
            H, W = in_conv["ho"], in_conv["wo"]
            res_blocks = []
            for _ in range(num_res):
                key, ka, kb = jax.random.split(key, 3)
                res_blocks.append({
                    "in": _init_conv(ka, cin, cin // 2, k, 1, H, W),
                    "mid": _init_conv(kb, cin // 2, cin // 2, k, 1, H, W),
                })
            key, ko = jax.random.split(key)
            res_out = _init_conv(ko, cin, cin, k, 1, H, W)
            C = 2 * cin
            stages.append(("CspBlock", {"in_conv": in_conv,
                                        "res_blocks": res_blocks,
                                        "res_out": res_out}))
        else:
            raise ValueError(f"unknown stage {cfg[0]}")
        stage_out.append((H, W, C))
    return {"stages": stages, "out_stages": tuple(out_stages),
            "stage_out_shapes": stage_out}


# ---------------------------------------------------------------------------
# pure-JAX reference (for a tolerance check against the fused kernel)
# ---------------------------------------------------------------------------
def reference_forward(model, x_nchw):
    stages, out_ids = model["stages"], model["out_stages"]
    x = jnp.transpose(x_nchw, (0, 2, 3, 1)).astype(jnp.float32)   # NHWC

    def conv(x, cfg):
        s, p = cfg["stride"], cfg["pad"]
        y = jax.lax.conv_general_dilated(
            x, cfg["w_raw"], (s, s), ((p, p), (p, p)),
            dimension_numbers=("NHWC", "HWIO", "NHWC"))
        y = y * cfg["scale"].reshape(1, 1, 1, -1) + cfg["bias"].reshape(1, 1, 1, -1)
        return jnp.where(y >= 0.0, y, NEG_SLOPE * y)

    outs = []
    for si, (kind, p) in enumerate(stages):
        if kind == "Conv":
            x = conv(x, p)
        elif kind == "MaxPool":
            k, s, pad = p["k"], p["stride"], p["pad"]
            x = jax.lax.reduce_window(
                x, -jnp.inf, jax.lax.max, (1, k, k, 1), (1, s, s, 1),
                ((0, 0), (pad, pad), (pad, pad), (0, 0)))
        else:
            xin = conv(x, p["in_conv"])
            x1 = xin
            for rb in p["res_blocks"]:
                h = conv(x1, rb["in"])
                h1 = conv(h, rb["mid"])
                x1 = jnp.concatenate([h1, h], axis=-1)
            x1 = conv(x1, p["res_out"])
            x = jnp.concatenate([x1, xin], axis=-1)
        if si in out_ids:
            outs.append(jnp.transpose(x, (0, 3, 1, 2)))
    return tuple(outs)


# ---------------------------------------------------------------------------
if __name__ == "__main__":
    net_cfg = [
        ["Conv", 3, 8, 3, 2],          # stage 0: 16x16 -> 8x8, 8 ch
        ["MaxPool", 3, 2],             # stage 1: 8x8 -> 4x4
        ["CspBlock", 8, 1, 3, 1],      # stage 2: 4x4, 16 ch out
        ["CspBlock", 16, 1, 3, 2],     # stage 3: 2x2, 32 ch out
    ]
    out_stages = (2, 3)

    key = jax.random.PRNGKey(0)
    kp, kx = jax.random.split(key)
    model = build_custom_csp(kp, net_cfg, out_stages, in_channels=3,
                             input_hw=(16, 16))
    x = jax.random.normal(kx, (2, 3, 16, 16), jnp.float32)   # NCHW like torch

    fwd = jax.jit(lambda xx: custom_csp_forward(model, xx))
    outs = jax.block_until_ready(fwd(x))

    assert outs[0].shape == (2, 16, 4, 4), outs[0].shape
    assert outs[1].shape == (2, 32, 2, 2), outs[1].shape

    refs = jax.block_until_ready(reference_forward(model, x))
    for o, r in zip(outs, refs):
        assert o.shape == r.shape
        assert bool(jnp.isfinite(o).all())
        assert bool(jnp.allclose(o, r, rtol=2e-3, atol=2e-3)), \
            float(jnp.max(jnp.abs(o - r)))

    print("KERNEL_OK")
</pallas_src>

<mosaic_0001>
module attributes {stable_mosaic.version = 11 : i64} {
  func.func @kernel(%arg0: i32, %arg1: memref<1x16x48xf32, #tpu.memory_space<vmem>>, %arg2: memref<3x54x64xf32, #tpu.memory_space<vmem>>, %arg3: memref<2x64xf32, #tpu.memory_space<vmem>>, %arg4: memref<3x48x32xf32, #tpu.memory_space<vmem>>, %arg5: memref<2x32xf32, #tpu.memory_space<vmem>>, %arg6: memref<3x48x16xf32, #tpu.memory_space<vmem>>, %arg7: memref<2x16xf32, #tpu.memory_space<vmem>>, %arg8: memref<3x24x16xf32, #tpu.memory_space<vmem>>, %arg9: memref<2x16xf32, #tpu.memory_space<vmem>>, %arg10: memref<3x48x32xf32, #tpu.memory_space<vmem>>, %arg11: memref<2x32xf32, #tpu.memory_space<vmem>>, %arg12: memref<3x96x32xf32, #tpu.memory_space<vmem>>, %arg13: memref<2x32xf32, #tpu.memory_space<vmem>>, %arg14: memref<3x64x16xf32, #tpu.memory_space<vmem>>, %arg15: memref<2x16xf32, #tpu.memory_space<vmem>>, %arg16: memref<3x32x16xf32, #tpu.memory_space<vmem>>, %arg17: memref<2x16xf32, #tpu.memory_space<vmem>>, %arg18: memref<3x64x32xf32, #tpu.memory_space<vmem>>, %arg19: memref<2x32xf32, #tpu.memory_space<vmem>>, %arg20: memref<1x4x64xf32, #tpu.memory_space<vmem>>, %arg21: memref<1x2x64xf32, #tpu.memory_space<vmem>>) attributes {dimension_semantics = [#tpu.dimension_semantics<parallel>], iteration_bounds = array<i64: 2>, scalar_prefetch = 0 : i64, scratch_operands = 0 : i64, tpu.core_type = #tpu.core_type<tc>, window_params = [{transform_indices = @transform_0, window_bounds = array<i64: 1, 16, 48>}, {pipeline_mode = #tpu.pipeline_mode<synchronous>, transform_indices = @transform_1, window_bounds = array<i64: 3, 54, 64>}, {pipeline_mode = #tpu.pipeline_mode<synchronous>, transform_indices = @transform_2, window_bounds = array<i64: 2, 64>}, {pipeline_mode = #tpu.pipeline_mode<synchronous>, transform_indices = @transform_3, window_bounds = array<i64: 3, 48, 32>}, {pipeline_mode = #tpu.pipeline_mode<synchronous>, transform_indices = @transform_4, window_bounds = array<i64: 2, 32>}, {pipeline_mode = #tpu.pipeline_mode<synchronous>, transform_indices = @transform_5, window_bounds = array<i64: 3, 48, 16>}, {pipeline_mode = #tpu.pipeline_mode<synchronous>, transform_indices = @transform_6, window_bounds = array<i64: 2, 16>}, {pipeline_mode = #tpu.pipeline_mode<synchronous>, transform_indices = @transform_7, window_bounds = array<i64: 3, 24, 16>}, {pipeline_mode = #tpu.pipeline_mode<synchronous>, transform_indices = @transform_8, window_bounds = array<i64: 2, 16>}, {pipeline_mode = #tpu.pipeline_mode<synchronous>, transform_indices = @transform_9, window_bounds = array<i64: 3, 48, 32>}, {pipeline_mode = #tpu.pipeline_mode<synchronous>, transform_indices = @transform_10, window_bounds = array<i64: 2, 32>}, {pipeline_mode = #tpu.pipeline_mode<synchronous>, transform_indices = @transform_11, window_bounds = array<i64: 3, 96, 32>}, {pipeline_mode = #tpu.pipeline_mode<synchronous>, transform_indices = @transform_12, window_bounds = array<i64: 2, 32>}, {pipeline_mode = #tpu.pipeline_mode<synchronous>, transform_indices = @transform_13, window_bounds = array<i64: 3, 64, 16>}, {pipeline_mode = #tpu.pipeline_mode<synchronous>, transform_indices = @transform_14, window_bounds = array<i64: 2, 16>}, {pipeline_mode = #tpu.pipeline_mode<synchronous>, transform_indices = @transform_15, window_bounds = array<i64: 3, 32, 16>}, {pipeline_mode = #tpu.pipeline_mode<synchronous>, transform_indices = @transform_16, window_bounds = array<i64: 2, 16>}, {pipeline_mode = #tpu.pipeline_mode<synchronous>, transform_indices = @transform_17, window_bounds = array<i64: 3, 64, 32>}, {pipeline_mode = #tpu.pipeline_mode<synchronous>, transform_indices = @transform_18, window_bounds = array<i64: 2, 32>}, {transform_indices = @transform_19, window_bounds = array<i64: 1, 4, 64>}, {transform_indices = @transform_20, window_bounds = array<i64: 1, 2, 64>}]} {
    %c0 = arith.constant 0 : index
    %c0_0 = arith.constant 0 : index
    %c0_1 = arith.constant 0 : index
    %0 = vector.load %arg1[%c0, %c0_0, %c0_1] : memref<1x16x48xf32, #tpu.memory_space<vmem>>, vector<1x16x48xf32>
    %1 = vector.shape_cast %0 : vector<1x16x48xf32> to vector<16x48xf32>
    %cst = arith.constant 0.000000e+00 : f32
    %2 = vector.broadcast %cst : f32 to vector<1x48xf32>
    %3 = tpu.concatenate %2, %1, %2 in 0 : vector<1x48xf32>, vector<16x48xf32>, vector<1x48xf32> -> vector<18x48xf32>
    %cst_2 = arith.constant 0.000000e+00 : f32
    %4 = vector.broadcast %cst_2 : f32 to vector<18x3xf32>
    %5 = tpu.concatenate %4, %3, %4 in 1 : vector<18x3xf32>, vector<18x48xf32>, vector<18x3xf32> -> vector<18x54xf32>
    %c0_3 = arith.constant 0 : index
    %c0_4 = arith.constant 0 : index
    %c0_5 = arith.constant 0 : index
    %6 = vector.load %arg2[%c0_3, %c0_4, %c0_5] : memref<3x54x64xf32, #tpu.memory_space<vmem>>, vector<1x54x64xf32>
    %7 = vector.shape_cast %6 : vector<1x54x64xf32> to vector<54x64xf32>
    %cst_6 = arith.constant dense<0.000000e+00> : vector<18x64xf32>
    %8 = tpu.matmul %5, %7, %cst_6 {dimension_numbers = #tpu.dot_dimension_numbers<[1], [0], [0], [1], [0, 0, 1, 1], [], []>} : vector<18x54xf32>, vector<54x64xf32>, vector<18x64xf32> -> vector<18x64xf32>
    %c1 = arith.constant 1 : index
    %c0_7 = arith.constant 0 : index
    %c0_8 = arith.constant 0 : index
    %9 = vector.load %arg2[%c1, %c0_7, %c0_8] : memref<3x54x64xf32, #tpu.memory_space<vmem>>, vector<1x54x64xf32>
    %10 = vector.shape_cast %9 : vector<1x54x64xf32> to vector<54x64xf32>
    %cst_9 = arith.constant dense<0.000000e+00> : vector<18x64xf32>
    %11 = tpu.matmul %5, %10, %cst_9 {dimension_numbers = #tpu.dot_dimension_numbers<[1], [0], [0], [1], [0, 0, 1, 1], [], []>} : vector<18x54xf32>, vector<54x64xf32>, vector<18x64xf32> -> vector<18x64xf32>
    %c2 = arith.constant 2 : index
    %c0_10 = arith.constant 0 : index
    %c0_11 = arith.constant 0 : index
    %12 = vector.load %arg2[%c2, %c0_10, %c0_11] : memref<3x54x64xf32, #tpu.memory_space<vmem>>, vector<1x54x64xf32>
    %13 = vector.shape_cast %12 : vector<1x54x64xf32> to vector<54x64xf32>
    %cst_12 = arith.constant dense<0.000000e+00> : vector<18x64xf32>
    %14 = tpu.matmul %5, %13, %cst_12 {dimension_numbers = #tpu.dot_dimension_numbers<[1], [0], [0], [1], [0, 0, 1, 1], [], []>} : vector<18x54xf32>, vector<54x64xf32>, vector<18x64xf32> -> vector<18x64xf32>
    %15 = vector.extract_strided_slice %8 {offsets = [0, 0], sizes = [1, 64], strides = [1, 1]} : vector<18x64xf32> to vector<1x64xf32>
    %16 = vector.extract_strided_slice %11 {offsets = [1, 0], sizes = [1, 64], strides = [1, 1]} : vector<18x64xf32> to vector<1x64xf32>
    %17 = arith.addf %15, %16 : vector<1x64xf32>
    %18 = vector.extract_strided_slice %14 {offsets = [2, 0], sizes = [1, 64], strides = [1, 1]} : vector<18x64xf32> to vector<1x64xf32>
    %19 = arith.addf %17, %18 : vector<1x64xf32>
    %20 = vector.extract_strided_slice %8 {offsets = [2, 0], sizes = [1, 64], strides = [1, 1]} : vector<18x64xf32> to vector<1x64xf32>
    %21 = vector.extract_strided_slice %11 {offsets = [3, 0], sizes = [1, 64], strides = [1, 1]} : vector<18x64xf32> to vector<1x64xf32>
    %22 = arith.addf %20, %21 : vector<1x64xf32>
    %23 = vector.extract_strided_slice %14 {offsets = [4, 0], sizes = [1, 64], strides = [1, 1]} : vector<18x64xf32> to vector<1x64xf32>
    %24 = arith.addf %22, %23 : vector<1x64xf32>
    %25 = vector.extract_strided_slice %8 {offsets = [4, 0], sizes = [1, 64], strides = [1, 1]} : vector<18x64xf32> to vector<1x64xf32>
    %26 = vector.extract_strided_slice %11 {offsets = [5, 0], sizes = [1, 64], strides = [1, 1]} : vector<18x64xf32> to vector<1x64xf32>
    %27 = arith.addf %25, %26 : vector<1x64xf32>
    %28 = vector.extract_strided_slice %14 {offsets = [6, 0], sizes = [1, 64], strides = [1, 1]} : vector<18x64xf32> to vector<1x64xf32>
    %29 = arith.addf %27, %28 : vector<1x64xf32>
    %30 = vector.extract_strided_slice %8 {offsets = [6, 0], sizes = [1, 64], strides = [1, 1]} : vector<18x64xf32> to vector<1x64xf32>
    %31 = vector.extract_strided_slice %11 {offsets = [7, 0], sizes = [1, 64], strides = [1, 1]} : vector<18x64xf32> to vector<1x64xf32>
    %32 = arith.addf %30, %31 : vector<1x64xf32>
    %33 = vector.extract_strided_slice %14 {offsets = [8, 0], sizes = [1, 64], strides = [1, 1]} : vector<18x64xf32> to vector<1x64xf32>
    %34 = arith.addf %32, %33 : vector<1x64xf32>
    %35 = vector.extract_strided_slice %8 {offsets = [8, 0], sizes = [1, 64], strides = [1, 1]} : vector<18x64xf32> to vector<1x64xf32>
    %36 = vector.extract_strided_slice %11 {offsets = [9, 0], sizes = [1, 64], strides = [1, 1]} : vector<18x64xf32> to vector<1x64xf32>
    %37 = arith.addf %35, %36 : vector<1x64xf32>
    %38 = vector.extract_strided_slice %14 {offsets = [10, 0], sizes = [1, 64], strides = [1, 1]} : vector<18x64xf32> to vector<1x64xf32>
    %39 = arith.addf %37, %38 : vector<1x64xf32>
    %40 = vector.extract_strided_slice %8 {offsets = [10, 0], sizes = [1, 64], strides = [1, 1]} : vector<18x64xf32> to vector<1x64xf32>
    %41 = vector.extract_strided_slice %11 {offsets = [11, 0], sizes = [1, 64], strides = [1, 1]} : vector<18x64xf32> to vector<1x64xf32>
    %42 = arith.addf %40, %41 : vector<1x64xf32>
    %43 = vector.extract_strided_slice %14 {offsets = [12, 0], sizes = [1, 64], strides = [1, 1]} : vector<18x64xf32> to vector<1x64xf32>
    %44 = arith.addf %42, %43 : vector<1x64xf32>
    %45 = vector.extract_strided_slice %8 {offsets = [12, 0], sizes = [1, 64], strides = [1, 1]} : vector<18x64xf32> to vector<1x64xf32>
    %46 = vector.extract_strided_slice %11 {offsets = [13, 0], sizes = [1, 64], strides = [1, 1]} : vector<18x64xf32> to vector<1x64xf32>
    %47 = arith.addf %45, %46 : vector<1x64xf32>
    %48 = vector.extract_strided_slice %14 {offsets = [14, 0], sizes = [1, 64], strides = [1, 1]} : vector<18x64xf32> to vector<1x64xf32>
    %49 = arith.addf %47, %48 : vector<1x64xf32>
    %50 = vector.extract_strided_slice %8 {offsets = [14, 0], sizes = [1, 64], strides = [1, 1]} : vector<18x64xf32> to vector<1x64xf32>
    %51 = vector.extract_strided_slice %11 {offsets = [15, 0], sizes = [1, 64], strides = [1, 1]} : vector<18x64xf32> to vector<1x64xf32>
    %52 = arith.addf %50, %51 : vector<1x64xf32>
    %53 = vector.extract_strided_slice %14 {offsets = [16, 0], sizes = [1, 64], strides = [1, 1]} : vector<18x64xf32> to vector<1x64xf32>
    %54 = arith.addf %52, %53 : vector<1x64xf32>
    %55 = tpu.concatenate %19, %24, %29, %34, %39, %44, %49, %54 in 0 : vector<1x64xf32>, vector<1x64xf32>, vector<1x64xf32>, vector<1x64xf32>, vector<1x64xf32>, vector<1x64xf32>, vector<1x64xf32>, vector<1x64xf32> -> vector<8x64xf32>
    %c0_13 = arith.constant 0 : index
    %c0_14 = arith.constant 0 : index
    %56 = vector.load %arg3[%c0_13, %c0_14] : memref<2x64xf32, #tpu.memory_space<vmem>>, vector<2x64xf32>
    %57 = vector.extract_strided_slice %56 {offsets = [0, 0], sizes = [1, 64], strides = [1, 1]} : vector<2x64xf32> to vector<1x64xf32>
    %58 = vector.broadcast %57 : vector<1x64xf32> to vector<8x64xf32>
    %59 = arith.mulf %55, %58 : vector<8x64xf32>
    %60 = vector.extract_strided_slice %56 {offsets = [1, 0], sizes = [1, 64], strides = [1, 1]} : vector<2x64xf32> to vector<1x64xf32>
    %61 = vector.broadcast %60 : vector<1x64xf32> to vector<8x64xf32>
    %62 = arith.addf %59, %61 : vector<8x64xf32>
    %cst_15 = arith.constant 0.000000e+00 : f32
    %63 = vector.broadcast %cst_15 : f32 to vector<8x64xf32>
    %64 = arith.cmpf oge, %62, %63 : vector<8x64xf32>
    %cst_16 = arith.constant 1.000000e-01 : f32
    %65 = vector.broadcast %cst_16 : f32 to vector<8x64xf32>
    %66 = arith.mulf %65, %62 : vector<8x64xf32>
    %67 = arith.select %64, %62, %66 : vector<8x64xi1>, vector<8x64xf32>
    %cst_17 = arith.constant 0xFF800000 : f32
    %68 = vector.broadcast %cst_17 : f32 to vector<1x64xf32>
    %69 = tpu.concatenate %68, %67, %68 in 0 : vector<1x64xf32>, vector<8x64xf32>, vector<1x64xf32> -> vector<10x64xf32>
    %cst_18 = arith.constant 0xFF800000 : f32
    %70 = vector.broadcast %cst_18 : f32 to vector<10x8xf32>
    %71 = tpu.concatenate %70, %69, %70 in 1 : vector<10x8xf32>, vector<10x64xf32>, vector<10x8xf32> -> vector<10x80xf32>
    %72 = vector.extract_strided_slice %71 {offsets = [0, 0], sizes = [1, 80], strides = [1, 1]} : vector<10x80xf32> to vector<1x80xf32>
    %73 = vector.extract_strided_slice %71 {offsets = [1, 0], sizes = [1, 80], strides = [1, 1]} : vector<10x80xf32> to vector<1x80xf32>
    %74 = arith.maximumf %72, %73 : vector<1x80xf32>
    %75 = vector.extract_strided_slice %71 {offsets = [2, 0], sizes = [1, 80], strides = [1, 1]} : vector<10x80xf32> to vector<1x80xf32>
    %76 = arith.maximumf %74, %75 : vector<1x80xf32>
    %77 = vector.extract_strided_slice %76 {offsets = [0, 0], sizes = [1, 8], strides = [1, 1]} : vector<1x80xf32> to vector<1x8xf32>
    %78 = vector.extract_strided_slice %76 {offsets = [0, 8], sizes = [1, 8], strides = [1, 1]} : vector<1x80xf32> to vector<1x8xf32>
    %79 = arith.maximumf %77, %78 : vector<1x8xf32>
    %80 = vector.extract_strided_slice %76 {offsets = [0, 16], sizes = [1, 8], strides = [1, 1]} : vector<1x80xf32> to vector<1x8xf32>
    %81 = arith.maximumf %79, %80 : vector<1x8xf32>
    %82 = vector.extract_strided_slice %76 {offsets = [0, 16], sizes = [1, 8], strides = [1, 1]} : vector<1x80xf32> to vector<1x8xf32>
    %83 = vector.extract_strided_slice %76 {offsets = [0, 24], sizes = [1, 8], strides = [1, 1]} : vector<1x80xf32> to vector<1x8xf32>
    %84 = arith.maximumf %82, %83 : vector<1x8xf32>
    %85 = vector.extract_strided_slice %76 {offsets = [0, 32], sizes = [1, 8], strides = [1, 1]} : vector<1x80xf32> to vector<1x8xf32>
    %86 = arith.maximumf %84, %85 : vector<1x8xf32>
    %87 = vector.extract_strided_slice %76 {offsets = [0, 32], sizes = [1, 8], strides = [1, 1]} : vector<1x80xf32> to vector<1x8xf32>
    %88 = vector.extract_strided_slice %76 {offsets = [0, 40], sizes = [1, 8], strides = [1, 1]} : vector<1x80xf32> to vector<1x8xf32>
    %89 = arith.maximumf %87, %88 : vector<1x8xf32>
    %90 = vector.extract_strided_slice %76 {offsets = [0, 48], sizes = [1, 8], strides = [1, 1]} : vector<1x80xf32> to vector<1x8xf32>
    %91 = arith.maximumf %89, %90 : vector<1x8xf32>
    %92 = vector.extract_strided_slice %76 {offsets = [0, 48], sizes = [1, 8], strides = [1, 1]} : vector<1x80xf32> to vector<1x8xf32>
    %93 = vector.extract_strided_slice %76 {offsets = [0, 56], sizes = [1, 8], strides = [1, 1]} : vector<1x80xf32> to vector<1x8xf32>
    %94 = arith.maximumf %92, %93 : vector<1x8xf32>
    %95 = vector.extract_strided_slice %76 {offsets = [0, 64], sizes = [1, 8], strides = [1, 1]} : vector<1x80xf32> to vector<1x8xf32>
    %96 = arith.maximumf %94, %95 : vector<1x8xf32>
    %97 = tpu.concatenate %81, %86, %91, %96 in 1 : vector<1x8xf32>, vector<1x8xf32>, vector<1x8xf32>, vector<1x8xf32> -> vector<1x32xf32>
    %98 = vector.extract_strided_slice %71 {offsets = [2, 0], sizes = [1, 80], strides = [1, 1]} : vector<10x80xf32> to vector<1x80xf32>
    %99 = vector.extract_strided_slice %71 {offsets = [3, 0], sizes = [1, 80], strides = [1, 1]} : vector<10x80xf32> to vector<1x80xf32>
    %100 = arith.maximumf %98, %99 : vector<1x80xf32>
    %101 = vector.extract_strided_slice %71 {offsets = [4, 0], sizes = [1, 80], strides = [1, 1]} : vector<10x80xf32> to vector<1x80xf32>
    %102 = arith.maximumf %100, %101 : vector<1x80xf32>
    %103 = vector.extract_strided_slice %102 {offsets = [0, 0], sizes = [1, 8], strides = [1, 1]} : vector<1x80xf32> to vector<1x8xf32>
    %104 = vector.extract_strided_slice %102 {offsets = [0, 8], sizes = [1, 8], strides = [1, 1]} : vector<1x80xf32> to vector<1x8xf32>
    %105 = arith.maximumf %103, %104 : vector<1x8xf32>
    %106 = vector.extract_strided_slice %102 {offsets = [0, 16], sizes = [1, 8], strides = [1, 1]} : vector<1x80xf32> to vector<1x8xf32>
    %107 = arith.maximumf %105, %106 : vector<1x8xf32>
    %108 = vector.extract_strided_slice %102 {offsets = [0, 16], sizes = [1, 8], strides = [1, 1]} : vector<1x80xf32> to vector<1x8xf32>
    %109 = vector.extract_strided_slice %102 {offsets = [0, 24], sizes = [1, 8], strides = [1, 1]} : vector<1x80xf32> to vector<1x8xf32>
    %110 = arith.maximumf %108, %109 : vector<1x8xf32>
    %111 = vector.extract_strided_slice %102 {offsets = [0, 32], sizes = [1, 8], strides = [1, 1]} : vector<1x80xf32> to vector<1x8xf32>
    %112 = arith.maximumf %110, %111 : vector<1x8xf32>
    %113 = vector.extract_strided_slice %102 {offsets = [0, 32], sizes = [1, 8], strides = [1, 1]} : vector<1x80xf32> to vector<1x8xf32>
    %114 = vector.extract_strided_slice %102 {offsets = [0, 40], sizes = [1, 8], strides = [1, 1]} : vector<1x80xf32> to vector<1x8xf32>
    %115 = arith.maximumf %113, %114 : vector<1x8xf32>
    %116 = vector.extract_strided_slice %102 {offsets = [0, 48], sizes = [1, 8], strides = [1, 1]} : vector<1x80xf32> to vector<1x8xf32>
    %117 = arith.maximumf %115, %116 : vector<1x8xf32>
    %118 = vector.extract_strided_slice %102 {offsets = [0, 48], sizes = [1, 8], strides = [1, 1]} : vector<1x80xf32> to vector<1x8xf32>
    %119 = vector.extract_strided_slice %102 {offsets = [0, 56], sizes = [1, 8], strides = [1, 1]} : vector<1x80xf32> to vector<1x8xf32>
    %120 = arith.maximumf %118, %119 : vector<1x8xf32>
    %121 = vector.extract_strided_slice %102 {offsets = [0, 64], sizes = [1, 8], strides = [1, 1]} : vector<1x80xf32> to vector<1x8xf32>
    %122 = arith.maximumf %120, %121 : vector<1x8xf32>
    %123 = tpu.concatenate %107, %112, %117, %122 in 1 : vector<1x8xf32>, vector<1x8xf32>, vector<1x8xf32>, vector<1x8xf32> -> vector<1x32xf32>
    %124 = vector.extract_strided_slice %71 {offsets = [4, 0], sizes = [1, 80], strides = [1, 1]} : vector<10x80xf32> to vector<1x80xf32>
    %125 = vector.extract_strided_slice %71 {offsets = [5, 0], sizes = [1, 80], strides = [1, 1]} : vector<10x80xf32> to vector<1x80xf32>
    %126 = arith.maximumf %124, %125 : vector<1x80xf32>
    %127 = vector.extract_strided_slice %71 {offsets = [6, 0], sizes = [1, 80], strides = [1, 1]} : vector<10x80xf32> to vector<1x80xf32>
    %128 = arith.maximumf %126, %127 : vector<1x80xf32>
    %129 = vector.extract_strided_slice %128 {offsets = [0, 0], sizes = [1, 8], strides = [1, 1]} : vector<1x80xf32> to vector<1x8xf32>
    %130 = vector.extract_strided_slice %128 {offsets = [0, 8], sizes = [1, 8], strides = [1, 1]} : vector<1x80xf32> to vector<1x8xf32>
    %131 = arith.maximumf %129, %130 : vector<1x8xf32>
    %132 = vector.extract_strided_slice %128 {offsets = [0, 16], sizes = [1, 8], strides = [1, 1]} : vector<1x80xf32> to vector<1x8xf32>
    %133 = arith.maximumf %131, %132 : vector<1x8xf32>
    %134 = vector.extract_strided_slice %128 {offsets = [0, 16], sizes = [1, 8], strides = [1, 1]} : vector<1x80xf32> to vector<1x8xf32>
    %135 = vector.extract_strided_slice %128 {offsets = [0, 24], sizes = [1, 8], strides = [1, 1]} : vector<1x80xf32> to vector<1x8xf32>
    %136 = arith.maximumf %134, %135 : vector<1x8xf32>
    %137 = vector.extract_strided_slice %128 {offsets = [0, 32], sizes = [1, 8], strides = [1, 1]} : vector<1x80xf32> to vector<1x8xf32>
    %138 = arith.maximumf %136, %137 : vector<1x8xf32>
    %139 = vector.extract_strided_slice %128 {offsets = [0, 32], sizes = [1, 8], strides = [1, 1]} : vector<1x80xf32> to vector<1x8xf32>
    %140 = vector.extract_strided_slice %128 {offsets = [0, 40], sizes = [1, 8], strides = [1, 1]} : vector<1x80xf32> to vector<1x8xf32>
    %141 = arith.maximumf %139, %140 : vector<1x8xf32>
    %142 = vector.extract_strided_slice %128 {offsets = [0, 48], sizes = [1, 8], strides = [1, 1]} : vector<1x80xf32> to vector<1x8xf32>
    %143 = arith.maximumf %141, %142 : vector<1x8xf32>
    %144 = vector.extract_strided_slice %128 {offsets = [0, 48], sizes = [1, 8], strides = [1, 1]} : vector<1x80xf32> to vector<1x8xf32>
    %145 = vector.extract_strided_slice %128 {offsets = [0, 56], sizes = [1, 8], strides = [1, 1]} : vector<1x80xf32> to vector<1x8xf32>
    %146 = arith.maximumf %144, %145 : vector<1x8xf32>
    %147 = vector.extract_strided_slice %128 {offsets = [0, 64], sizes = [1, 8], strides = [1, 1]} : vector<1x80xf32> to vector<1x8xf32>
    %148 = arith.maximumf %146, %147 : vector<1x8xf32>
    %149 = tpu.concatenate %133, %138, %143, %148 in 1 : vector<1x8xf32>, vector<1x8xf32>, vector<1x8xf32>, vector<1x8xf32> -> vector<1x32xf32>
    %150 = vector.extract_strided_slice %71 {offsets = [6, 0], sizes = [1, 80], strides = [1, 1]} : vector<10x80xf32> to vector<1x80xf32>
    %151 = vector.extract_strided_slice %71 {offsets = [7, 0], sizes = [1, 80], strides = [1, 1]} : vector<10x80xf32> to vector<1x80xf32>
    %152 = arith.maximumf %150, %151 : vector<1x80xf32>
    %153 = vector.extract_strided_slice %71 {offsets = [8, 0], sizes = [1, 80], strides = [1, 1]} : vector<10x80xf32> to vector<1x80xf32>
    %154 = arith.maximumf %152, %153 : vector<1x80xf32>
    %155 = vector.extract_strided_slice %154 {offsets = [0, 0], sizes = [1, 8], strides = [1, 1]} : vector<1x80xf32> to vector<1x8xf32>
    %156 = vector.extract_strided_slice %154 {offsets = [0, 8], sizes = [1, 8], strides = [1, 1]} : vector<1x80xf32> to vector<1x8xf32>
    %157 = arith.maximumf %155, %156 : vector<1x8xf32>
    %158 = vector.extract_strided_slice %154 {offsets = [0, 16], sizes = [1, 8], strides = [1, 1]} : vector<1x80xf32> to vector<1x8xf32>
    %159 = arith.maximumf %157, %158 : vector<1x8xf32>
    %160 = vector.extract_strided_slice %154 {offsets = [0, 16], sizes = [1, 8], strides = [1, 1]} : vector<1x80xf32> to vector<1x8xf32>
    %161 = vector.extract_strided_slice %154 {offsets = [0, 24], sizes = [1, 8], strides = [1, 1]} : vector<1x80xf32> to vector<1x8xf32>
    %162 = arith.maximumf %160, %161 : vector<1x8xf32>
    %163 = vector.extract_strided_slice %154 {offsets = [0, 32], sizes = [1, 8], strides = [1, 1]} : vector<1x80xf32> to vector<1x8xf32>
    %164 = arith.maximumf %162, %163 : vector<1x8xf32>
    %165 = vector.extract_strided_slice %154 {offsets = [0, 32], sizes = [1, 8], strides = [1, 1]} : vector<1x80xf32> to vector<1x8xf32>
    %166 = vector.extract_strided_slice %154 {offsets = [0, 40], sizes = [1, 8], strides = [1, 1]} : vector<1x80xf32> to vector<1x8xf32>
    %167 = arith.maximumf %165, %166 : vector<1x8xf32>
    %168 = vector.extract_strided_slice %154 {offsets = [0, 48], sizes = [1, 8], strides = [1, 1]} : vector<1x80xf32> to vector<1x8xf32>
    %169 = arith.maximumf %167, %168 : vector<1x8xf32>
    %170 = vector.extract_strided_slice %154 {offsets = [0, 48], sizes = [1, 8], strides = [1, 1]} : vector<1x80xf32> to vector<1x8xf32>
    %171 = vector.extract_strided_slice %154 {offsets = [0, 56], sizes = [1, 8], strides = [1, 1]} : vector<1x80xf32> to vector<1x8xf32>
    %172 = arith.maximumf %170, %171 : vector<1x8xf32>
    %173 = vector.extract_strided_slice %154 {offsets = [0, 64], sizes = [1, 8], strides = [1, 1]} : vector<1x80xf32> to vector<1x8xf32>
    %174 = arith.maximumf %172, %173 : vector<1x8xf32>
    %175 = tpu.concatenate %159, %164, %169, %174 in 1 : vector<1x8xf32>, vector<1x8xf32>, vector<1x8xf32>, vector<1x8xf32> -> vector<1x32xf32>
    %176 = tpu.concatenate %97, %123, %149, %175 in 0 : vector<1x32xf32>, vector<1x32xf32>, vector<1x32xf32>, vector<1x32xf32> -> vector<4x32xf32>
    %cst_19 = arith.constant 0.000000e+00 : f32
    %177 = vector.broadcast %cst_19 : f32 to vector<1x32xf32>
    %178 = tpu.concatenate %177, %176, %177 in 0 : vector<1x32xf32>, vector<4x32xf32>, vector<1x32xf32> -> vector<6x32xf32>
    %cst_20 = arith.constant 0.000000e+00 : f32
    %179 = vector.broadcast %cst_20 : f32 to vector<6x8xf32>
    %180 = tpu.concatenate %179, %178, %179 in 1 : vector<6x8xf32>, vector<6x32xf32>, vector<6x8xf32> -> vector<6x48xf32>
    %181 = vector.extract_strided_slice %180 {offsets = [0, 0], sizes = [4, 48], strides = [1, 1]} : vector<6x48xf32> to vector<4x48xf32>
    %c0_21 = arith.constant 0 : index
    %c0_22 = arith.constant 0 : index
    %c0_23 = arith.constant 0 : index
    %182 = vector.load %arg4[%c0_21, %c0_22, %c0_23] : memref<3x48x32xf32, #tpu.memory_space<vmem>>, vector<1x48x32xf32>
    %183 = vector.shape_cast %182 : vector<1x48x32xf32> to vector<48x32xf32>
    %cst_24 = arith.constant dense<0.000000e+00> : vector<4x32xf32>
    %184 = tpu.matmul %181, %183, %cst_24 {dimension_numbers = #tpu.dot_dimension_numbers<[1], [0], [0], [1], [0, 0, 1, 1], [], []>} : vector<4x48xf32>, vector<48x32xf32>, vector<4x32xf32> -> vector<4x32xf32>
    %185 = vector.extract_strided_slice %180 {offsets = [1, 0], sizes = [4, 48], strides = [1, 1]} : vector<6x48xf32> to vector<4x48xf32>
    %c1_25 = arith.constant 1 : index
    %c0_26 = arith.constant 0 : index
    %c0_27 = arith.constant 0 : index
    %186 = vector.load %arg4[%c1_25, %c0_26, %c0_27] : memref<3x48x32xf32, #tpu.memory_space<vmem>>, vector<1x48x32xf32>
    %187 = vector.shape_cast %186 : vector<1x48x32xf32> to vector<48x32xf32>
    %cst_28 = arith.constant dense<0.000000e+00> : vector<4x32xf32>
    %188 = tpu.matmul %185, %187, %cst_28 {dimension_numbers = #tpu.dot_dimension_numbers<[1], [0], [0], [1], [0, 0, 1, 1], [], []>} : vector<4x48xf32>, vector<48x32xf32>, vector<4x32xf32> -> vector<4x32xf32>
    %189 = arith.addf %184, %188 : vector<4x32xf32>
    %190 = vector.extract_strided_slice %180 {offsets = [2, 0], sizes = [4, 48], strides = [1, 1]} : vector<6x48xf32> to vector<4x48xf32>
    %c2_29 = arith.constant 2 : index
    %c0_30 = arith.constant 0 : index
    %c0_31 = arith.constant 0 : index
    %191 = vector.load %arg4[%c2_29, %c0_30, %c0_31] : memref<3x48x32xf32, #tpu.memory_space<vmem>>, vector<1x48x32xf32>
    %192 = vector.shape_cast %191 : vector<1x48x32xf32> to vector<48x32xf32>
    %cst_32 = arith.constant dense<0.000000e+00> : vector<4x32xf32>
    %193 = tpu.matmul %190, %192, %cst_32 {dimension_numbers = #tpu.dot_dimension_numbers<[1], [0], [0], [1], [0, 0, 1, 1], [], []>} : vector<4x48xf32>, vector<48x32xf32>, vector<4x32xf32> -> vector<4x32xf32>
    %194 = arith.addf %189, %193 : vector<4x32xf32>
    %c0_33 = arith.constant 0 : index
    %c0_34 = arith.constant 0 : index
    %195 = vector.load %arg5[%c0_33, %c0_34] : memref<2x32xf32, #tpu.memory_space<vmem>>, vector<2x32xf32>
    %196 = vector.extract_strided_slice %195 {offsets = [0, 0], sizes = [1, 32], strides = [1, 1]} : vector<2x32xf32> to vector<1x32xf32>
    %197 = vector.broadcast %196 : vector<1x32xf32> to vector<4x32xf32>
    %198 = arith.mulf %194, %197 : vector<4x32xf32>
    %199 = vector.extract_strided_slice %195 {offsets = [1, 0], sizes = [1, 32], strides = [1, 1]} : vector<2x32xf32> to vector<1x32xf32>
    %200 = vector.broadcast %199 : vector<1x32xf32> to vector<4x32xf32>
    %201 = arith.addf %198, %200 : vector<4x32xf32>
    %cst_35 = arith.constant 0.000000e+00 : f32
    %202 = vector.broadcast %cst_35 : f32 to vector<4x32xf32>
    %203 = arith.cmpf oge, %201, %202 : vector<4x32xf32>
    %cst_36 = arith.constant 1.000000e-01 : f32
    %204 = vector.broadcast %cst_36 : f32 to vector<4x32xf32>
    %205 = arith.mulf %204, %201 : vector<4x32xf32>
    %206 = arith.select %203, %201, %205 : vector<4x32xi1>, vector<4x32xf32>
    %cst_37 = arith.constant 0.000000e+00 : f32
    %207 = vector.broadcast %cst_37 : f32 to vector<1x32xf32>
    %208 = tpu.concatenate %207, %206, %207 in 0 : vector<1x32xf32>, vector<4x32xf32>, vector<1x32xf32> -> vector<6x32xf32>
    %cst_38 = arith.constant 0.000000e+00 : f32
    %209 = vector.broadcast %cst_38 : f32 to vector<6x8xf32>
    %210 = tpu.concatenate %209, %208, %209 in 1 : vector<6x8xf32>, vector<6x32xf32>, vector<6x8xf32> -> vector<6x48xf32>
    %211 = vector.extract_strided_slice %210 {offsets = [0, 0], sizes = [4, 48], strides = [1, 1]} : vector<6x48xf32> to vector<4x48xf32>
    %c0_39 = arith.constant 0 : index
    %c0_40 = arith.constant 0 : index
    %c0_41 = arith.constant 0 : index
    %212 = vector.load %arg6[%c0_39, %c0_40, %c0_41] : memref<3x48x16xf32, #tpu.memory_space<vmem>>, vector<1x48x16xf32>
    %213 = vector.shape_cast %212 : vector<1x48x16xf32> to vector<48x16xf32>
    %cst_42 = arith.constant dense<0.000000e+00> : vector<4x16xf32>
    %214 = tpu.matmul %211, %213, %cst_42 {dimension_numbers = #tpu.dot_dimension_numbers<[1], [0], [0], [1], [0, 0, 1, 1], [], []>} : vector<4x48xf32>, vector<48x16xf32>, vector<4x16xf32> -> vector<4x16xf32>
    %215 = vector.extract_strided_slice %210 {offsets = [1, 0], sizes = [4, 48], strides = [1, 1]} : vector<6x48xf32> to vector<4x48xf32>
    %c1_43 = arith.constant 1 : index
    %c0_44 = arith.constant 0 : index
    %c0_45 = arith.constant 0 : index
    %216 = vector.load %arg6[%c1_43, %c0_44, %c0_45] : memref<3x48x16xf32, #tpu.memory_space<vmem>>, vector<1x48x16xf32>
    %217 = vector.shape_cast %216 : vector<1x48x16xf32> to vector<48x16xf32>
    %cst_46 = arith.constant dense<0.000000e+00> : vector<4x16xf32>
    %218 = tpu.matmul %215, %217, %cst_46 {dimension_numbers = #tpu.dot_dimension_numbers<[1], [0], [0], [1], [0, 0, 1, 1], [], []>} : vector<4x48xf32>, vector<48x16xf32>, vector<4x16xf32> -> vector<4x16xf32>
    %219 = arith.addf %214, %218 : vector<4x16xf32>
    %220 = vector.extract_strided_slice %210 {offsets = [2, 0], sizes = [4, 48], strides = [1, 1]} : vector<6x48xf32> to vector<4x48xf32>
    %c2_47 = arith.constant 2 : index
    %c0_48 = arith.constant 0 : index
    %c0_49 = arith.constant 0 : index
    %221 = vector.load %arg6[%c2_47, %c0_48, %c0_49] : memref<3x48x16xf32, #tpu.memory_space<vmem>>, vector<1x48x16xf32>
    %222 = vector.shape_cast %221 : vector<1x48x16xf32> to vector<48x16xf32>
    %cst_50 = arith.constant dense<0.000000e+00> : vector<4x16xf32>
    %223 = tpu.matmul %220, %222, %cst_50 {dimension_numbers = #tpu.dot_dimension_numbers<[1], [0], [0], [1], [0, 0, 1, 1], [], []>} : vector<4x48xf32>, vector<48x16xf32>, vector<4x16xf32> -> vector<4x16xf32>
    %224 = arith.addf %219, %223 : vector<4x16xf32>
    %c0_51 = arith.constant 0 : index
    %c0_52 = arith.constant 0 : index
    %225 = vector.load %arg7[%c0_51, %c0_52] : memref<2x16xf32, #tpu.memory_space<vmem>>, vector<2x16xf32>
    %226 = vector.extract_strided_slice %225 {offsets = [0, 0], sizes = [1, 16], strides = [1, 1]} : vector<2x16xf32> to vector<1x16xf32>
    %227 = vector.broadcast %226 : vector<1x16xf32> to vector<4x16xf32>
    %228 = arith.mulf %224, %227 : vector<4x16xf32>
    %229 = vector.extract_strided_slice %225 {offsets = [1, 0], sizes = [1, 16], strides = [1, 1]} : vector<2x16xf32> to vector<1x16xf32>
    %230 = vector.broadcast %229 : vector<1x16xf32> to vector<4x16xf32>
    %231 = arith.addf %228, %230 : vector<4x16xf32>
    %cst_53 = arith.constant 0.000000e+00 : f32
    %232 = vector.broadcast %cst_53 : f32 to vector<4x16xf32>
    %233 = arith.cmpf oge, %231, %232 : vector<4x16xf32>
    %cst_54 = arith.constant 1.000000e-01 : f32
    %234 = vector.broadcast %cst_54 : f32 to vector<4x16xf32>
    %235 = arith.mulf %234, %231 : vector<4x16xf32>
    %236 = arith.select %233, %231, %235 : vector<4x16xi1>, vector<4x16xf32>
    %cst_55 = arith.constant 0.000000e+00 : f32
    %237 = vector.broadcast %cst_55 : f32 to vector<1x16xf32>
    %238 = tpu.concatenate %237, %236, %237 in 0 : vector<1x16xf32>, vector<4x16xf32>, vector<1x16xf32> -> vector<6x16xf32>
    %cst_56 = arith.constant 0.000000e+00 : f32
    %239 = vector.broadcast %cst_56 : f32 to vector<6x4xf32>
    %240 = tpu.concatenate %239, %238, %239 in 1 : vector<6x4xf32>, vector<6x16xf32>, vector<6x4xf32> -> vector<6x24xf32>
    %241 = vector.extract_strided_slice %240 {offsets = [0, 0], sizes = [4, 24], strides = [1, 1]} : vector<6x24xf32> to vector<4x24xf32>
    %c0_57 = arith.constant 0 : index
    %c0_58 = arith.constant 0 : index
    %c0_59 = arith.constant 0 : index
    %242 = vector.load %arg8[%c0_57, %c0_58, %c0_59] : memref<3x24x16xf32, #tpu.memory_space<vmem>>, vector<1x24x16xf32>
    %243 = vector.shape_cast %242 : vector<1x24x16xf32> to vector<24x16xf32>
    %cst_60 = arith.constant dense<0.000000e+00> : vector<4x16xf32>
    %244 = tpu.matmul %241, %243, %cst_60 {dimension_numbers = #tpu.dot_dimension_numbers<[1], [0], [0], [1], [0, 0, 1, 1], [], []>} : vector<4x24xf32>, vector<24x16xf32>, vector<4x16xf32> -> vector<4x16xf32>
    %245 = vector.extract_strided_slice %240 {offsets = [1, 0], sizes = [4, 24], strides = [1, 1]} : vector<6x24xf32> to vector<4x24xf32>
    %c1_61 = arith.constant 1 : index
    %c0_62 = arith.constant 0 : index
    %c0_63 = arith.constant 0 : index
    %246 = vector.load %arg8[%c1_61, %c0_62, %c0_63] : memref<3x24x16xf32, #tpu.memory_space<vmem>>, vector<1x24x16xf32>
    %247 = vector.shape_cast %246 : vector<1x24x16xf32> to vector<24x16xf32>
    %cst_64 = arith.constant dense<0.000000e+00> : vector<4x16xf32>
    %248 = tpu.matmul %245, %247, %cst_64 {dimension_numbers = #tpu.dot_dimension_numbers<[1], [0], [0], [1], [0, 0, 1, 1], [], []>} : vector<4x24xf32>, vector<24x16xf32>, vector<4x16xf32> -> vector<4x16xf32>
    %249 = arith.addf %244, %248 : vector<4x16xf32>
    %250 = vector.extract_strided_slice %240 {offsets = [2, 0], sizes = [4, 24], strides = [1, 1]} : vector<6x24xf32> to vector<4x24xf32>
    %c2_65 = arith.constant 2 : index
    %c0_66 = arith.constant 0 : index
    %c0_67 = arith.constant 0 : index
    %251 = vector.load %arg8[%c2_65, %c0_66, %c0_67] : memref<3x24x16xf32, #tpu.memory_space<vmem>>, vector<1x24x16xf32>
    %252 = vector.shape_cast %251 : vector<1x24x16xf32> to vector<24x16xf32>
    %cst_68 = arith.constant dense<0.000000e+00> : vector<4x16xf32>
    %253 = tpu.matmul %250, %252, %cst_68 {dimension_numbers = #tpu.dot_dimension_numbers<[1], [0], [0], [1], [0, 0, 1, 1], [], []>} : vector<4x24xf32>, vector<24x16xf32>, vector<4x16xf32> -> vector<4x16xf32>
    %254 = arith.addf %249, %253 : vector<4x16xf32>
    %c0_69 = arith.constant 0 : index
    %c0_70 = arith.constant 0 : index
    %255 = vector.load %arg9[%c0_69, %c0_70] : memref<2x16xf32, #tpu.memory_space<vmem>>, vector<2x16xf32>
    %256 = vector.extract_strided_slice %255 {offsets = [0, 0], sizes = [1, 16], strides = [1, 1]} : vector<2x16xf32> to vector<1x16xf32>
    %257 = vector.broadcast %256 : vector<1x16xf32> to vector<4x16xf32>
    %258 = arith.mulf %254, %257 : vector<4x16xf32>
    %259 = vector.extract_strided_slice %255 {offsets = [1, 0], sizes = [1, 16], strides = [1, 1]} : vector<2x16xf32> to vector<1x16xf32>
    %260 = vector.broadcast %259 : vector<1x16xf32> to vector<4x16xf32>
    %261 = arith.addf %258, %260 : vector<4x16xf32>
    %cst_71 = arith.constant 0.000000e+00 : f32
    %262 = vector.broadcast %cst_71 : f32 to vector<4x16xf32>
    %263 = arith.cmpf oge, %261, %262 : vector<4x16xf32>
    %cst_72 = arith.constant 1.000000e-01 : f32
    %264 = vector.broadcast %cst_72 : f32 to vector<4x16xf32>
    %265 = arith.mulf %264, %261 : vector<4x16xf32>
    %266 = arith.select %263, %261, %265 : vector<4x16xi1>, vector<4x16xf32>
    %267 = vector.extract_strided_slice %266 {offsets = [0, 0], sizes = [4, 4], strides = [1, 1]} : vector<4x16xf32> to vector<4x4xf32>
    %268 = vector.extract_strided_slice %236 {offsets = [0, 0], sizes = [4, 4], strides = [1, 1]} : vector<4x16xf32> to vector<4x4xf32>
    %269 = vector.extract_strided_slice %266 {offsets = [0, 4], sizes = [4, 4], strides = [1, 1]} : vector<4x16xf32> to vector<4x4xf32>
    %270 = vector.extract_strided_slice %236 {offsets = [0, 4], sizes = [4, 4], strides = [1, 1]} : vector<4x16xf32> to vector<4x4xf32>
    %271 = vector.extract_strided_slice %266 {offsets = [0, 8], sizes = [4, 4], strides = [1, 1]} : vector<4x16xf32> to vector<4x4xf32>
    %272 = vector.extract_strided_slice %236 {offsets = [0, 8], sizes = [4, 4], strides = [1, 1]} : vector<4x16xf32> to vector<4x4xf32>
    %273 = vector.extract_strided_slice %266 {offsets = [0, 12], sizes = [4, 4], strides = [1, 1]} : vector<4x16xf32> to vector<4x4xf32>
    %274 = vector.extract_strided_slice %236 {offsets = [0, 12], sizes = [4, 4], strides = [1, 1]} : vector<4x16xf32> to vector<4x4xf32>
    %275 = tpu.concatenate %267, %268, %269, %270, %271, %272, %273, %274 in 1 : vector<4x4xf32>, vector<4x4xf32>, vector<4x4xf32>, vector<4x4xf32>, vector<4x4xf32>, vector<4x4xf32>, vector<4x4xf32>, vector<4x4xf32> -> vector<4x32xf32>
    %cst_73 = arith.constant 0.000000e+00 : f32
    %276 = vector.broadcast %cst_73 : f32 to vector<1x32xf32>
    %277 = tpu.concatenate %276, %275, %276 in 0 : vector<1x32xf32>, vector<4x32xf32>, vector<1x32xf32> -> vector<6x32xf32>
    %cst_74 = arith.constant 0.000000e+00 : f32
    %278 = vector.broadcast %cst_74 : f32 to vector<6x8xf32>
    %279 = tpu.concatenate %278, %277, %278 in 1 : vector<6x8xf32>, vector<6x32xf32>, vector<6x8xf32> -> vector<6x48xf32>
    %280 = vector.extract_strided_slice %279 {offsets = [0, 0], sizes = [4, 48], strides = [1, 1]} : vector<6x48xf32> to vector<4x48xf32>
    %c0_75 = arith.constant 0 : index
    %c0_76 = arith.constant 0 : index
    %c0_77 = arith.constant 0 : index
    %281 = vector.load %arg10[%c0_75, %c0_76, %c0_77] : memref<3x48x32xf32, #tpu.memory_space<vmem>>, vector<1x48x32xf32>
    %282 = vector.shape_cast %281 : vector<1x48x32xf32> to vector<48x32xf32>
    %cst_78 = arith.constant dense<0.000000e+00> : vector<4x32xf32>
    %283 = tpu.matmul %280, %282, %cst_78 {dimension_numbers = #tpu.dot_dimension_numbers<[1], [0], [0], [1], [0, 0, 1, 1], [], []>} : vector<4x48xf32>, vector<48x32xf32>, vector<4x32xf32> -> vector<4x32xf32>
    %284 = vector.extract_strided_slice %279 {offsets = [1, 0], sizes = [4, 48], strides = [1, 1]} : vector<6x48xf32> to vector<4x48xf32>
    %c1_79 = arith.constant 1 : index
    %c0_80 = arith.constant 0 : index
    %c0_81 = arith.constant 0 : index
    %285 = vector.load %arg10[%c1_79, %c0_80, %c0_81] : memref<3x48x32xf32, #tpu.memory_space<vmem>>, vector<1x48x32xf32>
    %286 = vector.shape_cast %285 : vector<1x48x32xf32> to vector<48x32xf32>
    %cst_82 = arith.constant dense<0.000000e+00> : vector<4x32xf32>
    %287 = tpu.matmul %284, %286, %cst_82 {dimension_numbers = #tpu.dot_dimension_numbers<[1], [0], [0], [1], [0, 0, 1, 1], [], []>} : vector<4x48xf32>, vector<48x32xf32>, vector<4x32xf32> -> vector<4x32xf32>
    %288 = arith.addf %283, %287 : vector<4x32xf32>
    %289 = vector.extract_strided_slice %279 {offsets = [2, 0], sizes = [4, 48], strides = [1, 1]} : vector<6x48xf32> to vector<4x48xf32>
    %c2_83 = arith.constant 2 : index
    %c0_84 = arith.constant 0 : index
    %c0_85 = arith.constant 0 : index
    %290 = vector.load %arg10[%c2_83, %c0_84, %c0_85] : memref<3x48x32xf32, #tpu.memory_space<vmem>>, vector<1x48x32xf32>
    %291 = vector.shape_cast %290 : vector<1x48x32xf32> to vector<48x32xf32>
    %cst_86 = arith.constant dense<0.000000e+00> : vector<4x32xf32>
    %292 = tpu.matmul %289, %291, %cst_86 {dimension_numbers = #tpu.dot_dimension_numbers<[1], [0], [0], [1], [0, 0, 1, 1], [], []>} : vector<4x48xf32>, vector<48x32xf32>, vector<4x32xf32> -> vector<4x32xf32>
    %293 = arith.addf %288, %292 : vector<4x32xf32>
    %c0_87 = arith.constant 0 : index
    %c0_88 = arith.constant 0 : index
    %294 = vector.load %arg11[%c0_87, %c0_88] : memref<2x32xf32, #tpu.memory_space<vmem>>, vector<2x32xf32>
    %295 = vector.extract_strided_slice %294 {offsets = [0, 0], sizes = [1, 32], strides = [1, 1]} : vector<2x32xf32> to vector<1x32xf32>
    %296 = vector.broadcast %295 : vector<1x32xf32> to vector<4x32xf32>
    %297 = arith.mulf %293, %296 : vector<4x32xf32>
    %298 = vector.extract_strided_slice %294 {offsets = [1, 0], sizes = [1, 32], strides = [1, 1]} : vector<2x32xf32> to vector<1x32xf32>
    %299 = vector.broadcast %298 : vector<1x32xf32> to vector<4x32xf32>
    %300 = arith.addf %297, %299 : vector<4x32xf32>
    %cst_89 = arith.constant 0.000000e+00 : f32
    %301 = vector.broadcast %cst_89 : f32 to vector<4x32xf32>
    %302 = arith.cmpf oge, %300, %301 : vector<4x32xf32>
    %cst_90 = arith.constant 1.000000e-01 : f32
    %303 = vector.broadcast %cst_90 : f32 to vector<4x32xf32>
    %304 = arith.mulf %303, %300 : vector<4x32xf32>
    %305 = arith.select %302, %300, %304 : vector<4x32xi1>, vector<4x32xf32>
    %306 = vector.extract_strided_slice %305 {offsets = [0, 0], sizes = [4, 8], strides = [1, 1]} : vector<4x32xf32> to vector<4x8xf32>
    %307 = vector.extract_strided_slice %206 {offsets = [0, 0], sizes = [4, 8], strides = [1, 1]} : vector<4x32xf32> to vector<4x8xf32>
    %308 = vector.extract_strided_slice %305 {offsets = [0, 8], sizes = [4, 8], strides = [1, 1]} : vector<4x32xf32> to vector<4x8xf32>
    %309 = vector.extract_strided_slice %206 {offsets = [0, 8], sizes = [4, 8], strides = [1, 1]} : vector<4x32xf32> to vector<4x8xf32>
    %310 = vector.extract_strided_slice %305 {offsets = [0, 16], sizes = [4, 8], strides = [1, 1]} : vector<4x32xf32> to vector<4x8xf32>
    %311 = vector.extract_strided_slice %206 {offsets = [0, 16], sizes = [4, 8], strides = [1, 1]} : vector<4x32xf32> to vector<4x8xf32>
    %312 = vector.extract_strided_slice %305 {offsets = [0, 24], sizes = [4, 8], strides = [1, 1]} : vector<4x32xf32> to vector<4x8xf32>
    %313 = vector.extract_strided_slice %206 {offsets = [0, 24], sizes = [4, 8], strides = [1, 1]} : vector<4x32xf32> to vector<4x8xf32>
    %314 = tpu.concatenate %306, %307, %308, %309, %310, %311, %312, %313 in 1 : vector<4x8xf32>, vector<4x8xf32>, vector<4x8xf32>, vector<4x8xf32>, vector<4x8xf32>, vector<4x8xf32>, vector<4x8xf32>, vector<4x8xf32> -> vector<4x64xf32>
    %c0_91 = arith.constant 0 : index
    %c0_92 = arith.constant 0 : index
    %c0_93 = arith.constant 0 : index
    %315 = vector.load %arg20[%c0_91, %c0_92, %c0_93] : memref<1x4x64xf32, #tpu.memory_space<vmem>>, vector<1x4x64xf32>
    %316 = vector.shape_cast %315 : vector<1x4x64xf32> to vector<4x64xf32>
    %317 = vector.shape_cast %314 : vector<4x64xf32> to vector<1x4x64xf32>
    tpu.vector_store %arg20[%c0_91, %c0_92, %c0_93], %317 {strides = array<i32>} : memref<1x4x64xf32, #tpu.memory_space<vmem>>, vector<1x4x64xf32>,
    %cst_94 = arith.constant 0.000000e+00 : f32
    %318 = vector.broadcast %cst_94 : f32 to vector<1x64xf32>
    %319 = tpu.concatenate %318, %314, %318 in 0 : vector<1x64xf32>, vector<4x64xf32>, vector<1x64xf32> -> vector<6x64xf32>
    %cst_95 = arith.constant 0.000000e+00 : f32
    %320 = vector.broadcast %cst_95 : f32 to vector<6x16xf32>
    %321 = tpu.concatenate %320, %319, %320 in 1 : vector<6x16xf32>, vector<6x64xf32>, vector<6x16xf32> -> vector<6x96xf32>
    %c0_96 = arith.constant 0 : index
    %c0_97 = arith.constant 0 : index
    %c0_98 = arith.constant 0 : index
    %322 = vector.load %arg12[%c0_96, %c0_97, %c0_98] : memref<3x96x32xf32, #tpu.memory_space<vmem>>, vector<1x96x32xf32>
    %323 = vector.shape_cast %322 : vector<1x96x32xf32> to vector<96x32xf32>
    %cst_99 = arith.constant dense<0.000000e+00> : vector<6x32xf32>
    %324 = tpu.matmul %321, %323, %cst_99 {dimension_numbers = #tpu.dot_dimension_numbers<[1], [0], [0], [1], [0, 0, 1, 1], [], []>} : vector<6x96xf32>, vector<96x32xf32>, vector<6x32xf32> -> vector<6x32xf32>
    %c1_100 = arith.constant 1 : index
    %c0_101 = arith.constant 0 : index
    %c0_102 = arith.constant 0 : index
    %325 = vector.load %arg12[%c1_100, %c0_101, %c0_102] : memref<3x96x32xf32, #tpu.memory_space<vmem>>, vector<1x96x32xf32>
    %326 = vector.shape_cast %325 : vector<1x96x32xf32> to vector<96x32xf32>
    %cst_103 = arith.constant dense<0.000000e+00> : vector<6x32xf32>
    %327 = tpu.matmul %321, %326, %cst_103 {dimension_numbers = #tpu.dot_dimension_numbers<[1], [0], [0], [1], [0, 0, 1, 1], [], []>} : vector<6x96xf32>, vector<96x32xf32>, vector<6x32xf32> -> vector<6x32xf32>
    %c2_104 = arith.constant 2 : index
    %c0_105 = arith.constant 0 : index
    %c0_106 = arith.constant 0 : index
    %328 = vector.load %arg12[%c2_104, %c0_105, %c0_106] : memref<3x96x32xf32, #tpu.memory_space<vmem>>, vector<1x96x32xf32>
    %329 = vector.shape_cast %328 : vector<1x96x32xf32> to vector<96x32xf32>
    %cst_107 = arith.constant dense<0.000000e+00> : vector<6x32xf32>
    %330 = tpu.matmul %321, %329, %cst_107 {dimension_numbers = #tpu.dot_dimension_numbers<[1], [0], [0], [1], [0, 0, 1, 1], [], []>} : vector<6x96xf32>, vector<96x32xf32>, vector<6x32xf32> -> vector<6x32xf32>
    %331 = vector.extract_strided_slice %324 {offsets = [0, 0], sizes = [1, 32], strides = [1, 1]} : vector<6x32xf32> to vector<1x32xf32>
    %332 = vector.extract_strided_slice %327 {offsets = [1, 0], sizes = [1, 32], strides = [1, 1]} : vector<6x32xf32> to vector<1x32xf32>
    %333 = arith.addf %331, %332 : vector<1x32xf32>
    %334 = vector.extract_strided_slice %330 {offsets = [2, 0], sizes = [1, 32], strides = [1, 1]} : vector<6x32xf32> to vector<1x32xf32>
    %335 = arith.addf %333, %334 : vector<1x32xf32>
    %336 = vector.extract_strided_slice %324 {offsets = [2, 0], sizes = [1, 32], strides = [1, 1]} : vector<6x32xf32> to vector<1x32xf32>
    %337 = vector.extract_strided_slice %327 {offsets = [3, 0], sizes = [1, 32], strides = [1, 1]} : vector<6x32xf32> to vector<1x32xf32>
    %338 = arith.addf %336, %337 : vector<1x32xf32>
    %339 = vector.extract_strided_slice %330 {offsets = [4, 0], sizes = [1, 32], strides = [1, 1]} : vector<6x32xf32> to vector<1x32xf32>
    %340 = arith.addf %338, %339 : vector<1x32xf32>
    %341 = tpu.concatenate %335, %340 in 0 : vector<1x32xf32>, vector<1x32xf32> -> vector<2x32xf32>
    %c0_108 = arith.constant 0 : index
    %c0_109 = arith.constant 0 : index
    %342 = vector.load %arg13[%c0_108, %c0_109] : memref<2x32xf32, #tpu.memory_space<vmem>>, vector<2x32xf32>
    %343 = vector.extract_strided_slice %342 {offsets = [0, 0], sizes = [1, 32], strides = [1, 1]} : vector<2x32xf32> to vector<1x32xf32>
    %344 = vector.broadcast %343 : vector<1x32xf32> to vector<2x32xf32>
    %345 = arith.mulf %341, %344 : vector<2x32xf32>
    %346 = vector.extract_strided_slice %342 {offsets = [1, 0], sizes = [1, 32], strides = [1, 1]} : vector<2x32xf32> to vector<1x32xf32>
    %347 = vector.broadcast %346 : vector<1x32xf32> to vector<2x32xf32>
    %348 = arith.addf %345, %347 : vector<2x32xf32>
    %cst_110 = arith.constant 0.000000e+00 : f32
    %349 = vector.broadcast %cst_110 : f32 to vector<2x32xf32>
    %350 = arith.cmpf oge, %348, %349 : vector<2x32xf32>
    %cst_111 = arith.constant 1.000000e-01 : f32
    %351 = vector.broadcast %cst_111 : f32 to vector<2x32xf32>
    %352 = arith.mulf %351, %348 : vector<2x32xf32>
    %353 = arith.select %350, %348, %352 : vector<2x32xi1>, vector<2x32xf32>
    %cst_112 = arith.constant 0.000000e+00 : f32
    %354 = vector.broadcast %cst_112 : f32 to vector<1x32xf32>
    %355 = tpu.concatenate %354, %353, %354 in 0 : vector<1x32xf32>, vector<2x32xf32>, vector<1x32xf32> -> vector<4x32xf32>
    %cst_113 = arith.constant 0.000000e+00 : f32
    %356 = vector.broadcast %cst_113 : f32 to vector<4x16xf32>
    %357 = tpu.concatenate %356, %355, %356 in 1 : vector<4x16xf32>, vector<4x32xf32>, vector<4x16xf32> -> vector<4x64xf32>
    %358 = vector.extract_strided_slice %357 {offsets = [0, 0], sizes = [2, 64], strides = [1, 1]} : vector<4x64xf32> to vector<2x64xf32>
    %c0_114 = arith.constant 0 : index
    %c0_115 = arith.constant 0 : index
    %c0_116 = arith.constant 0 : index
    %359 = vector.load %arg14[%c0_114, %c0_115, %c0_116] : memref<3x64x16xf32, #tpu.memory_space<vmem>>, vector<1x64x16xf32>
    %360 = vector.shape_cast %359 : vector<1x64x16xf32> to vector<64x16xf32>
    %cst_117 = arith.constant dense<0.000000e+00> : vector<2x16xf32>
    %361 = tpu.matmul %358, %360, %cst_117 {dimension_numbers = #tpu.dot_dimension_numbers<[1], [0], [0], [1], [0, 0, 1, 1], [], []>} : vector<2x64xf32>, vector<64x16xf32>, vector<2x16xf32> -> vector<2x16xf32>
    %362 = vector.extract_strided_slice %357 {offsets = [1, 0], sizes = [2, 64], strides = [1, 1]} : vector<4x64xf32> to vector<2x64xf32>
    %c1_118 = arith.constant 1 : index
    %c0_119 = arith.constant 0 : index
    %c0_120 = arith.constant 0 : index
    %363 = vector.load %arg14[%c1_118, %c0_119, %c0_120] : memref<3x64x16xf32, #tpu.memory_space<vmem>>, vector<1x64x16xf32>
    %364 = vector.shape_cast %363 : vector<1x64x16xf32> to vector<64x16xf32>
    %cst_121 = arith.constant dense<0.000000e+00> : vector<2x16xf32>
    %365 = tpu.matmul %362, %364, %cst_121 {dimension_numbers = #tpu.dot_dimension_numbers<[1], [0], [0], [1], [0, 0, 1, 1], [], []>} : vector<2x64xf32>, vector<64x16xf32>, vector<2x16xf32> -> vector<2x16xf32>
    %366 = arith.addf %361, %365 : vector<2x16xf32>
    %367 = vector.extract_strided_slice %357 {offsets = [2, 0], sizes = [2, 64], strides = [1, 1]} : vector<4x64xf32> to vector<2x64xf32>
    %c2_122 = arith.constant 2 : index
    %c0_123 = arith.constant 0 : index
    %c0_124 = arith.constant 0 : index
    %368 = vector.load %arg14[%c2_122, %c0_123, %c0_124] : memref<3x64x16xf32, #tpu.memory_space<vmem>>, vector<1x64x16xf32>
    %369 = vector.shape_cast %368 : vector<1x64x16xf32> to vector<64x16xf32>
    %cst_125 = arith.constant dense<0.000000e+00> : vector<2x16xf32>
    %370 = tpu.matmul %367, %369, %cst_125 {dimension_numbers = #tpu.dot_dimension_numbers<[1], [0], [0], [1], [0, 0, 1, 1], [], []>} : vector<2x64xf32>, vector<64x16xf32>, vector<2x16xf32> -> vector<2x16xf32>
    %371 = arith.addf %366, %370 : vector<2x16xf32>
    %c0_126 = arith.constant 0 : index
    %c0_127 = arith.constant 0 : index
    %372 = vector.load %arg15[%c0_126, %c0_127] : memref<2x16xf32, #tpu.memory_space<vmem>>, vector<2x16xf32>
    %373 = vector.extract_strided_slice %372 {offsets = [0, 0], sizes = [1, 16], strides = [1, 1]} : vector<2x16xf32> to vector<1x16xf32>
    %374 = vector.broadcast %373 : vector<1x16xf32> to vector<2x16xf32>
    %375 = arith.mulf %371, %374 : vector<2x16xf32>
    %376 = vector.extract_strided_slice %372 {offsets = [1, 0], sizes = [1, 16], strides = [1, 1]} : vector<2x16xf32> to vector<1x16xf32>
    %377 = vector.broadcast %376 : vector<1x16xf32> to vector<2x16xf32>
    %378 = arith.addf %375, %377 : vector<2x16xf32>
    %cst_128 = arith.constant 0.000000e+00 : f32
    %379 = vector.broadcast %cst_128 : f32 to vector<2x16xf32>
    %380 = arith.cmpf oge, %378, %379 : vector<2x16xf32>
    %cst_129 = arith.constant 1.000000e-01 : f32
    %381 = vector.broadcast %cst_129 : f32 to vector<2x16xf32>
    %382 = arith.mulf %381, %378 : vector<2x16xf32>
    %383 = arith.select %380, %378, %382 : vector<2x16xi1>, vector<2x16xf32>
    %cst_130 = arith.constant 0.000000e+00 : f32
    %384 = vector.broadcast %cst_130 : f32 to vector<1x16xf32>
    %385 = tpu.concatenate %384, %383, %384 in 0 : vector<1x16xf32>, vector<2x16xf32>, vector<1x16xf32> -> vector<4x16xf32>
    %cst_131 = arith.constant 0.000000e+00 : f32
    %386 = vector.broadcast %cst_131 : f32 to vector<4x8xf32>
    %387 = tpu.concatenate %386, %385, %386 in 1 : vector<4x8xf32>, vector<4x16xf32>, vector<4x8xf32> -> vector<4x32xf32>
    %388 = vector.extract_strided_slice %387 {offsets = [0, 0], sizes = [2, 32], strides = [1, 1]} : vector<4x32xf32> to vector<2x32xf32>
    %c0_132 = arith.constant 0 : index
    %c0_133 = arith.constant 0 : index
    %c0_134 = arith.constant 0 : index
    %389 = vector.load %arg16[%c0_132, %c0_133, %c0_134] : memref<3x32x16xf32, #tpu.memory_space<vmem>>, vector<1x32x16xf32>
    %390 = vector.shape_cast %389 : vector<1x32x16xf32> to vector<32x16xf32>
    %cst_135 = arith.constant dense<0.000000e+00> : vector<2x16xf32>
    %391 = tpu.matmul %388, %390, %cst_135 {dimension_numbers = #tpu.dot_dimension_numbers<[1], [0], [0], [1], [0, 0, 1, 1], [], []>} : vector<2x32xf32>, vector<32x16xf32>, vector<2x16xf32> -> vector<2x16xf32>
    %392 = vector.extract_strided_slice %387 {offsets = [1, 0], sizes = [2, 32], strides = [1, 1]} : vector<4x32xf32> to vector<2x32xf32>
    %c1_136 = arith.constant 1 : index
    %c0_137 = arith.constant 0 : index
    %c0_138 = arith.constant 0 : index
    %393 = vector.load %arg16[%c1_136, %c0_137, %c0_138] : memref<3x32x16xf32, #tpu.memory_space<vmem>>, vector<1x32x16xf32>
    %394 = vector.shape_cast %393 : vector<1x32x16xf32> to vector<32x16xf32>
    %cst_139 = arith.constant dense<0.000000e+00> : vector<2x16xf32>
    %395 = tpu.matmul %392, %394, %cst_139 {dimension_numbers = #tpu.dot_dimension_numbers<[1], [0], [0], [1], [0, 0, 1, 1], [], []>} : vector<2x32xf32>, vector<32x16xf32>, vector<2x16xf32> -> vector<2x16xf32>
    %396 = arith.addf %391, %395 : vector<2x16xf32>
    %397 = vector.extract_strided_slice %387 {offsets = [2, 0], sizes = [2, 32], strides = [1, 1]} : vector<4x32xf32> to vector<2x32xf32>
    %c2_140 = arith.constant 2 : index
    %c0_141 = arith.constant 0 : index
    %c0_142 = arith.constant 0 : index
    %398 = vector.load %arg16[%c2_140, %c0_141, %c0_142] : memref<3x32x16xf32, #tpu.memory_space<vmem>>, vector<1x32x16xf32>
    %399 = vector.shape_cast %398 : vector<1x32x16xf32> to vector<32x16xf32>
    %cst_143 = arith.constant dense<0.000000e+00> : vector<2x16xf32>
    %400 = tpu.matmul %397, %399, %cst_143 {dimension_numbers = #tpu.dot_dimension_numbers<[1], [0], [0], [1], [0, 0, 1, 1], [], []>} : vector<2x32xf32>, vector<32x16xf32>, vector<2x16xf32> -> vector<2x16xf32>
    %401 = arith.addf %396, %400 : vector<2x16xf32>
    %c0_144 = arith.constant 0 : index
    %c0_145 = arith.constant 0 : index
    %402 = vector.load %arg17[%c0_144, %c0_145] : memref<2x16xf32, #tpu.memory_space<vmem>>, vector<2x16xf32>
    %403 = vector.extract_strided_slice %402 {offsets = [0, 0], sizes = [1, 16], strides = [1, 1]} : vector<2x16xf32> to vector<1x16xf32>
    %404 = vector.broadcast %403 : vector<1x16xf32> to vector<2x16xf32>
    %405 = arith.mulf %401, %404 : vector<2x16xf32>
    %406 = vector.extract_strided_slice %402 {offsets = [1, 0], sizes = [1, 16], strides = [1, 1]} : vector<2x16xf32> to vector<1x16xf32>
    %407 = vector.broadcast %406 : vector<1x16xf32> to vector<2x16xf32>
    %408 = arith.addf %405, %407 : vector<2x16xf32>
    %cst_146 = arith.constant 0.000000e+00 : f32
    %409 = vector.broadcast %cst_146 : f32 to vector<2x16xf32>
    %410 = arith.cmpf oge, %408, %409 : vector<2x16xf32>
    %cst_147 = arith.constant 1.000000e-01 : f32
    %411 = vector.broadcast %cst_147 : f32 to vector<2x16xf32>
    %412 = arith.mulf %411, %408 : vector<2x16xf32>
    %413 = arith.select %410, %408, %412 : vector<2x16xi1>, vector<2x16xf32>
    %414 = vector.extract_strided_slice %413 {offsets = [0, 0], sizes = [2, 8], strides = [1, 1]} : vector<2x16xf32> to vector<2x8xf32>
    %415 = vector.extract_strided_slice %383 {offsets = [0, 0], sizes = [2, 8], strides = [1, 1]} : vector<2x16xf32> to vector<2x8xf32>
    %416 = vector.extract_strided_slice %413 {offsets = [0, 8], sizes = [2, 8], strides = [1, 1]} : vector<2x16xf32> to vector<2x8xf32>
    %417 = vector.extract_strided_slice %383 {offsets = [0, 8], sizes = [2, 8], strides = [1, 1]} : vector<2x16xf32> to vector<2x8xf32>
    %418 = tpu.concatenate %414, %415, %416, %417 in 1 : vector<2x8xf32>, vector<2x8xf32>, vector<2x8xf32>, vector<2x8xf32> -> vector<2x32xf32>
    %cst_148 = arith.constant 0.000000e+00 : f32
    %419 = vector.broadcast %cst_148 : f32 to vector<1x32xf32>
    %420 = tpu.concatenate %419, %418, %419 in 0 : vector<1x32xf32>, vector<2x32xf32>, vector<1x32xf32> -> vector<4x32xf32>
    %cst_149 = arith.constant 0.000000e+00 : f32
    %421 = vector.broadcast %cst_149 : f32 to vector<4x16xf32>
    %422 = tpu.concatenate %421, %420, %421 in 1 : vector<4x16xf32>, vector<4x32xf32>, vector<4x16xf32> -> vector<4x64xf32>
    %423 = vector.extract_strided_slice %422 {offsets = [0, 0], sizes = [2, 64], strides = [1, 1]} : vector<4x64xf32> to vector<2x64xf32>
    %c0_150 = arith.constant 0 : index
    %c0_151 = arith.constant 0 : index
    %c0_152 = arith.constant 0 : index
    %424 = vector.load %arg18[%c0_150, %c0_151, %c0_152] : memref<3x64x32xf32, #tpu.memory_space<vmem>>, vector<1x64x32xf32>
    %425 = vector.shape_cast %424 : vector<1x64x32xf32> to vector<64x32xf32>
    %cst_153 = arith.constant dense<0.000000e+00> : vector<2x32xf32>
    %426 = tpu.matmul %423, %425, %cst_153 {dimension_numbers = #tpu.dot_dimension_numbers<[1], [0], [0], [1], [0, 0, 1, 1], [], []>} : vector<2x64xf32>, vector<64x32xf32>, vector<2x32xf32> -> vector<2x32xf32>
    %427 = vector.extract_strided_slice %422 {offsets = [1, 0], sizes = [2, 64], strides = [1, 1]} : vector<4x64xf32> to vector<2x64xf32>
    %c1_154 = arith.constant 1 : index
    %c0_155 = arith.constant 0 : index
    %c0_156 = arith.constant 0 : index
    %428 = vector.load %arg18[%c1_154, %c0_155, %c0_156] : memref<3x64x32xf32, #tpu.memory_space<vmem>>, vector<1x64x32xf32>
    %429 = vector.shape_cast %428 : vector<1x64x32xf32> to vector<64x32xf32>
    %cst_157 = arith.constant dense<0.000000e+00> : vector<2x32xf32>
    %430 = tpu.matmul %427, %429, %cst_157 {dimension_numbers = #tpu.dot_dimension_numbers<[1], [0], [0], [1], [0, 0, 1, 1], [], []>} : vector<2x64xf32>, vector<64x32xf32>, vector<2x32xf32> -> vector<2x32xf32>
    %431 = arith.addf %426, %430 : vector<2x32xf32>
    %432 = vector.extract_strided_slice %422 {offsets = [2, 0], sizes = [2, 64], strides = [1, 1]} : vector<4x64xf32> to vector<2x64xf32>
    %c2_158 = arith.constant 2 : index
    %c0_159 = arith.constant 0 : index
    %c0_160 = arith.constant 0 : index
    %433 = vector.load %arg18[%c2_158, %c0_159, %c0_160] : memref<3x64x32xf32, #tpu.memory_space<vmem>>, vector<1x64x32xf32>
    %434 = vector.shape_cast %433 : vector<1x64x32xf32> to vector<64x32xf32>
    %cst_161 = arith.constant dense<0.000000e+00> : vector<2x32xf32>
    %435 = tpu.matmul %432, %434, %cst_161 {dimension_numbers = #tpu.dot_dimension_numbers<[1], [0], [0], [1], [0, 0, 1, 1], [], []>} : vector<2x64xf32>, vector<64x32xf32>, vector<2x32xf32> -> vector<2x32xf32>
    %436 = arith.addf %431, %435 : vector<2x32xf32>
    %c0_162 = arith.constant 0 : index
    %c0_163 = arith.constant 0 : index
    %437 = vector.load %arg19[%c0_162, %c0_163] : memref<2x32xf32, #tpu.memory_space<vmem>>, vector<2x32xf32>
    %438 = vector.extract_strided_slice %437 {offsets = [0, 0], sizes = [1, 32], strides = [1, 1]} : vector<2x32xf32> to vector<1x32xf32>
    %439 = vector.broadcast %438 : vector<1x32xf32> to vector<2x32xf32>
    %440 = arith.mulf %436, %439 : vector<2x32xf32>
    %441 = vector.extract_strided_slice %437 {offsets = [1, 0], sizes = [1, 32], strides = [1, 1]} : vector<2x32xf32> to vector<1x32xf32>
    %442 = vector.broadcast %441 : vector<1x32xf32> to vector<2x32xf32>
    %443 = arith.addf %440, %442 : vector<2x32xf32>
    %cst_164 = arith.constant 0.000000e+00 : f32
    %444 = vector.broadcast %cst_164 : f32 to vector<2x32xf32>
    %445 = arith.cmpf oge, %443, %444 : vector<2x32xf32>
    %cst_165 = arith.constant 1.000000e-01 : f32
    %446 = vector.broadcast %cst_165 : f32 to vector<2x32xf32>
    %447 = arith.mulf %446, %443 : vector<2x32xf32>
    %448 = arith.select %445, %443, %447 : vector<2x32xi1>, vector<2x32xf32>
    %449 = vector.extract_strided_slice %448 {offsets = [0, 0], sizes = [2, 16], strides = [1, 1]} : vector<2x32xf32> to vector<2x16xf32>
    %450 = vector.extract_strided_slice %353 {offsets = [0, 0], sizes = [2, 16], strides = [1, 1]} : vector<2x32xf32> to vector<2x16xf32>
    %451 = vector.extract_strided_slice %448 {offsets = [0, 16], sizes = [2, 16], strides = [1, 1]} : vector<2x32xf32> to vector<2x16xf32>
    %452 = vector.extract_strided_slice %353 {offsets = [0, 16], sizes = [2, 16], strides = [1, 1]} : vector<2x32xf32> to vector<2x16xf32>
    %453 = tpu.concatenate %449, %450, %451, %452 in 1 : vector<2x16xf32>, vector<2x16xf32>, vector<2x16xf32>, vector<2x16xf32> -> vector<2x64xf32>
    %c0_166 = arith.constant 0 : index
    %c0_167 = arith.constant 0 : index
    %c0_168 = arith.constant 0 : index
    %454 = vector.load %arg21[%c0_166, %c0_167, %c0_168] : memref<1x2x64xf32, #tpu.memory_space<vmem>>, vector<1x2x64xf32>
    %455 = vector.shape_cast %454 : vector<1x2x64xf32> to vector<2x64xf32>
    %456 = vector.shape_cast %453 : vector<2x64xf32> to vector<1x2x64xf32>
    tpu.vector_store %arg21[%c0_166, %c0_167, %c0_168], %456 {strides = array<i32>} : memref<1x2x64xf32, #tpu.memory_space<vmem>>, vector<1x2x64xf32>,
    return
  }
  func.func @transform_0(%arg0: i32) -> (i32, i32, i32) {
    %c0_i32 = arith.constant 0 : i32
    %c0_i32_0 = arith.constant 0 : i32
    %c0_i32_1 = arith.constant 0 : i32
    return %arg0, %c0_i32, %c0_i32_0 : i32, i32, i32
  }
  func.func @transform_1(%arg0: i32) -> (i32, i32, i32) {
    %c0_i32 = arith.constant 0 : i32
    %c0_i32_0 = arith.constant 0 : i32
    %c0_i32_1 = arith.constant 0 : i32
    %c0_i32_2 = arith.constant 0 : i32
    return %c0_i32, %c0_i32_0, %c0_i32_1 : i32, i32, i32
  }
  func.func @transform_2(%arg0: i32) -> (i32, i32) {
    %c0_i32 = arith.constant 0 : i32
    %c0_i32_0 = arith.constant 0 : i32
    %c0_i32_1 = arith.constant 0 : i32
    return %c0_i32, %c0_i32_0 : i32, i32
  }
  func.func @transform_3(%arg0: i32) -> (i32, i32, i32) {
    %c0_i32 = arith.constant 0 : i32
    %c0_i32_0 = arith.constant 0 : i32
    %c0_i32_1 = arith.constant 0 : i32
    %c0_i32_2 = arith.constant 0 : i32
    return %c0_i32, %c0_i32_0, %c0_i32_1 : i32, i32, i32
  }
  func.func @transform_4(%arg0: i32) -> (i32, i32) {
    %c0_i32 = arith.constant 0 : i32
    %c0_i32_0 = arith.constant 0 : i32
    %c0_i32_1 = arith.constant 0 : i32
    return %c0_i32, %c0_i32_0 : i32, i32
  }
  func.func @transform_5(%arg0: i32) -> (i32, i32, i32) {
    %c0_i32 = arith.constant 0 : i32
    %c0_i32_0 = arith.constant 0 : i32
    %c0_i32_1 = arith.constant 0 : i32
    %c0_i32_2 = arith.constant 0 : i32
    return %c0_i32, %c0_i32_0, %c0_i32_1 : i32, i32, i32
  }
  func.func @transform_6(%arg0: i32) -> (i32, i32) {
    %c0_i32 = arith.constant 0 : i32
    %c0_i32_0 = arith.constant 0 : i32
    %c0_i32_1 = arith.constant 0 : i32
    return %c0_i32, %c0_i32_0 : i32, i32
  }
  func.func @transform_7(%arg0: i32) -> (i32, i32, i32) {
    %c0_i32 = arith.constant 0 : i32
    %c0_i32_0 = arith.constant 0 : i32
    %c0_i32_1 = arith.constant 0 : i32
    %c0_i32_2 = arith.constant 0 : i32
    return %c0_i32, %c0_i32_0, %c0_i32_1 : i32, i32, i32
  }
  func.func @transform_8(%arg0: i32) -> (i32, i32) {
    %c0_i32 = arith.constant 0 : i32
    %c0_i32_0 = arith.constant 0 : i32
    %c0_i32_1 = arith.constant 0 : i32
    return %c0_i32, %c0_i32_0 : i32, i32
  }
  func.func @transform_9(%arg0: i32) -> (i32, i32, i32) {
    %c0_i32 = arith.constant 0 : i32
    %c0_i32_0 = arith.constant 0 : i32
    %c0_i32_1 = arith.constant 0 : i32
    %c0_i32_2 = arith.constant 0 : i32
    return %c0_i32, %c0_i32_0, %c0_i32_1 : i32, i32, i32
  }
  func.func @transform_10(%arg0: i32) -> (i32, i32) {
    %c0_i32 = arith.constant 0 : i32
    %c0_i32_0 = arith.constant 0 : i32
    %c0_i32_1 = arith.constant 0 : i32
    return %c0_i32, %c0_i32_0 : i32, i32
  }
  func.func @transform_11(%arg0: i32) -> (i32, i32, i32) {
    %c0_i32 = arith.constant 0 : i32
    %c0_i32_0 = arith.constant 0 : i32
    %c0_i32_1 = arith.constant 0 : i32
    %c0_i32_2 = arith.constant 0 : i32
    return %c0_i32, %c0_i32_0, %c0_i32_1 : i32, i32, i32
  }
  func.func @transform_12(%arg0: i32) -> (i32, i32) {
    %c0_i32 = arith.constant 0 : i32
    %c0_i32_0 = arith.constant 0 : i32
    %c0_i32_1 = arith.constant 0 : i32
    return %c0_i32, %c0_i32_0 : i32, i32
  }
  func.func @transform_13(%arg0: i32) -> (i32, i32, i32) {
    %c0_i32 = arith.constant 0 : i32
    %c0_i32_0 = arith.constant 0 : i32
    %c0_i32_1 = arith.constant 0 : i32
    %c0_i32_2 = arith.constant 0 : i32
    return %c0_i32, %c0_i32_0, %c0_i32_1 : i32, i32, i32
  }
  func.func @transform_14(%arg0: i32) -> (i32, i32) {
    %c0_i32 = arith.constant 0 : i32
    %c0_i32_0 = arith.constant 0 : i32
    %c0_i32_1 = arith.constant 0 : i32
    return %c0_i32, %c0_i32_0 : i32, i32
  }
  func.func @transform_15(%arg0: i32) -> (i32, i32, i32) {
    %c0_i32 = arith.constant 0 : i32
    %c0_i32_0 = arith.constant 0 : i32
    %c0_i32_1 = arith.constant 0 : i32
    %c0_i32_2 = arith.constant 0 : i32
    return %c0_i32, %c0_i32_0, %c0_i32_1 : i32, i32, i32
  }
  func.func @transform_16(%arg0: i32) -> (i32, i32) {
    %c0_i32 = arith.constant 0 : i32
    %c0_i32_0 = arith.constant 0 : i32
    %c0_i32_1 = arith.constant 0 : i32
    return %c0_i32, %c0_i32_0 : i32, i32
  }
  func.func @transform_17(%arg0: i32) -> (i32, i32, i32) {
    %c0_i32 = arith.constant 0 : i32
    %c0_i32_0 = arith.constant 0 : i32
    %c0_i32_1 = arith.constant 0 : i32
    %c0_i32_2 = arith.constant 0 : i32
    return %c0_i32, %c0_i32_0, %c0_i32_1 : i32, i32, i32
  }
  func.func @transform_18(%arg0: i32) -> (i32, i32) {
    %c0_i32 = arith.constant 0 : i32
    %c0_i32_0 = arith.constant 0 : i32
    %c0_i32_1 = arith.constant 0 : i32
    return %c0_i32, %c0_i32_0 : i32, i32
  }
  func.func @transform_19(%arg0: i32) -> (i32, i32, i32) {
    %c0_i32 = arith.constant 0 : i32
    %c0_i32_0 = arith.constant 0 : i32
    %c0_i32_1 = arith.constant 0 : i32
    return %arg0, %c0_i32, %c0_i32_0 : i32, i32, i32
  }
  func.func @transform_20(%arg0: i32) -> (i32, i32, i32) {
    %c0_i32 = arith.constant 0 : i32
    %c0_i32_0 = arith.constant 0 : i32
    %c0_i32_1 = arith.constant 0 : i32
    return %arg0, %c0_i32, %c0_i32_0 : i32, i32, i32
  }
}

</mosaic_0001>

<llo_original>
// kernel: _lambda_.1
$region0: #{_lambda_.1}
  #allocation0 [shape = 'u32[]', space=smem, size = 0x4, offset = 0x4, fixed_abs, tag = 'smem constant byte address 0x4 - core index']
  #allocation1 [shape = 'u32[144,128]{1,0:T(1,128)}', space=vmem, size = 0x12000, scoped, tag = 'internal scratch']
  %s0 = inlined_call_operand.vmem [shape: f32[2,16,48], index: 0, kind: input, shape index: {}]
  %s1 = inlined_call_operand.hbm [shape: f32[3,54,64], index: 1, kind: input, shape index: {}]
  %s2 = inlined_call_operand.hbm [shape: f32[2,64], index: 2, kind: input, shape index: {}]
  %s3 = inlined_call_operand.hbm [shape: f32[3,48,32], index: 3, kind: input, shape index: {}]
  %s4 = inlined_call_operand.hbm [shape: f32[2,32], index: 4, kind: input, shape index: {}, may-alias: {4,10,12,18}]
  %s5 = inlined_call_operand.hbm [shape: f32[3,48,16], index: 5, kind: input, shape index: {}]
  %s6 = inlined_call_operand.hbm [shape: f32[2,16], index: 6, kind: input, shape index: {}, may-alias: {6,8,14,16}]
  %s7 = inlined_call_operand.vmem [shape: f32[3,24,16], index: 7, kind: input, shape index: {}]
  %s8 = inlined_call_operand.hbm [shape: f32[2,16], index: 8, kind: input, shape index: {}, may-alias: {6,8,14,16}]
  %s9 = inlined_call_operand.hbm [shape: f32[3,48,32], index: 9, kind: input, shape index: {}]
  %s10 = inlined_call_operand.hbm [shape: f32[2,32], index: 10, kind: input, shape index: {}, may-alias: {4,10,12,18}]
  %s11 = inlined_call_operand.vmem [shape: f32[3,96,32], index: 11, kind: input, shape index: {}]
  %s12 = inlined_call_operand.hbm [shape: f32[2,32], index: 12, kind: input, shape index: {}, may-alias: {4,10,12,18}]
  %s13 = inlined_call_operand.hbm [shape: f32[3,64,16], index: 13, kind: input, shape index: {}]
  %s14 = inlined_call_operand.hbm [shape: f32[2,16], index: 14, kind: input, shape index: {}, may-alias: {6,8,14,16}]
  %s15 = inlined_call_operand.hbm [shape: f32[3,32,16], index: 15, kind: input, shape index: {}]
  %s16 = inlined_call_operand.hbm [shape: f32[2,16], index: 16, kind: input, shape index: {}, may-alias: {6,8,14,16}]
  %s17 = inlined_call_operand.hbm [shape: f32[3,64,32], index: 17, kind: input, shape index: {}]
  %s18 = inlined_call_operand.hbm [shape: f32[2,32], index: 18, kind: input, shape index: {}, may-alias: {4,10,12,18}]
  %s19 = inlined_call_operand.vmem [shape: f32[2,4,64], index: 19, kind: output, shape index: {0}]
  %s20 = inlined_call_operand.vmem [shape: f32[2,2,64], index: 20, kind: output, shape index: {1}]
  %21 = xla_tuple %s19, %s20
  %s22 = sld [smem:[#allocation0]]
  $region181: #{_lambda_.1} parent=0
    _
  %s24 = ssub.s32 1, %s22
  %s25 = scalar_select 0, %s24, %s22
  $region1: #{_lambda_.1} parent=0
    #allocation2 [shape = 'u8[86016]{0}', space=vmem, size = 0x15000, scoped, tag = 'input window, operand 1, single buffered']
    #allocation3 [shape = 's32[2]{0}', space=sflag, size = 0x8, scoped, tag = 'scoped memory for _lambda_.1']
    #allocation4 [shape = 'u8[1024]{0}', space=vmem, size = 0x400, scoped, tag = 'input window, operand 2, single buffered']
    #allocation5 [shape = 's32[1]{0}', space=sflag, size = 0x4, scoped, tag = 'scoped memory for _lambda_.1']
    #allocation6 [shape = 'u8[73728]{0}', space=vmem, size = 0x12000, scoped, tag = 'input window, operand 3, single buffered']
    #allocation7 [shape = 'u8[1024]{0}', space=vmem, size = 0x400, scoped, tag = 'input window, operand 4, single buffered']
    #allocation8 [shape = 's32[1]{0}', space=sflag, size = 0x4, scoped, tag = 'scoped memory for _lambda_.1']
    #allocation9 [shape = 'u8[73728]{0}', space=vmem, size = 0x12000, scoped, tag = 'input window, operand 5, single buffered']
    #allocation10 [shape = 'u8[1024]{0}', space=vmem, size = 0x400, scoped, tag = 'input window, operand 6, single buffered']
    #allocation11 [shape = 's32[1]{0}', space=sflag, size = 0x4, scoped, tag = 'scoped memory for _lambda_.1']
    #allocation12 [shape = 'u8[1024]{0}', space=vmem, size = 0x400, scoped, tag = 'input window, operand 8, single buffered']
    #allocation13 [shape = 'u8[73728]{0}', space=vmem, size = 0x12000, scoped, tag = 'input window, operand 9, single buffered']
    #allocation14 [shape = 's32[1]{0}', space=sflag, size = 0x4, scoped, tag = 'scoped memory for _lambda_.1']
    #allocation15 [shape = 'u8[1024]{0}', space=vmem, size = 0x400, scoped, tag = 'input window, operand 10, single buffered']
    #allocation16 [shape = 'u8[1024]{0}', space=vmem, size = 0x400, scoped, tag = 'input window, operand 12, single buffered']
    #allocation17 [shape = 's32[1]{0}', space=sflag, size = 0x4, scoped, tag = 'scoped memory for _lambda_.1']
    #allocation18 [shape = 'u8[98304]{0}', space=vmem, size = 0x18000, scoped, tag = 'input window, operand 13, single buffered']
    #allocation19 [shape = 'u8[1024]{0}', space=vmem, size = 0x400, scoped, tag = 'input window, operand 14, single buffered']
    #allocation20 [shape = 's32[1]{0}', space=sflag, size = 0x4, scoped, tag = 'scoped memory for _lambda_.1']
    #allocation21 [shape = 'u8[49152]{0}', space=vmem, size = 0xc000, scoped, tag = 'input window, operand 15, single buffered']
    #allocation22 [shape = 'u8[1024]{0}', space=vmem, size = 0x400, scoped, tag = 'input window, operand 16, single buffered']
    #allocation23 [shape = 's32[1]{0}', space=sflag, size = 0x4, scoped, tag = 'scoped memory for _lambda_.1']
    #allocation24 [shape = 'u8[98304]{0}', space=vmem, size = 0x18000, scoped, tag = 'input window, operand 17, single buffered']
    #allocation25 [shape = 'u8[1024]{0}', space=vmem, size = 0x400, scoped, tag = 'input window, operand 18, single buffered']
    #allocation26 [shape = 's32[1]{0}', space=sflag, size = 0x4, scoped, tag = 'scoped memory for _lambda_.1']
    %26 = vsyncpa [#allocation3], 0
    %27 = vsyncpa [#allocation5], 0
    %28 = vsyncpa [#allocation8], 0
    %29 = vsyncpa [#allocation11], 0
    %30 = vsyncpa [#allocation14], 0
    %31 = vsyncpa [#allocation17], 0
    %32 = vsyncpa [#allocation20], 0
    %33 = vsyncpa [#allocation23], 0
    %34 = vsyncpa [#allocation26], 0
    loop: start=0, step=1, limit=4
    $region2: #{_lambda_.1} parent=1 // loop_pre_header
      _
    $region3: #{_lambda_.1} parent=1 // loop_header
      %s36 = sphi 0, %s40
      %p37 = scmp.ge.s32.totalorder %s36, 4
      %s46 = sphi 0, %s48
      %s49 = sphi 0, %s46
      %s50 = sphi 0, %s49
      %s66 = sphi 0, %s50
      %s70 = sphi 0, %s70
      %s72 = sphi 0, %s70
      %s73 = sphi 0, %s72
      %s87 = sphi 0, %s73
      %s91 = sphi 0, %s91
      %s93 = sphi 0, %s91
      %s94 = sphi 0, %s93
      %s108 = sphi 0, %s94
      %s112 = sphi 0, %s112
      %s114 = sphi 0, %s112
      %s115 = sphi 0, %s114
      %s129 = sphi 0, %s115
      %s133 = sphi 0, %s133
      %s135 = sphi 0, %s133
      %s136 = sphi 0, %s135
      %s150 = sphi 0, %s136
      %s154 = sphi 0, %s154
      %s156 = sphi 0, %s154
      %s157 = sphi 0, %s156
      %s171 = sphi 0, %s157
      %s175 = sphi 0, %s175
      %s177 = sphi 0, %s175
      %s178 = sphi 0, %s177
      %s192 = sphi 0, %s178
      %s196 = sphi 0, %s196
      %s198 = sphi 0, %s196
      %s199 = sphi 0, %s198
      %s213 = sphi 0, %s199
      %s217 = sphi 0, %s217
      %s219 = sphi 0, %s217
      %s220 = sphi 0, %s219
      %s234 = sphi 0, %s220
      %s238 = sphi 0, %s238
      %s240 = sphi 0, %s238
      %s241 = sphi 0, %s240
      %s255 = sphi 0, %s241
      %s259 = sphi 0, %s259
      %s261 = sphi 0, %s259
      %s262 = sphi 0, %s261
      %s276 = sphi 0, %s262
      %s280 = sphi 0, %s280
      %s282 = sphi 0, %s280
      %s283 = sphi 0, %s282
      %s297 = sphi 0, %s283
      %s301 = sphi 0, %s301
      %s303 = sphi 0, %s301
      %s304 = sphi 0, %s303
      %s318 = sphi 0, %s304
      %s322 = sphi 0, %s322
      %s324 = sphi 0, %s322
      %s325 = sphi 0, %s324
      %s339 = sphi 0, %s325
      %s343 = sphi 0, %s343
      %s345 = sphi 0, %s343
      %s346 = sphi 0, %s345
      %s360 = sphi 0, %s346
      %s364 = sphi 0, %s364
      %s366 = sphi 0, %s364
      %s367 = sphi 0, %s366
      %s381 = sphi 0, %s367
      %s385 = sphi 0, %s385
      %s387 = sphi 0, %s385
      %s388 = sphi 0, %s387
      %s402 = sphi 0, %s388
      %s406 = sphi 0, %s406
      %s408 = sphi 0, %s406
      %s409 = sphi 0, %s408
      %s423 = sphi 0, %s409
      %s427 = sphi 0, %s427
      %s429 = sphi 0, %s427
      %s430 = sphi 0, %s429
      %s444 = sphi 0, %s430
      %s450 = sphi 0, %s452
      %s453 = sphi 0, %s450
      %s454 = sphi 0, %s453
      %s470 = sphi 0, %s454
      %s476 = sphi 0, %s478
      %s479 = sphi 0, %s476
      %s480 = sphi 0, %s479
      %s496 = sphi 0, %s480
    $region4: #{_lambda_.1} parent=1 // loop_header_branch
      %39 = sbr.rel (%p37) target = $region8
    $region5: #{_lambda_.1} parent=1 // loop_body
      %s41 = ssub.s32 %s36, 1
      %s42 = ssub.s32 %s36, 2
      %s43 = sadd.s32 %s36, 1
      %s44 = ssub.s32 %s36, %s43
      %p45 = scmp.eq.s32.totalorder %s44, 0
      %s47 = sadd.s32 %s46, 1
      %s48 = scalar_select %p45, %s46, %s47
      %p51 = pneg %p45
      %p52 = scmp.eq.s32.totalorder %s36, 1
      %p53 = por %p51, %p52
      %p54 = scmp.ne.s32.totalorder %s46, %s49
      %p55 = scmp.eq.s32.totalorder %s36, 0
      %p56 = por %p54, %p55
      %p57 = scmp.ne.s32.totalorder %s46, %s49
      %p58 = scmp.eq.s32.totalorder %s41, 1
      %p59 = por %p57, %p58
      %p60 = scmp.ne.s32.totalorder %s49, %s50
      %p61 = scmp.eq.s32.totalorder %s41, 0
      %p62 = por %p60, %p61
      %p63 = scmp.ne.s32.totalorder %s49, %s50
      %p64 = scmp.eq.s32.totalorder %s42, 1
      %p65 = por %p63, %p64
      %p67 = scmp.ne.s32.totalorder %s50, %s66
      %p68 = scmp.eq.s32.totalorder %s42, 0
      %p69 = por %p67, %p68
      %s71 = sadd.s32 %s70, 1
      %p74 = scmp.eq.s32.totalorder %s36, 1
      %p75 = scmp.ne.s32.totalorder %s70, %s72
      %p76 = scmp.eq.s32.totalorder %s36, 0
      %p77 = por %p75, %p76
      %p78 = scmp.ne.s32.totalorder %s70, %s72
      %p79 = scmp.eq.s32.totalorder %s41, 1
      %p80 = por %p78, %p79
      %p81 = scmp.ne.s32.totalorder %s72, %s73
      %p82 = scmp.eq.s32.totalorder %s41, 0
      %p83 = por %p81, %p82
      %p84 = scmp.ne.s32.totalorder %s72, %s73
      %p85 = scmp.eq.s32.totalorder %s42, 1
      %p86 = por %p84, %p85
      %p88 = scmp.ne.s32.totalorder %s73, %s87
      %p89 = scmp.eq.s32.totalorder %s42, 0
      %p90 = por %p88, %p89
      %s92 = sadd.s32 %s91, 1
      %p95 = scmp.eq.s32.totalorder %s36, 1
      %p96 = scmp.ne.s32.totalorder %s91, %s93
      %p97 = scmp.eq.s32.totalorder %s36, 0
      %p98 = por %p96, %p97
      %p99 = scmp.ne.s32.totalorder %s91, %s93
      %p100 = scmp.eq.s32.totalorder %s41, 1
      %p101 = por %p99, %p100
      %p102 = scmp.ne.s32.totalorder %s93, %s94
      %p103 = scmp.eq.s32.totalorder %s41, 0
      %p104 = por %p102, %p103
      %p105 = scmp.ne.s32.totalorder %s93, %s94
      %p106 = scmp.eq.s32.totalorder %s42, 1
      %p107 = por %p105, %p106
      %p109 = scmp.ne.s32.totalorder %s94, %s108
      %p110 = scmp.eq.s32.totalorder %s42, 0
      %p111 = por %p109, %p110
      %s113 = sadd.s32 %s112, 1
      %p116 = scmp.eq.s32.totalorder %s36, 1
      %p117 = scmp.ne.s32.totalorder %s112, %s114
      %p118 = scmp.eq.s32.totalorder %s36, 0
      %p119 = por %p117, %p118
      %p120 = scmp.ne.s32.totalorder %s112, %s114
      %p121 = scmp.eq.s32.totalorder %s41, 1
      %p122 = por %p120, %p121
      %p123 = scmp.ne.s32.totalorder %s114, %s115
      %p124 = scmp.eq.s32.totalorder %s41, 0
      %p125 = por %p123, %p124
      %p126 = scmp.ne.s32.totalorder %s114, %s115
      %p127 = scmp.eq.s32.totalorder %s42, 1
      %p128 = por %p126, %p127
      %p130 = scmp.ne.s32.totalorder %s115, %s129
      %p131 = scmp.eq.s32.totalorder %s42, 0
      %p132 = por %p130, %p131
      %s134 = sadd.s32 %s133, 1
      %p137 = scmp.eq.s32.totalorder %s36, 1
      %p138 = scmp.ne.s32.totalorder %s133, %s135
      %p139 = scmp.eq.s32.totalorder %s36, 0
      %p140 = por %p138, %p139
      %p141 = scmp.ne.s32.totalorder %s133, %s135
      %p142 = scmp.eq.s32.totalorder %s41, 1
      %p143 = por %p141, %p142
      %p144 = scmp.ne.s32.totalorder %s135, %s136
      %p145 = scmp.eq.s32.totalorder %s41, 0
      %p146 = por %p144, %p145
      %p147 = scmp.ne.s32.totalorder %s135, %s136
      %p148 = scmp.eq.s32.totalorder %s42, 1
      %p149 = por %p147, %p148
      %p151 = scmp.ne.s32.totalorder %s136, %s150
      %p152 = scmp.eq.s32.totalorder %s42, 0
      %p153 = por %p151, %p152
      %s155 = sadd.s32 %s154, 1
      %p158 = scmp.eq.s32.totalorder %s36, 1
      %p159 = scmp.ne.s32.totalorder %s154, %s156
      %p160 = scmp.eq.s32.totalorder %s36, 0
      %p161 = por %p159, %p160
      %p162 = scmp.ne.s32.totalorder %s154, %s156
      %p163 = scmp.eq.s32.totalorder %s41, 1
      %p164 = por %p162, %p163
      %p165 = scmp.ne.s32.totalorder %s156, %s157
      %p166 = scmp.eq.s32.totalorder %s41, 0
      %p167 = por %p165, %p166
      %p168 = scmp.ne.s32.totalorder %s156, %s157
      %p169 = scmp.eq.s32.totalorder %s42, 1
      %p170 = por %p168, %p169
      %p172 = scmp.ne.s32.totalorder %s157, %s171
      %p173 = scmp.eq.s32.totalorder %s42, 0
      %p174 = por %p172, %p173
      %s176 = sadd.s32 %s175, 1
      %p179 = scmp.eq.s32.totalorder %s36, 1
      %p180 = scmp.ne.s32.totalorder %s175, %s177
      %p181 = scmp.eq.s32.totalorder %s36, 0
      %p182 = por %p180, %p181
      %p183 = scmp.ne.s32.totalorder %s175, %s177
      %p184 = scmp.eq.s32.totalorder %s41, 1
      %p185 = por %p183, %p184
      %p186 = scmp.ne.s32.totalorder %s177, %s178
      %p187 = scmp.eq.s32.totalorder %s41, 0
      %p188 = por %p186, %p187
      %p189 = scmp.ne.s32.totalorder %s177, %s178
      %p190 = scmp.eq.s32.totalorder %s42, 1
      %p191 = por %p189, %p190
      %p193 = scmp.ne.s32.totalorder %s178, %s192
      %p194 = scmp.eq.s32.totalorder %s42, 0
      %p195 = por %p193, %p194
      %s197 = sadd.s32 %s196, 1
      %p200 = scmp.eq.s32.totalorder %s36, 1
      %p201 = scmp.ne.s32.totalorder %s196, %s198
      %p202 = scmp.eq.s32.totalorder %s36, 0
      %p203 = por %p201, %p202
      %p204 = scmp.ne.s32.totalorder %s196, %s198
      %p205 = scmp.eq.s32.totalorder %s41, 1
      %p206 = por %p204, %p205
      %p207 = scmp.ne.s32.totalorder %s198, %s199
      %p208 = scmp.eq.s32.totalorder %s41, 0
      %p209 = por %p207, %p208
      %p210 = scmp.ne.s32.totalorder %s198, %s199
      %p211 = scmp.eq.s32.totalorder %s42, 1
      %p212 = por %p210, %p211
      %p214 = scmp.ne.s32.totalorder %s199, %s213
      %p215 = scmp.eq.s32.totalorder %s42, 0
      %p216 = por %p214, %p215
      %s218 = sadd.s32 %s217, 1
      %p221 = scmp.eq.s32.totalorder %s36, 1
      %p222 = scmp.ne.s32.totalorder %s217, %s219
      %p223 = scmp.eq.s32.totalorder %s36, 0
      %p224 = por %p222, %p223
      %p225 = scmp.ne.s32.totalorder %s217, %s219
      %p226 = scmp.eq.s32.totalorder %s41, 1
      %p227 = por %p225, %p226
      %p228 = scmp.ne.s32.totalorder %s219, %s220
      %p229 = scmp.eq.s32.totalorder %s41, 0
      %p230 = por %p228, %p229
      %p231 = scmp.ne.s32.totalorder %s219, %s220
      %p232 = scmp.eq.s32.totalorder %s42, 1
      %p233 = por %p231, %p232
      %p235 = scmp.ne.s32.totalorder %s220, %s234
      %p236 = scmp.eq.s32.totalorder %s42, 0
      %p237 = por %p235, %p236
      %s239 = sadd.s32 %s238, 1
      %p242 = scmp.eq.s32.totalorder %s36, 1
      %p243 = scmp.ne.s32.totalorder %s238, %s240
      %p244 = scmp.eq.s32.totalorder %s36, 0
      %p245 = por %p243, %p244
      %p246 = scmp.ne.s32.totalorder %s238, %s240
      %p247 = scmp.eq.s32.totalorder %s41, 1
      %p248 = por %p246, %p247
      %p249 = scmp.ne.s32.totalorder %s240, %s241
      %p250 = scmp.eq.s32.totalorder %s41, 0
      %p251 = por %p249, %p250
      %p252 = scmp.ne.s32.totalorder %s240, %s241
      %p253 = scmp.eq.s32.totalorder %s42, 1
      %p254 = por %p252, %p253
      %p256 = scmp.ne.s32.totalorder %s241, %s255
      %p257 = scmp.eq.s32.totalorder %s42, 0
      %p258 = por %p256, %p257
      %s260 = sadd.s32 %s259, 1
      %p263 = scmp.eq.s32.totalorder %s36, 1
      %p264 = scmp.ne.s32.totalorder %s259, %s261
      %p265 = scmp.eq.s32.totalorder %s36, 0
      %p266 = por %p264, %p265
      %p267 = scmp.ne.s32.totalorder %s259, %s261
      %p268 = scmp.eq.s32.totalorder %s41, 1
      %p269 = por %p267, %p268
      %p270 = scmp.ne.s32.totalorder %s261, %s262
      %p271 = scmp.eq.s32.totalorder %s41, 0
      %p272 = por %p270, %p271
      %p273 = scmp.ne.s32.totalorder %s261, %s262
      %p274 = scmp.eq.s32.totalorder %s42, 1
      %p275 = por %p273, %p274
      %p277 = scmp.ne.s32.totalorder %s262, %s276
      %p278 = scmp.eq.s32.totalorder %s42, 0
      %p279 = por %p277, %p278
      %s281 = sadd.s32 %s280, 1
      %p284 = scmp.eq.s32.totalorder %s36, 1
      %p285 = scmp.ne.s32.totalorder %s280, %s282
      %p286 = scmp.eq.s32.totalorder %s36, 0
      %p287 = por %p285, %p286
      %p288 = scmp.ne.s32.totalorder %s280, %s282
      %p289 = scmp.eq.s32.totalorder %s41, 1
      %p290 = por %p288, %p289
      %p291 = scmp.ne.s32.totalorder %s282, %s283
      %p292 = scmp.eq.s32.totalorder %s41, 0
      %p293 = por %p291, %p292
      %p294 = scmp.ne.s32.totalorder %s282, %s283
      %p295 = scmp.eq.s32.totalorder %s42, 1
      %p296 = por %p294, %p295
      %p298 = scmp.ne.s32.totalorder %s283, %s297
      %p299 = scmp.eq.s32.totalorder %s42, 0
      %p300 = por %p298, %p299
      %s302 = sadd.s32 %s301, 1
      %p305 = scmp.eq.s32.totalorder %s36, 1
      %p306 = scmp.ne.s32.totalorder %s301, %s303
      %p307 = scmp.eq.s32.totalorder %s36, 0
      %p308 = por %p306, %p307
      %p309 = scmp.ne.s32.totalorder %s301, %s303
      %p310 = scmp.eq.s32.totalorder %s41, 1
      %p311 = por %p309, %p310
      %p312 = scmp.ne.s32.totalorder %s303, %s304
      %p313 = scmp.eq.s32.totalorder %s41, 0
      %p314 = por %p312, %p313
      %p315 = scmp.ne.s32.totalorder %s303, %s304
      %p316 = scmp.eq.s32.totalorder %s42, 1
      %p317 = por %p315, %p316
      %p319 = scmp.ne.s32.totalorder %s304, %s318
      %p320 = scmp.eq.s32.totalorder %s42, 0
      %p321 = por %p319, %p320
      %s323 = sadd.s32 %s322, 1
      %p326 = scmp.eq.s32.totalorder %s36, 1
      %p327 = scmp.ne.s32.totalorder %s322, %s324
      %p328 = scmp.eq.s32.totalorder %s36, 0
      %p329 = por %p327, %p328
      %p330 = scmp.ne.s32.totalorder %s322, %s324
      %p331 = scmp.eq.s32.totalorder %s41, 1
      %p332 = por %p330, %p331
      %p333 = scmp.ne.s32.totalorder %s324, %s325
      %p334 = scmp.eq.s32.totalorder %s41, 0
      %p335 = por %p333, %p334
      %p336 = scmp.ne.s32.totalorder %s324, %s325
      %p337 = scmp.eq.s32.totalorder %s42, 1
      %p338 = por %p336, %p337
      %p340 = scmp.ne.s32.totalorder %s325, %s339
      %p341 = scmp.eq.s32.totalorder %s42, 0
      %p342 = por %p340, %p341
      %s344 = sadd.s32 %s343, 1
      %p347 = scmp.eq.s32.totalorder %s36, 1
      %p348 = scmp.ne.s32.totalorder %s343, %s345
      %p349 = scmp.eq.s32.totalorder %s36, 0
      %p350 = por %p348, %p349
      %p351 = scmp.ne.s32.totalorder %s343, %s345
      %p352 = scmp.eq.s32.totalorder %s41, 1
      %p353 = por %p351, %p352
      %p354 = scmp.ne.s32.totalorder %s345, %s346
      %p355 = scmp.eq.s32.totalorder %s41, 0
      %p356 = por %p354, %p355
      %p357 = scmp.ne.s32.totalorder %s345, %s346
      %p358 = scmp.eq.s32.totalorder %s42, 1
      %p359 = por %p357, %p358
      %p361 = scmp.ne.s32.totalorder %s346, %s360
      %p362 = scmp.eq.s32.totalorder %s42, 0
      %p363 = por %p361, %p362
      %s365 = sadd.s32 %s364, 1
      %p368 = scmp.eq.s32.totalorder %s36, 1
      %p369 = scmp.ne.s32.totalorder %s364, %s366
      %p370 = scmp.eq.s32.totalorder %s36, 0
      %p371 = por %p369, %p370
      %p372 = scmp.ne.s32.totalorder %s364, %s366
      %p373 = scmp.eq.s32.totalorder %s41, 1
      %p374 = por %p372, %p373
      %p375 = scmp.ne.s32.totalorder %s366, %s367
      %p376 = scmp.eq.s32.totalorder %s41, 0
      %p377 = por %p375, %p376
      %p378 = scmp.ne.s32.totalorder %s366, %s367
      %p379 = scmp.eq.s32.totalorder %s42, 1
      %p380 = por %p378, %p379
      %p382 = scmp.ne.s32.totalorder %s367, %s381
      %p383 = scmp.eq.s32.totalorder %s42, 0
      %p384 = por %p382, %p383
      %s386 = sadd.s32 %s385, 1
      %p389 = scmp.eq.s32.totalorder %s36, 1
      %p390 = scmp.ne.s32.totalorder %s385, %s387
      %p391 = scmp.eq.s32.totalorder %s36, 0
      %p392 = por %p390, %p391
      %p393 = scmp.ne.s32.totalorder %s385, %s387
      %p394 = scmp.eq.s32.totalorder %s41, 1
      %p395 = por %p393, %p394
      %p396 = scmp.ne.s32.totalorder %s387, %s388
      %p397 = scmp.eq.s32.totalorder %s41, 0
      %p398 = por %p396, %p397
      %p399 = scmp.ne.s32.totalorder %s387, %s388
      %p400 = scmp.eq.s32.totalorder %s42, 1
      %p401 = por %p399, %p400
      %p403 = scmp.ne.s32.totalorder %s388, %s402
      %p404 = scmp.eq.s32.totalorder %s42, 0
      %p405 = por %p403, %p404
      %s407 = sadd.s32 %s406, 1
      %p410 = scmp.eq.s32.totalorder %s36, 1
      %p411 = scmp.ne.s32.totalorder %s406, %s408
      %p412 = scmp.eq.s32.totalorder %s36, 0
      %p413 = por %p411, %p412
      %p414 = scmp.ne.s32.totalorder %s406, %s408
      %p415 = scmp.eq.s32.totalorder %s41, 1
      %p416 = por %p414, %p415
      %p417 = scmp.ne.s32.totalorder %s408, %s409
      %p418 = scmp.eq.s32.totalorder %s41, 0
      %p419 = por %p417, %p418
      %p420 = scmp.ne.s32.totalorder %s408, %s409
      %p421 = scmp.eq.s32.totalorder %s42, 1
      %p422 = por %p420, %p421
      %p424 = scmp.ne.s32.totalorder %s409, %s423
      %p425 = scmp.eq.s32.totalorder %s42, 0
      %p426 = por %p424, %p425
      %s428 = sadd.s32 %s427, 1
      %p431 = scmp.eq.s32.totalorder %s36, 1
      %p432 = scmp.ne.s32.totalorder %s427, %s429
      %p433 = scmp.eq.s32.totalorder %s36, 0
      %p434 = por %p432, %p433
      %p435 = scmp.ne.s32.totalorder %s427, %s429
      %p436 = scmp.eq.s32.totalorder %s41, 1
      %p437 = por %p435, %p436
      %p438 = scmp.ne.s32.totalorder %s429, %s430
      %p439 = scmp.eq.s32.totalorder %s41, 0
      %p440 = por %p438, %p439
      %p441 = scmp.ne.s32.totalorder %s429, %s430
      %p442 = scmp.eq.s32.totalorder %s42, 1
      %p443 = por %p441, %p442
      %p445 = scmp.ne.s32.totalorder %s430, %s444
      %p446 = scmp.eq.s32.totalorder %s42, 0
      %p447 = por %p445, %p446
      %s448 = ssub.s32 %s36, %s43
      %p449 = scmp.eq.s32.totalorder %s448, 0
      %s451 = sadd.s32 %s450, 1
      %s452 = scalar_select %p449, %s450, %s451
      %p455 = pneg %p449
      %p456 = scmp.eq.s32.totalorder %s36, 1
      %p457 = por %p455, %p456
      %p458 = scmp.ne.s32.totalorder %s450, %s453
      %p459 = scmp.eq.s32.totalorder %s36, 0
      %p460 = por %p458, %p459
      %p461 = scmp.ne.s32.totalorder %s450, %s453
      %p462 = scmp.eq.s32.totalorder %s41, 1
      %p463 = por %p461, %p462
      %p464 = scmp.ne.s32.totalorder %s453, %s454
      %p465 = scmp.eq.s32.totalorder %s41, 0
      %p466 = por %p464, %p465
      %p467 = scmp.ne.s32.totalorder %s453, %s454
      %p468 = scmp.eq.s32.totalorder %s42, 1
      %p469 = por %p467, %p468
      %p471 = scmp.ne.s32.totalorder %s454, %s470
      %p472 = scmp.eq.s32.totalorder %s42, 0
      %p473 = por %p471, %p472
      %s474 = ssub.s32 %s36, %s43
      %p475 = scmp.eq.s32.totalorder %s474, 0
      %s477 = sadd.s32 %s476, 1
      %s478 = scalar_select %p475, %s476, %s477
      %p481 = pneg %p475
      %p482 = scmp.eq.s32.totalorder %s36, 1
      %p483 = por %p481, %p482
      %p484 = scmp.ne.s32.totalorder %s476, %s479
      %p485 = scmp.eq.s32.totalorder %s36, 0
      %p486 = por %p484, %p485
      %p487 = scmp.ne.s32.totalorder %s476, %s479
      %p488 = scmp.eq.s32.totalorder %s41, 1
      %p489 = por %p487, %p488
      %p490 = scmp.ne.s32.totalorder %s479, %s480
      %p491 = scmp.eq.s32.totalorder %s41, 0
      %p492 = por %p490, %p491
      %p493 = scmp.ne.s32.totalorder %s479, %s480
      %p494 = scmp.eq.s32.totalorder %s42, 1
      %p495 = por %p493, %p494
      %p497 = scmp.ne.s32.totalorder %s480, %s496
      %p498 = scmp.eq.s32.totalorder %s42, 0
      %p499 = por %p497, %p498
      %p500 = scmp.le.s32.totalorder 1, %s36
      %p501 = scmp.lt.s32.totalorder %s36, 3
      %p502 = pnand %p500, %p501
      %p503 = pneg %p502
      // Predicated region
      $region9: #{_lambda_.1} parent=5 // pred_check
        _
      $region10: #{_lambda_.1} parent=5 // pred_check_branch
        %505 = sbr.rel (%p502) target = $region12
      $region11: #{_lambda_.1} parent=5 // pred_region
        %s506 = ssub.s32 %s36, 1
        // Predicated region
        $region13: #{_lambda_.1} parent=11 // pred_check
          %p507 = pneg %p83
        $region14: #{_lambda_.1} parent=11 // pred_check_branch
          %509 = sbr.rel (%p507) target = $region16
        $region15: #{_lambda_.1} parent=11 // pred_region
          %s511 = ssub.s32 2688, 2688
          %512 = vsyncadd [#allocation3], %s511
          %s513 = sshll.u32 [#allocation2], 4
          %s514 = int_to_ptr.vmem [resolvable:$true] %s513
          %519 = dma.hbm_to_vmem [thread:$0]  %s1, 2688, %s514, [#allocation3], 128, 128, 8
        $region16: #{_lambda_.1} parent=11 // pred_fallthru
          _
        // Predicated region
        $region17: #{_lambda_.1} parent=11 // pred_check
          %p520 = pneg %p104
        $region18: #{_lambda_.1} parent=11 // pred_check_branch
          %522 = sbr.rel (%p520) target = $region20
        $region19: #{_lambda_.1} parent=11 // pred_region
          %s524 = ssub.s32 32, 32
          %525 = vsyncadd [#allocation5], %s524
          %s527 = sshll.u32 [#allocation4], 4
          %s528 = int_to_ptr.vmem [resolvable:$true] %s527
          %530 = dma.hbm_to_vmem [thread:$0]  %s2, 32, %s528, [#allocation5]
        $region20: #{_lambda_.1} parent=11 // pred_fallthru
          _
        // Predicated region
        $region21: #{_lambda_.1} parent=11 // pred_check
          %p531 = pneg %p125
        $region22: #{_lambda_.1} parent=11 // pred_check_branch
          %533 = sbr.rel (%p531) target = $region24
        $region23: #{_lambda_.1} parent=11 // pred_region
          %s535 = ssub.s32 2304, 2304
          %536 = vsyncadd [#allocation5], %s535
          %s537 = sshll.u32 [#allocation6], 4
          %s538 = int_to_ptr.vmem [resolvable:$true] %s537
          %543 = dma.hbm_to_vmem [thread:$0]  %s3, 2304, %s538, [#allocation5], 128, 128, 8
        $region24: #{_lambda_.1} parent=11 // pred_fallthru
          _
        // Predicated region
        $region25: #{_lambda_.1} parent=11 // pred_check
          %p544 = pneg %p146
        $region26: #{_lambda_.1} parent=11 // pred_check_branch
          %546 = sbr.rel (%p544) target = $region28
        $region27: #{_lambda_.1} parent=11 // pred_region
          %s548 = ssub.s32 32, 32
          %549 = vsyncadd [#allocation8], %s548
          %s551 = sshll.u32 [#allocation7], 4
          %s552 = int_to_ptr.vmem [resolvable:$true] %s551
          %554 = dma.hbm_to_vmem [thread:$0]  %s4, 32, %s552, [#allocation8]
        $region28: #{_lambda_.1} parent=11 // pred_fallthru
          _
        // Predicated region
        $region29: #{_lambda_.1} parent=11 // pred_check
          %p555 = pneg %p167
        $region30: #{_lambda_.1} parent=11 // pred_check_branch
          %557 = sbr.rel (%p555) target = $region32
        $region31: #{_lambda_.1} parent=11 // pred_region
          %s559 = ssub.s32 2304, 2304
          %560 = vsyncadd [#allocation8], %s559
          %s561 = sshll.u32 [#allocation9], 4
          %s562 = int_to_ptr.vmem [resolvable:$true] %s561
          %567 = dma.hbm_to_vmem [thread:$0]  %s5, 2304, %s562, [#allocation8], 128, 128, 8
        $region32: #{_lambda_.1} parent=11 // pred_fallthru
          _
        // Predicated region
        $region33: #{_lambda_.1} parent=11 // pred_check
          %p568 = pneg %p188
        $region34: #{_lambda_.1} parent=11 // pred_check_branch
          %570 = sbr.rel (%p568) target = $region36
        $region35: #{_lambda_.1} parent=11 // pred_region
          %s572 = ssub.s32 32, 32
          %573 = vsyncadd [#allocation11], %s572
          %s575 = sshll.u32 [#allocation10], 4
          %s576 = int_to_ptr.vmem [resolvable:$true] %s575
          %578 = dma.hbm_to_vmem [thread:$0]  %s6, 32, %s576, [#allocation11]
        $region36: #{_lambda_.1} parent=11 // pred_fallthru
          _
        // Predicated region
        $region37: #{_lambda_.1} parent=11 // pred_check
          %p579 = pneg %p209
        $region38: #{_lambda_.1} parent=11 // pred_check_branch
          %581 = sbr.rel (%p579) target = $region40
        $region39: #{_lambda_.1} parent=11 // pred_region
          _
        $region40: #{_lambda_.1} parent=11 // pred_fallthru
          _
        // Predicated region
        $region41: #{_lambda_.1} parent=11 // pred_check
          %p582 = pneg %p230
        $region42: #{_lambda_.1} parent=11 // pred_check_branch
          %584 = sbr.rel (%p582) target = $region44
        $region43: #{_lambda_.1} parent=11 // pred_region
          %s586 = ssub.s32 32, 32
          %587 = vsyncadd [#allocation11], %s586
          %s589 = sshll.u32 [#allocation12], 4
          %s590 = int_to_ptr.vmem [resolvable:$true] %s589
          %592 = dma.hbm_to_vmem [thread:$0]  %s8, 32, %s590, [#allocation11]
        $region44: #{_lambda_.1} parent=11 // pred_fallthru
          _
        // Predicated region
        $region45: #{_lambda_.1} parent=11 // pred_check
          %p593 = pneg %p251
        $region46: #{_lambda_.1} parent=11 // pred_check_branch
          %595 = sbr.rel (%p593) target = $region48
        $region47: #{_lambda_.1} parent=11 // pred_region
          %s597 = ssub.s32 2304, 2304
          %598 = vsyncadd [#allocation14], %s597
          %s599 = sshll.u32 [#allocation13], 4
          %s600 = int_to_ptr.vmem [resolvable:$true] %s599
          %605 = dma.hbm_to_vmem [thread:$0]  %s9, 2304, %s600, [#allocation14], 128, 128, 8
        $region48: #{_lambda_.1} parent=11 // pred_fallthru
          _
        // Predicated region
        $region49: #{_lambda_.1} parent=11 // pred_check
          %p606 = pneg %p272
        $region50: #{_lambda_.1} parent=11 // pred_check_branch
          %608 = sbr.rel (%p606) target = $region52
        $region51: #{_lambda_.1} parent=11 // pred_region
          %s610 = ssub.s32 32, 32
          %611 = vsyncadd [#allocation14], %s610
          %s613 = sshll.u32 [#allocation15], 4
          %s614 = int_to_ptr.vmem [resolvable:$true] %s613
          %616 = dma.hbm_to_vmem [thread:$0]  %s10, 32, %s614, [#allocation14]
        $region52: #{_lambda_.1} parent=11 // pred_fallthru
          _
        // Predicated region
        $region53: #{_lambda_.1} parent=11 // pred_check
          %p617 = pneg %p293
        $region54: #{_lambda_.1} parent=11 // pred_check_branch
          %619 = sbr.rel (%p617) target = $region56
        $region55: #{_lambda_.1} parent=11 // pred_region
          _
        $region56: #{_lambda_.1} parent=11 // pred_fallthru
          _
        // Predicated region
        $region57: #{_lambda_.1} parent=11 // pred_check
          %p620 = pneg %p314
        $region58: #{_lambda_.1} parent=11 // pred_check_branch
          %622 = sbr.rel (%p620) target = $region60
        $region59: #{_lambda_.1} parent=11 // pred_region
          %s624 = ssub.s32 32, 32
          %625 = vsyncadd [#allocation17], %s624
          %s627 = sshll.u32 [#allocation16], 4
          %s628 = int_to_ptr.vmem [resolvable:$true] %s627
          %630 = dma.hbm_to_vmem [thread:$0]  %s12, 32, %s628, [#allocation17]
        $region60: #{_lambda_.1} parent=11 // pred_fallthru
          _
        // Predicated region
        $region61: #{_lambda_.1} parent=11 // pred_check
          %p631 = pneg %p335
        $region62: #{_lambda_.1} parent=11 // pred_check_branch
          %633 = sbr.rel (%p631) target = $region64
        $region63: #{_lambda_.1} parent=11 // pred_region
          %s635 = ssub.s32 3072, 3072
          %636 = vsyncadd [#allocation17], %s635
          %s637 = sshll.u32 [#allocation18], 4
          %s638 = int_to_ptr.vmem [resolvable:$true] %s637
          %643 = dma.hbm_to_vmem [thread:$0]  %s13, 3072, %s638, [#allocation17], 128, 128, 8
        $region64: #{_lambda_.1} parent=11 // pred_fallthru
          _
        // Predicated region
        $region65: #{_lambda_.1} parent=11 // pred_check
          %p644 = pneg %p356
        $region66: #{_lambda_.1} parent=11 // pred_check_branch
          %646 = sbr.rel (%p644) target = $region68
        $region67: #{_lambda_.1} parent=11 // pred_region
          %s648 = ssub.s32 32, 32
          %649 = vsyncadd [#allocation20], %s648
          %s651 = sshll.u32 [#allocation19], 4
          %s652 = int_to_ptr.vmem [resolvable:$true] %s651
          %654 = dma.hbm_to_vmem [thread:$0]  %s14, 32, %s652, [#allocation20]
        $region68: #{_lambda_.1} parent=11 // pred_fallthru
          _
        // Predicated region
        $region69: #{_lambda_.1} parent=11 // pred_check
          %p655 = pneg %p377
        $region70: #{_lambda_.1} parent=11 // pred_check_branch
          %657 = sbr.rel (%p655) target = $region72
        $region71: #{_lambda_.1} parent=11 // pred_region
          %s659 = ssub.s32 1536, 1536
          %660 = vsyncadd [#allocation20], %s659
          %s661 = sshll.u32 [#allocation21], 4
          %s662 = int_to_ptr.vmem [resolvable:$true] %s661
          %667 = dma.hbm_to_vmem [thread:$0]  %s15, 1536, %s662, [#allocation20], 128, 128, 8
        $region72: #{_lambda_.1} parent=11 // pred_fallthru
          _
        // Predicated region
        $region73: #{_lambda_.1} parent=11 // pred_check
          %p668 = pneg %p398
        $region74: #{_lambda_.1} parent=11 // pred_check_branch
          %670 = sbr.rel (%p668) target = $region76
        $region75: #{_lambda_.1} parent=11 // pred_region
          %s672 = ssub.s32 32, 32
          %673 = vsyncadd [#allocation23], %s672
          %s675 = sshll.u32 [#allocation22], 4
          %s676 = int_to_ptr.vmem [resolvable:$true] %s675
          %678 = dma.hbm_to_vmem [thread:$0]  %s16, 32, %s676, [#allocation23]
        $region76: #{_lambda_.1} parent=11 // pred_fallthru
          _
        // Predicated region
        $region77: #{_lambda_.1} parent=11 // pred_check
          %p679 = pneg %p419
        $region78: #{_lambda_.1} parent=11 // pred_check_branch
          %681 = sbr.rel (%p679) target = $region80
        $region79: #{_lambda_.1} parent=11 // pred_region
          %s683 = ssub.s32 3072, 3072
          %684 = vsyncadd [#allocation23], %s683
          %s685 = sshll.u32 [#allocation24], 4
          %s686 = int_to_ptr.vmem [resolvable:$true] %s685
          %691 = dma.hbm_to_vmem [thread:$0]  %s17, 3072, %s686, [#allocation23], 128, 128, 8
        $region80: #{_lambda_.1} parent=11 // pred_fallthru
          _
        // Predicated region
        $region81: #{_lambda_.1} parent=11 // pred_check
          %p692 = pneg %p440
        $region82: #{_lambda_.1} parent=11 // pred_check_branch
          %694 = sbr.rel (%p692) target = $region84
        $region83: #{_lambda_.1} parent=11 // pred_region
          %s696 = ssub.s32 32, 32
          %697 = vsyncadd [#allocation26], %s696
          %s699 = sshll.u32 [#allocation25], 4
          %s700 = int_to_ptr.vmem [resolvable:$true] %s699
          %702 = dma.hbm_to_vmem [thread:$0]  %s18, 32, %s700, [#allocation26]
        $region84: #{_lambda_.1} parent=11 // pred_fallthru
          _
      $region12: #{_lambda_.1} parent=5 // pred_fallthru
        _
      %p703 = scmp.lt.s32.totalorder %s36, 2
      // Predicated region
      $region85: #{_lambda_.1} parent=5 // pred_check
        %p704 = pneg %p703
      $region86: #{_lambda_.1} parent=5 // pred_check_branch
        %706 = sbr.rel (%p704) target = $region88
      $region87: #{_lambda_.1} parent=5 // pred_region
        // Predicated region
        $region89: #{_lambda_.1} parent=87 // pred_check
          %p707 = pneg %p56
        $region90: #{_lambda_.1} parent=87 // pred_check_branch
          %709 = sbr.rel (%p707) target = $region92
        $region91: #{_lambda_.1} parent=87 // pred_region
          %p710 = scmp.lt.s32.totalorder %s36, 1
          %s711 = scalar_select %p710, %s36, 1
          %s712 = smul.addr %s711, 2
          %s713 = smul.addr %s712, 8
          %s714 = scalar_lea.vmem %s0, %s713
        $region92: #{_lambda_.1} parent=87 // pred_fallthru
          _
      $region88: #{_lambda_.1} parent=5 // pred_fallthru
        _
      %p715 = scmp.le.s32.totalorder 1, %s36
      %p716 = scmp.lt.s32.totalorder %s36, 3
      %p717 = pnand %p715, %p716
      %p718 = pneg %p717
      // Predicated region
      $region93: #{_lambda_.1} parent=5 // pred_check
        _
      $region94: #{_lambda_.1} parent=5 // pred_check_branch
        %720 = sbr.rel (%p717) target = $region96
      $region95: #{_lambda_.1} parent=5 // pred_region
        %s721 = ssub.s32 %s36, 1
        // Predicated region
        $region97: #{_lambda_.1} parent=95 // pred_check
          %p722 = pneg %p83
        $region98: #{_lambda_.1} parent=95 // pred_check_branch
          %724 = sbr.rel (%p722) target = $region100
        $region99: #{_lambda_.1} parent=95 // pred_region
          %725 = dma.done [#allocation3], 2688
        $region100: #{_lambda_.1} parent=95 // pred_fallthru
          _
        // Predicated region
        $region101: #{_lambda_.1} parent=95 // pred_check
          %p726 = pneg %p104
        $region102: #{_lambda_.1} parent=95 // pred_check_branch
          %728 = sbr.rel (%p726) target = $region104
        $region103: #{_lambda_.1} parent=95 // pred_region
          %729 = dma.done [#allocation5], 32
        $region104: #{_lambda_.1} parent=95 // pred_fallthru
          _
        // Predicated region
        $region105: #{_lambda_.1} parent=95 // pred_check
          %p730 = pneg %p125
        $region106: #{_lambda_.1} parent=95 // pred_check_branch
          %732 = sbr.rel (%p730) target = $region108
        $region107: #{_lambda_.1} parent=95 // pred_region
          %733 = dma.done [#allocation5], 2304
        $region108: #{_lambda_.1} parent=95 // pred_fallthru
          _
        // Predicated region
        $region109: #{_lambda_.1} parent=95 // pred_check
          %p734 = pneg %p146
        $region110: #{_lambda_.1} parent=95 // pred_check_branch
          %736 = sbr.rel (%p734) target = $region112
        $region111: #{_lambda_.1} parent=95 // pred_region
          %737 = dma.done [#allocation8], 32
        $region112: #{_lambda_.1} parent=95 // pred_fallthru
          _
        // Predicated region
        $region113: #{_lambda_.1} parent=95 // pred_check
          %p738 = pneg %p167
        $region114: #{_lambda_.1} parent=95 // pred_check_branch
          %740 = sbr.rel (%p738) target = $region116
        $region115: #{_lambda_.1} parent=95 // pred_region
          %741 = dma.done [#allocation8], 2304
        $region116: #{_lambda_.1} parent=95 // pred_fallthru
          _
        // Predicated region
        $region117: #{_lambda_.1} parent=95 // pred_check
          %p742 = pneg %p188
        $region118: #{_lambda_.1} parent=95 // pred_check_branch
          %744 = sbr.rel (%p742) target = $region120
        $region119: #{_lambda_.1} parent=95 // pred_region
          %745 = dma.done [#allocation11], 32
        $region120: #{_lambda_.1} parent=95 // pred_fallthru
          _
        // Predicated region
        $region121: #{_lambda_.1} parent=95 // pred_check
          %p746 = pneg %p230
        $region122: #{_lambda_.1} parent=95 // pred_check_branch
          %748 = sbr.rel (%p746) target = $region124
        $region123: #{_lambda_.1} parent=95 // pred_region
          %749 = dma.done [#allocation11], 32
        $region124: #{_lambda_.1} parent=95 // pred_fallthru
          _
        // Predicated region
        $region125: #{_lambda_.1} parent=95 // pred_check
          %p750 = pneg %p251
        $region126: #{_lambda_.1} parent=95 // pred_check_branch
          %752 = sbr.rel (%p750) target = $region128
        $region127: #{_lambda_.1} parent=95 // pred_region
          %753 = dma.done [#allocation14], 2304
        $region128: #{_lambda_.1} parent=95 // pred_fallthru
          _
        // Predicated region
        $region129: #{_lambda_.1} parent=95 // pred_check
          %p754 = pneg %p272
        $region130: #{_lambda_.1} parent=95 // pred_check_branch
          %756 = sbr.rel (%p754) target = $region132
        $region131: #{_lambda_.1} parent=95 // pred_region
          %757 = dma.done [#allocation14], 32
        $region132: #{_lambda_.1} parent=95 // pred_fallthru
          _
        // Predicated region
        $region133: #{_lambda_.1} parent=95 // pred_check
          %p758 = pneg %p314
        $region134: #{_lambda_.1} parent=95 // pred_check_branch
          %760 = sbr.rel (%p758) target = $region136
        $region135: #{_lambda_.1} parent=95 // pred_region
          %761 = dma.done [#allocation17], 32
        $region136: #{_lambda_.1} parent=95 // pred_fallthru
          _
        // Predicated region
        $region137: #{_lambda_.1} parent=95 // pred_check
          %p762 = pneg %p335
        $region138: #{_lambda_.1} parent=95 // pred_check_branch
          %764 = sbr.rel (%p762) target = $region140
        $region139: #{_lambda_.1} parent=95 // pred_region
          %765 = dma.done [#allocation17], 3072
        $region140: #{_lambda_.1} parent=95 // pred_fallthru
          _
        // Predicated region
        $region141: #{_lambda_.1} parent=95 // pred_check
          %p766 = pneg %p356
        $region142: #{_lambda_.1} parent=95 // pred_check_branch
          %768 = sbr.rel (%p766) target = $region144
        $region143: #{_lambda_.1} parent=95 // pred_region
          %769 = dma.done [#allocation20], 32
        $region144: #{_lambda_.1} parent=95 // pred_fallthru
          _
        // Predicated region
        $region145: #{_lambda_.1} parent=95 // pred_check
          %p770 = pneg %p377
        $region146: #{_lambda_.1} parent=95 // pred_check_branch
          %772 = sbr.rel (%p770) target = $region148
        $region147: #{_lambda_.1} parent=95 // pred_region
          %773 = dma.done [#allocation20], 1536
        $region148: #{_lambda_.1} parent=95 // pred_fallthru
          _
        // Predicated region
        $region149: #{_lambda_.1} parent=95 // pred_check
          %p774 = pneg %p398
        $region150: #{_lambda_.1} parent=95 // pred_check_branch
          %776 = sbr.rel (%p774) target = $region152
        $region151: #{_lambda_.1} parent=95 // pred_region
          %777 = dma.done [#allocation23], 32
        $region152: #{_lambda_.1} parent=95 // pred_fallthru
          _
        // Predicated region
        $region153: #{_lambda_.1} parent=95 // pred_check
          %p778 = pneg %p419
        $region154: #{_lambda_.1} parent=95 // pred_check_branch
          %780 = sbr.rel (%p778) target = $region156
        $region155: #{_lambda_.1} parent=95 // pred_region
          %781 = dma.done [#allocation23], 3072
        $region156: #{_lambda_.1} parent=95 // pred_fallthru
          _
        // Predicated region
        $region157: #{_lambda_.1} parent=95 // pred_check
          %p782 = pneg %p440
        $region158: #{_lambda_.1} parent=95 // pred_check_branch
          %784 = sbr.rel (%p782) target = $region160
        $region159: #{_lambda_.1} parent=95 // pred_region
          %785 = dma.done [#allocation26], 32
        $region160: #{_lambda_.1} parent=95 // pred_fallthru
          _
        %p786 = scmp.lt.s32.totalorder %s41, 1
        %s787 = scalar_select %p786, %s41, 1
        %s788 = smul.addr %s787, 2
        %s789 = smul.addr %s788, 8
        %s790 = scalar_lea.vmem %s0, %s789
        %p791 = pneg %p62
        %p792 = pneg %p59
        %p793 = pneg %p83
        %p794 = pneg %p80
        %p795 = pneg %p104
        %p796 = pneg %p101
        %p797 = pneg %p125
        %p798 = pneg %p122
        %p799 = pneg %p146
        %p800 = pneg %p143
        %p801 = pneg %p167
        %p802 = pneg %p164
        %p803 = pneg %p188
        %p804 = pneg %p185
        %p805 = pneg %p209
        %p806 = pneg %p206
        %p807 = pneg %p230
        %p808 = pneg %p227
        %p809 = pneg %p251
        %p810 = pneg %p248
        %p811 = pneg %p272
        %p812 = pneg %p269
        %p813 = pneg %p293
        %p814 = pneg %p290
        %p815 = pneg %p314
        %p816 = pneg %p311
        %p817 = pneg %p335
        %p818 = pneg %p332
        %p819 = pneg %p356
        %p820 = pneg %p353
        %p821 = pneg %p377
        %p822 = pneg %p374
        %p823 = pneg %p398
        %p824 = pneg %p395
        %p825 = pneg %p419
        %p826 = pneg %p416
        %p827 = pneg %p440
        %p828 = pneg %p437
        %p829 = pneg %p466
        %p830 = pneg %p463
        %p831 = scmp.lt.s32.totalorder %s41, 1
        %s832 = scalar_select %p831, %s41, 1
        %s833 = smul.addr %s832, 4
        %s834 = scalar_lea.vmem %s19, %s833
        %p835 = pneg %p492
        %p836 = pneg %p489
        %p837 = scmp.lt.s32.totalorder %s41, 1
        %s838 = scalar_select %p837, %s41, 1
        %s839 = smul.addr %s838, 2
        %s840 = scalar_lea.vmem %s20, %s839
        %p841 = scmp.lt.s32.totalorder %s41, 1
        %s842 = scalar_select %p841, %s41, 1
        %s843 = smul.addr %s842, 2
        %s844 = smul.addr %s843, 8
        %s845 = scalar_lea.vmem %s0, %s844
        %p846 = scmp.lt.s32.totalorder %s41, 1
        %s847 = scalar_select %p846, %s41, 1
        %s848 = smul.addr %s847, 4
        %s849 = scalar_lea.vmem %s19, %s848
        %p850 = scmp.lt.s32.totalorder %s41, 1
        %s851 = scalar_select %p850, %s41, 1
        %s852 = smul.addr %s851, 2
        %s853 = scalar_lea.vmem %s20, %s852
        %v854 = vld [vmem:[%s845] sm:$0xff]
        %v855 = vld [vmem:[%s845 + $0x8] sm:$0xff]
        %vm858 = vcmask 1040384
        %v859 = vrot.slane %v854, 7
        %v860 = vrot.slane %v855, 7
        %v861 = vsel %vm858, %v859, %v860
        %v864 = vsel %vm858, 0.0, %v859
        %v865 = vsel %vm858, %v860, 0.0
        %868 = vrot.lane.b32.xlu0 %v864, 3
        %v869 = vpop.permute.xlu0 %868
        %870 = vrot.lane.b32.xlu0 %v861, 3
        %v871 = vpop.permute.xlu0 %870
        %872 = vrot.lane.b32.xlu0 %v865, 3
        %v873 = vpop.permute.xlu0 %872
        %vm877 = vcmask 23552
        %v878 = vsel %vm877, 0.0, %v869
        %v879 = vsel %vm877, 0.0, %v871
        %v880 = vsel %vm877, 0.0, %v873
        %vm881 = vcmask 416768
        %v882 = vsel %vm881, %v878, 0.0
        %v883 = vsel %vm881, %v879, 0.0
        %v884 = vsel %vm881, %v880, 0.0
        %v885 = vld [vmem:[#allocation2] sm:$0xff]
        %v886 = vld [vmem:[#allocation2 + $0x8] sm:$0xff]
        %v887 = vld [vmem:[#allocation2 + $0x10] sm:$0xff]
        %v888 = vld [vmem:[#allocation2 + $0x18] sm:$0xff]
        %v889 = vld [vmem:[#allocation2 + $0x20] sm:$0xff]
        %v890 = vld [vmem:[#allocation2 + $0x28] sm:$0xff]
        %v891 = vld [vmem:[#allocation2 + $0x30] sm:$0x3f]
        %vm892 = vcmask 441344
        %v894 = vsel %vm892, %v882, 0
        %v897 = vsel %vm892, %v883, 0
        %v900 = vsel %vm892, %v884, 0
        %vm902 = vcmask 1045504
        %v904 = vsel %vm902, %v891, 0
        %906 = vmatprep.subr.mxu0 0.0
        %907 = vmatpush1.msra.mxu0 %v885
        %908 = vmatprep.subr.mxu0 0.0
        %909 = vmatpush1.msra.mxu0 %v886
        %910 = vmatprep.subr.mxu0 0.0
        %911 = vmatpush1.msra.mxu0 %v887
        %912 = vmatprep.subr.mxu0 0.0
        %913 = vmatpush1.msra.mxu0 %v888
        %914 = vmatprep.subr.mxu0 0.0
        %915 = vmatpush1.msra.mxu0 %v889
        %916 = vmatprep.subr.mxu0 0.0
        %917 = vmatpush1.msra.mxu0 %v890
        %918 = vmatprep.subr.mxu0 0.0
        %919 = vmatpush1.msra.mxu0 %v904
        %920 = vmatprep.subr.mxu0 0.0
        %921 = vmatpush1.msra.mxu0 0.0
        %922 = vmatprep.subr.mxu0 0.0
        %923 = vmatpush1.msra.mxu0 0.0
        %924 = vmatprep.subr.mxu0 0.0
        %925 = vmatpush1.msra.mxu0 0.0
        %926 = vmatprep.subr.mxu0 0.0
        %927 = vmatpush1.msra.mxu0 0.0
        %928 = vmatprep.subr.mxu0 0.0
        %929 = vmatpush1.msra.mxu0 0.0
        %930 = vmatprep.subr.mxu0 0.0
        %931 = vmatpush1.msra.mxu0 0.0
        %932 = vmatprep.subr.mxu0 0.0
        %933 = vmatpush1.msra.mxu0 0.0
        %934 = vmatprep.subr.mxu0 0.0
        %935 = vmatpush1.msra.mxu0 0.0
        %936 = vmatprep.subr.mxu0 0.0
        %937 = vmatpush1.msra.mxu0 0.0
        %938 = vmatprep.subr.mxu0 0.0
        %939 = vmatpush1.msra.mxu0 0.0
        %940 = vmatprep.subr.mxu0 0.0
        %941 = vmatpush1.msra.mxu0 0.0
        %942 = vmatprep.subr.mxu0 0.0
        %943 = vmatpush1.msra.mxu0 0.0
        %944 = vmatprep.subr.mxu0 0.0
        %945 = vmatpush1.msra.mxu0 0.0
        %946 = vmatprep.subr.mxu0 0.0
        %947 = vmatpush1.msra.mxu0 0.0
        %948 = vmatprep.subr.mxu0 0.0
        %949 = vmatpush1.msra.mxu0 0.0
        %950 = vmatprep.subr.mxu0 0.0
        %951 = vmatpush1.msra.mxu0 0.0
        %952 = vmatprep.subr.mxu0 0.0
        %953 = vmatpush1.msra.mxu0 0.0
        %954 = vmatprep.subr.mxu0 0.0
        %955 = vmatpush1.msra.mxu0 0.0
        %956 = vmatprep.subr.mxu0 0.0
        %957 = vmatpush1.msra.mxu0 0.0
        %958 = vmatprep.subr.mxu0 0.0
        %959 = vmatpush1.msra.mxu0 0.0
        %960 = vmatprep.subr.mxu0 0.0
        %961 = vmatpush1.msra.mxu0 0.0
        %962 = vmatprep.subr.mxu0 0.0
        %963 = vmatpush1.msra.mxu0 0.0
        %964 = vmatprep.subr.mxu0 0.0
        %965 = vmatpush1.msra.mxu0 0.0
        %966 = vmatprep.subr.mxu0 0.0
        %967 = vmatpush1.msra.mxu0 0.0
        %968 = vmatprep.subr.mxu0 0.0
        %969 = vmatpush1.msra.mxu0 0.0
        %970 = vmatprep.mubr.f32.mxu0 0.0
        %971 = vmatmul.mubr.f32.gmra.mrb[0].mxu0 %v894
        %v972 = vpop.f32.mrb[0].mxu0
        %v973 = vadd.f32 0.0, %v972
        %v974 = vpop.f32.mrb[0].mxu0
        %975 = vmatprep.mubr.f32.mxu0 0.0
        %976 = vmatmul.mubr.f32.gmra.mrb[0].mxu0 %v897
        %v977 = vpop.f32.mrb[0].mxu0
        %v978 = vadd.f32 0.0, %v977
        %v979 = vpop.f32.mrb[0].mxu0
        %980 = vmatprep.mubr.f32.mxu0 0.0
        %981 = vmatmul.mubr.f32.gmra.mrb[0].mxu0 %v900
        %v982 = vpop.f32.mrb[0].mxu0
        %v983 = vpop.f32.mrb[0].mxu0
        %984 = vdwg.mxu0
        %s985 = scalar_lea.vmem [#allocation2], 56
        %v986 = vld [vmem:[%s985] sm:$0xff]
        %v987 = vld [vmem:[%s985 + $0x8] sm:$0xff]
        %v988 = vld [vmem:[%s985 + $0x10] sm:$0xff]
        %v989 = vld [vmem:[%s985 + $0x18] sm:$0xff]
        %v990 = vld [vmem:[%s985 + $0x20] sm:$0xff]
        %v991 = vld [vmem:[%s985 + $0x28] sm:$0xff]
        %v992 = vld [vmem:[%s985 + $0x30] sm:$0x3f]
        %v994 = vsel %vm902, %v992, 0
        %996 = vmatprep.subr.mxu0 0.0
        %997 = vmatpush1.msra.mxu0 %v986
        %998 = vmatprep.subr.mxu0 0.0
        %999 = vmatpush1.msra.mxu0 %v987
        %1000 = vmatprep.subr.mxu0 0.0
        %1001 = vmatpush1.msra.mxu0 %v988
        %1002 = vmatprep.subr.mxu0 0.0
        %1003 = vmatpush1.msra.mxu0 %v989
        %1004 = vmatprep.subr.mxu0 0.0
        %1005 = vmatpush1.msra.mxu0 %v990
        %1006 = vmatprep.subr.mxu0 0.0
        %1007 = vmatpush1.msra.mxu0 %v991
        %1008 = vmatprep.subr.mxu0 0.0
        %1009 = vmatpush1.msra.mxu0 %v994
        %1010 = vmatprep.subr.mxu0 0.0
        %1011 = vmatpush1.msra.mxu0 0.0
        %1012 = vmatprep.subr.mxu0 0.0
        %1013 = vmatpush1.msra.mxu0 0.0
        %1014 = vmatprep.subr.mxu0 0.0
        %1015 = vmatpush1.msra.mxu0 0.0
        %1016 = vmatprep.subr.mxu0 0.0
        %1017 = vmatpush1.msra.mxu0 0.0
        %1018 = vmatprep.subr.mxu0 0.0
        %1019 = vmatpush1.msra.mxu0 0.0
        %1020 = vmatprep.subr.mxu0 0.0
        %1021 = vmatpush1.msra.mxu0 0.0
        %1022 = vmatprep.subr.mxu0 0.0
        %1023 = vmatpush1.msra.mxu0 0.0
        %1024 = vmatprep.subr.mxu0 0.0
        %1025 = vmatpush1.msra.mxu0 0.0
        %1026 = vmatprep.subr.mxu0 0.0
        %1027 = vmatpush1.msra.mxu0 0.0
        %1028 = vmatprep.subr.mxu0 0.0
        %1029 = vmatpush1.msra.mxu0 0.0
        %1030 = vmatprep.subr.mxu0 0.0
        %1031 = vmatpush1.msra.mxu0 0.0
        %1032 = vmatprep.subr.mxu0 0.0
        %1033 = vmatpush1.msra.mxu0 0.0
        %1034 = vmatprep.subr.mxu0 0.0
        %1035 = vmatpush1.msra.mxu0 0.0
        %1036 = vmatprep.subr.mxu0 0.0
        %1037 = vmatpush1.msra.mxu0 0.0
        %1038 = vmatprep.subr.mxu0 0.0
        %1039 = vmatpush1.msra.mxu0 0.0
        %1040 = vmatprep.subr.mxu0 0.0
        %1041 = vmatpush1.msra.mxu0 0.0
        %1042 = vmatprep.subr.mxu0 0.0
        %1043 = vmatpush1.msra.mxu0 0.0
        %1044 = vmatprep.subr.mxu0 0.0
        %1045 = vmatpush1.msra.mxu0 0.0
        %1046 = vmatprep.subr.mxu0 0.0
        %1047 = vmatpush1.msra.mxu0 0.0
        %1048 = vmatprep.subr.mxu0 0.0
        %1049 = vmatpush1.msra.mxu0 0.0
        %1050 = vmatprep.subr.mxu0 0.0
        %1051 = vmatpush1.msra.mxu0 0.0
        %1052 = vmatprep.subr.mxu0 0.0
        %1053 = vmatpush1.msra.mxu0 0.0
        %1054 = vmatprep.subr.mxu0 0.0
        %1055 = vmatpush1.msra.mxu0 0.0
        %1056 = vmatprep.subr.mxu0 0.0
        %1057 = vmatpush1.msra.mxu0 0.0
        %1058 = vmatprep.subr.mxu0 0.0
        %1059 = vmatpush1.msra.mxu0 0.0
        %1060 = vmatprep.mubr.f32.mxu0 0.0
        %1061 = vmatmul.mubr.f32.gmra.mrb[0].mxu0 %v894
        %v1062 = vpop.f32.mrb[0].mxu0
        %v1063 = vadd.f32 0.0, %v1062
        %v1064 = vpop.f32.mrb[0].mxu0
        %1065 = vmatprep.mubr.f32.mxu0 0.0
        %1066 = vmatmul.mubr.f32.gmra.mrb[0].mxu0 %v897
        %v1067 = vpop.f32.mrb[0].mxu0
        %v1068 = vadd.f32 0.0, %v1067
        %v1069 = vpop.f32.mrb[0].mxu0
        %1070 = vmatprep.mubr.f32.mxu0 0.0
        %1071 = vmatmul.mubr.f32.gmra.mrb[0].mxu0 %v900
        %v1072 = vpop.f32.mrb[0].mxu0
        %v1073 = vpop.f32.mrb[0].mxu0
        %1074 = vdwg.mxu0
        %s1075 = scalar_lea.vmem [#allocation2], 112
        %v1076 = vld [vmem:[%s1075] sm:$0xff]
        %v1077 = vld [vmem:[%s1075 + $0x8] sm:$0xff]
        %v1078 = vld [vmem:[%s1075 + $0x10] sm:$0xff]
        %v1079 = vld [vmem:[%s1075 + $0x18] sm:$0xff]
        %v1080 = vld [vmem:[%s1075 + $0x20] sm:$0xff]
        %v1081 = vld [vmem:[%s1075 + $0x28] sm:$0xff]
        %v1082 = vld [vmem:[%s1075 + $0x30] sm:$0x3f]
        %v1084 = vsel %vm902, %v1082, 0
        %1086 = vmatprep.subr.mxu0 0.0
        %1087 = vmatpush1.msra.mxu0 %v1076
        %1088 = vmatprep.subr.mxu0 0.0
        %1089 = vmatpush1.msra.mxu0 %v1077
        %1090 = vmatprep.subr.mxu0 0.0
        %1091 = vmatpush1.msra.mxu0 %v1078
        %1092 = vmatprep.subr.mxu0 0.0
        %1093 = vmatpush1.msra.mxu0 %v1079
        %1094 = vmatprep.subr.mxu0 0.0
        %1095 = vmatpush1.msra.mxu0 %v1080
        %1096 = vmatprep.subr.mxu0 0.0
        %1097 = vmatpush1.msra.mxu0 %v1081
        %1098 = vmatprep.subr.mxu0 0.0
        %1099 = vmatpush1.msra.mxu0 %v1084
        %1100 = vmatprep.subr.mxu0 0.0
        %1101 = vmatpush1.msra.mxu0 0.0
        %1102 = vmatprep.subr.mxu0 0.0
        %1103 = vmatpush1.msra.mxu0 0.0
        %1104 = vmatprep.subr.mxu0 0.0
        %1105 = vmatpush1.msra.mxu0 0.0
        %1106 = vmatprep.subr.mxu0 0.0
        %1107 = vmatpush1.msra.mxu0 0.0
        %1108 = vmatprep.subr.mxu0 0.0
        %1109 = vmatpush1.msra.mxu0 0.0
        %1110 = vmatprep.subr.mxu0 0.0
        %1111 = vmatpush1.msra.mxu0 0.0
        %1112 = vmatprep.subr.mxu0 0.0
        %1113 = vmatpush1.msra.mxu0 0.0
        %1114 = vmatprep.subr.mxu0 0.0
        %1115 = vmatpush1.msra.mxu0 0.0
        %1116 = vmatprep.subr.mxu0 0.0
        %1117 = vmatpush1.msra.mxu0 0.0
        %1118 = vmatprep.subr.mxu0 0.0
        %1119 = vmatpush1.msra.mxu0 0.0
        %1120 = vmatprep.subr.mxu0 0.0
        %1121 = vmatpush1.msra.mxu0 0.0
        %1122 = vmatprep.subr.mxu0 0.0
        %1123 = vmatpush1.msra.mxu0 0.0
        %1124 = vmatprep.subr.mxu0 0.0
        %1125 = vmatpush1.msra.mxu0 0.0
        %1126 = vmatprep.subr.mxu0 0.0
        %1127 = vmatpush1.msra.mxu0 0.0
        %1128 = vmatprep.subr.mxu0 0.0
        %1129 = vmatpush1.msra.mxu0 0.0
        %1130 = vmatprep.subr.mxu0 0.0
        %1131 = vmatpush1.msra.mxu0 0.0
        %1132 = vmatprep.subr.mxu0 0.0
        %1133 = vmatpush1.msra.mxu0 0.0
        %1134 = vmatprep.subr.mxu0 0.0
        %1135 = vmatpush1.msra.mxu0 0.0
        %1136 = vmatprep.subr.mxu0 0.0
        %1137 = vmatpush1.msra.mxu0 0.0
        %1138 = vmatprep.subr.mxu0 0.0
        %1139 = vmatpush1.msra.mxu0 0.0
        %1140 = vmatprep.subr.mxu0 0.0
        %1141 = vmatpush1.msra.mxu0 0.0
        %1142 = vmatprep.subr.mxu0 0.0
        %1143 = vmatpush1.msra.mxu0 0.0
        %1144 = vmatprep.subr.mxu0 0.0
        %1145 = vmatpush1.msra.mxu0 0.0
        %1146 = vmatprep.subr.mxu0 0.0
        %1147 = vmatpush1.msra.mxu0 0.0
        %1148 = vmatprep.subr.mxu0 0.0
        %1149 = vmatpush1.msra.mxu0 0.0
        %1150 = vmatprep.mubr.f32.mxu0 0.0
        %1151 = vmatmul.mubr.f32.gmra.mrb[0].mxu0 %v894
        %v1152 = vpop.f32.mrb[0].mxu0
        %v1153 = vadd.f32 0.0, %v1152
        %v1154 = vpop.f32.mrb[0].mxu0
        %1155 = vmatprep.mubr.f32.mxu0 0.0
        %1156 = vmatmul.mubr.f32.gmra.mrb[0].mxu0 %v897
        %v1157 = vpop.f32.mrb[0].mxu0
        %v1158 = vadd.f32 0.0, %v1157
        %v1159 = vpop.f32.mrb[0].mxu0
        %1160 = vmatprep.mubr.f32.mxu0 0.0
        %1161 = vmatmul.mubr.f32.gmra.mrb[0].mxu0 %v900
        %v1162 = vpop.f32.mrb[0].mxu0
        %v1163 = vadd.f32 0.0, %v1162
        %v1164 = vpop.f32.mrb[0].mxu0
        %1165 = vdwg.mxu0
        %v1167 = vrot.slane %v1063, 1
        %v1169 = vadd.f32 %v973, %v1167
        %v1171 = vrot.slane %v1153, 2
        %v1173 = vadd.f32 %v1169, %v1171
        %v1175 = vrot.slane %v1158, 2
        %v1177 = vadd.f32 %v1169, %v1175
        %v1179 = vrot.slane %v1068, 1
        %v1181 = vadd.f32 %v978, %v1179
        %v1182 = vadd.f32 %v1181, %v1175
        %v1184 = vrot.slane %v1163, 2
        %v1186 = vadd.f32 %v1181, %v1184
        %v1188 = vrot.slane %v1173, 1
        %v1190 = vrot.slane %v1173, 2
        %v1193 = vrot.slane %v1177, 3
        %v1196 = vrot.slane %v1182, 4
        %v1198 = vrot.slane %v1182, 5
        %v1200 = vrot.slane %v1182, 6
        %v1203 = vrot.slane %v1186, 7
        %v1205 = vsel %vm858, %v1173, %v1188
        %vm1206 = vcmask 1041408
        %v1207 = vsel %vm1206, %v1205, %v1190
        %vm1208 = vcmask 1042432
        %v1209 = vsel %vm1208, %v1207, %v1193
        %vm1210 = vcmask 1043456
        %v1211 = vsel %vm1210, %v1209, %v1196
        %vm1212 = vcmask 1044480
        %v1213 = vsel %vm1212, %v1211, %v1198
        %v1214 = vsel %vm902, %v1213, %v1200
        %vm1215 = vcmask 1046528
        %v1216 = vsel %vm1215, %v1214, %v1203
        %v1217 = vld [vmem:[#allocation4] sm:$0x3]
        %v1218 = vlaneseq
        %v1219 = vshrl.u32 %v1218, 7
        %v1220 = vsub.s32 0, %v1219
        %v1221 = vrot.slane %v1217, %v1220
        %v1222 = vmul.f32 %v1216, %v1221
        %v1223 = vlaneseq
        %v1224 = vshrl.u32 %v1223, 7
        %v1225 = vsub.s32 1, %v1224
        %v1226 = vrot.slane %v1217, %v1225
        %v1227 = vadd.f32 %v1222, %v1226
        %vm1228 = vcmp.ge.f32.partialorder %v1227, 0.0
        %v1229 = vmul.f32 %v1227, 0.1
        %v1230 = vsel %vm1228, %v1227, %v1229
        %v1232 = vrot.slane %v1230, 7
        %v1234 = vsel %vm858, -inf, %v1232
        %v1235 = vsel %vm858, %v1232, -inf
        %1238 = vrot.lane.b32.xlu0 %v1234, 8
        %v1239 = vpop.permute.xlu0 %1238
        %1240 = vrot.lane.b32.xlu0 %v1235, 8
        %v1241 = vpop.permute.xlu0 %1240
        %vm1244 = vcmask 64512
        %v1245 = vsel %vm1244, -inf, %v1239
        %v1246 = vsel %vm1244, -inf, %v1241
        %vm1247 = vcmask 588800
        %v1248 = vsel %vm1247, %v1245, -inf
        %v1249 = vsel %vm1247, %v1246, -inf
        %v1251 = vrot.slane %v1248, 1
        %v1253 = vmax.f32 %v1248, %v1251
        %v1254 = vrot.slane %v1248, 2
        %v1256 = vmax.f32 %v1253, %v1254
        %1258 = vrot.lane.b32.xlu0 %v1256, 120
        %v1259 = vpop.permute.xlu0 %1258
        %v1261 = vmax.f32 %v1256, %v1259
        %1262 = vrot.lane.b32.xlu0 %v1256, 112
        %v1263 = vpop.permute.xlu0 %1262
        %v1265 = vmax.f32 %v1261, %v1263
        %1267 = vrot.lane.b32.xlu0 %v1265, 120
        %v1268 = vpop.permute.xlu0 %1267
        %1270 = vrot.lane.b32.xlu0 %v1265, 112
        %v1271 = vpop.permute.xlu0 %1270
        %1273 = vrot.lane.b32.xlu0 %v1265, 104
        %v1274 = vpop.permute.xlu0 %1273
        %v1276 = vsel %vm1244, %v1265, %v1268
        %vm1277 = vcmask 130048
        %v1278 = vsel %vm1277, %v1276, %v1271
        %vm1279 = vcmask 195584
        %v1280 = vsel %vm1279, %v1278, %v1274
        %v1282 = vrot.slane %v1249, 2
        %v1284 = vmax.f32 %v1253, %v1282
        %1286 = vrot.lane.b32.xlu0 %v1284, 120
        %v1287 = vpop.permute.xlu0 %1286
        %v1289 = vmax.f32 %v1284, %v1287
        %1290 = vrot.lane.b32.xlu0 %v1284, 112
        %v1291 = vpop.permute.xlu0 %1290
        %v1293 = vmax.f32 %v1289, %v1291
        %1295 = vrot.lane.b32.xlu0 %v1293, 120
        %v1296 = vpop.permute.xlu0 %1295
        %1298 = vrot.lane.b32.xlu0 %v1293, 112
        %v1299 = vpop.permute.xlu0 %1298
        %1301 = vrot.lane.b32.xlu0 %v1293, 104
        %v1302 = vpop.permute.xlu0 %1301
        %v1304 = vsel %vm1244, %v1293, %v1296
        %v1305 = vsel %vm1277, %v1304, %v1299
        %v1306 = vsel %vm1279, %v1305, %v1302
        %v1308 = vrot.slane %v1280, 1
        %v1310 = vrot.slane %v1280, 2
        %v1313 = vrot.slane %v1306, 3
        %v1315 = vsel %vm858, %v1280, %v1308
        %v1316 = vsel %vm1206, %v1315, %v1310
        %v1317 = vsel %vm1208, %v1316, %v1313
        %v1319 = vrot.slane %v1317, 7
        %v1321 = vsel %vm858, 0.0, %v1319
        %v1322 = vsel %vm1212, %v1321, 0.0
        %1324 = vrot.lane.b32.xlu0 %v1322, 8
        %v1325 = vpop.permute.xlu0 %1324
        %v1327 = vsel %vm1244, 0.0, %v1325
        %vm1328 = vcmask 326656
        %v1329 = vsel %vm1328, %v1327, 0.0
        %v1330 = vld [vmem:[#allocation6] sm:$0xff]
        %v1331 = vld [vmem:[#allocation6 + $0x8] sm:$0xff]
        %v1332 = vld [vmem:[#allocation6 + $0x10] sm:$0xff]
        %v1333 = vld [vmem:[#allocation6 + $0x18] sm:$0xff]
        %v1334 = vld [vmem:[#allocation6 + $0x20] sm:$0xff]
        %v1335 = vld [vmem:[#allocation6 + $0x28] sm:$0xff]
        %s1336 = scalar_lea.vmem [#allocation6], 48
        %v1337 = vld [vmem:[%s1336] sm:$0xff]
        %v1338 = vld [vmem:[%s1336 + $0x8] sm:$0xff]
        %v1339 = vld [vmem:[%s1336 + $0x10] sm:$0xff]
        %v1340 = vld [vmem:[%s1336 + $0x18] sm:$0xff]
        %v1341 = vld [vmem:[%s1336 + $0x20] sm:$0xff]
        %v1342 = vld [vmem:[%s1336 + $0x28] sm:$0xff]
        %v1344 = vrot.slane %v1329, 1
        %vm1345 = vcmask 392192
        %v1346 = vsel %vm1345, %v1344, 0
        %1348 = vmatprep.subr.mxu0 0.0
        %1349 = vmatpush1.msra.mxu0 %v1337
        %1350 = vmatprep.subr.mxu0 0.0
        %1351 = vmatpush1.msra.mxu0 %v1338
        %1352 = vmatprep.subr.mxu0 0.0
        %1353 = vmatpush1.msra.mxu0 %v1339
        %1354 = vmatprep.subr.mxu0 0.0
        %1355 = vmatpush1.msra.mxu0 %v1340
        %1356 = vmatprep.subr.mxu0 0.0
        %1357 = vmatpush1.msra.mxu0 %v1341
        %1358 = vmatprep.subr.mxu0 0.0
        %1359 = vmatpush1.msra.mxu0 %v1342
        %1360 = vmatprep.subr.mxu0 0.0
        %1361 = vmatpush1.msra.mxu0 0.0
        %1362 = vmatprep.subr.mxu0 0.0
        %1363 = vmatpush1.msra.mxu0 0.0
        %1364 = vmatprep.subr.mxu0 0.0
        %1365 = vmatpush1.msra.mxu0 0.0
        %1366 = vmatprep.subr.mxu0 0.0
        %1367 = vmatpush1.msra.mxu0 0.0
        %1368 = vmatprep.subr.mxu0 0.0
        %1369 = vmatpush1.msra.mxu0 0.0
        %1370 = vmatprep.subr.mxu0 0.0
        %1371 = vmatpush1.msra.mxu0 0.0
        %1372 = vmatprep.subr.mxu0 0.0
        %1373 = vmatpush1.msra.mxu0 0.0
        %1374 = vmatprep.subr.mxu0 0.0
        %1375 = vmatpush1.msra.mxu0 0.0
        %1376 = vmatprep.subr.mxu0 0.0
        %1377 = vmatpush1.msra.mxu0 0.0
        %1378 = vmatprep.subr.mxu0 0.0
        %1379 = vmatpush1.msra.mxu0 0.0
        %1380 = vmatprep.subr.mxu0 0.0
        %1381 = vmatpush1.msra.mxu0 0.0
        %1382 = vmatprep.subr.mxu0 0.0
        %1383 = vmatpush1.msra.mxu0 0.0
        %1384 = vmatprep.subr.mxu0 0.0
        %1385 = vmatpush1.msra.mxu0 0.0
        %1386 = vmatprep.subr.mxu0 0.0
        %1387 = vmatpush1.msra.mxu0 0.0
        %1388 = vmatprep.subr.mxu0 0.0
        %1389 = vmatpush1.msra.mxu0 0.0
        %1390 = vmatprep.subr.mxu0 0.0
        %1391 = vmatpush1.msra.mxu0 0.0
        %1392 = vmatprep.subr.mxu0 0.0
        %1393 = vmatpush1.msra.mxu0 0.0
        %1394 = vmatprep.subr.mxu0 0.0
        %1395 = vmatpush1.msra.mxu0 0.0
        %1396 = vmatprep.subr.mxu0 0.0
        %1397 = vmatpush1.msra.mxu0 0.0
        %1398 = vmatprep.subr.mxu0 0.0
        %1399 = vmatpush1.msra.mxu0 0.0
        %1400 = vmatprep.subr.mxu0 0.0
        %1401 = vmatpush1.msra.mxu0 0.0
        %1402 = vmatprep.subr.mxu0 0.0
        %1403 = vmatpush1.msra.mxu0 0.0
        %1404 = vmatprep.subr.mxu0 0.0
        %1405 = vmatpush1.msra.mxu0 0.0
        %1406 = vmatprep.subr.mxu0 0.0
        %1407 = vmatpush1.msra.mxu0 0.0
        %1408 = vmatprep.subr.mxu0 0.0
        %1409 = vmatpush1.msra.mxu0 0.0
        %1410 = vmatprep.subr.mxu0 0.0
        %1411 = vmatpush1.msra.mxu0 0.0
        %1412 = vmatprep.mubr.f32.mxu0 0.0
        %1413 = vmatmul.mubr.f32.gmra.mrb[0].mxu0 %v1346
        %v1414 = vpop.f32.mrb[0].mxu0
        %v1415 = vadd.f32 0.0, %v1414
        %v1416 = vpop.f32.mrb[0].mxu0
        %1417 = vdwg.mxu0
        %v1418 = vsel %vm1345, %v1329, 0
        %1420 = vmatprep.subr.mxu0 0.0
        %1421 = vmatpush1.msra.mxu0 %v1330
        %1422 = vmatprep.subr.mxu0 0.0
        %1423 = vmatpush1.msra.mxu0 %v1331
        %1424 = vmatprep.subr.mxu0 0.0
        %1425 = vmatpush1.msra.mxu0 %v1332
        %1426 = vmatprep.subr.mxu0 0.0
        %1427 = vmatpush1.msra.mxu0 %v1333
        %1428 = vmatprep.subr.mxu0 0.0
        %1429 = vmatpush1.msra.mxu0 %v1334
        %1430 = vmatprep.subr.mxu0 0.0
        %1431 = vmatpush1.msra.mxu0 %v1335
        %1432 = vmatprep.subr.mxu0 0.0
        %1433 = vmatpush1.msra.mxu0 0.0
        %1434 = vmatprep.subr.mxu0 0.0
        %1435 = vmatpush1.msra.mxu0 0.0
        %1436 = vmatprep.subr.mxu0 0.0
        %1437 = vmatpush1.msra.mxu0 0.0
        %1438 = vmatprep.subr.mxu0 0.0
        %1439 = vmatpush1.msra.mxu0 0.0
        %1440 = vmatprep.subr.mxu0 0.0
        %1441 = vmatpush1.msra.mxu0 0.0
        %1442 = vmatprep.subr.mxu0 0.0
        %1443 = vmatpush1.msra.mxu0 0.0
        %1444 = vmatprep.subr.mxu0 0.0
        %1445 = vmatpush1.msra.mxu0 0.0
        %1446 = vmatprep.subr.mxu0 0.0
        %1447 = vmatpush1.msra.mxu0 0.0
        %1448 = vmatprep.subr.mxu0 0.0
        %1449 = vmatpush1.msra.mxu0 0.0
        %1450 = vmatprep.subr.mxu0 0.0
        %1451 = vmatpush1.msra.mxu0 0.0
        %1452 = vmatprep.subr.mxu0 0.0
        %1453 = vmatpush1.msra.mxu0 0.0
        %1454 = vmatprep.subr.mxu0 0.0
        %1455 = vmatpush1.msra.mxu0 0.0
        %1456 = vmatprep.subr.mxu0 0.0
        %1457 = vmatpush1.msra.mxu0 0.0
        %1458 = vmatprep.subr.mxu0 0.0
        %1459 = vmatpush1.msra.mxu0 0.0
        %1460 = vmatprep.subr.mxu0 0.0
        %1461 = vmatpush1.msra.mxu0 0.0
        %1462 = vmatprep.subr.mxu0 0.0
        %1463 = vmatpush1.msra.mxu0 0.0
        %1464 = vmatprep.subr.mxu0 0.0
        %1465 = vmatpush1.msra.mxu0 0.0
        %1466 = vmatprep.subr.mxu0 0.0
        %1467 = vmatpush1.msra.mxu0 0.0
        %1468 = vmatprep.subr.mxu0 0.0
        %1469 = vmatpush1.msra.mxu0 0.0
        %1470 = vmatprep.subr.mxu0 0.0
        %1471 = vmatpush1.msra.mxu0 0.0
        %1472 = vmatprep.subr.mxu0 0.0
        %1473 = vmatpush1.msra.mxu0 0.0
        %1474 = vmatprep.subr.mxu0 0.0
        %1475 = vmatpush1.msra.mxu0 0.0
        %1476 = vmatprep.subr.mxu0 0.0
        %1477 = vmatpush1.msra.mxu0 0.0
        %1478 = vmatprep.subr.mxu0 0.0
        %1479 = vmatpush1.msra.mxu0 0.0
        %1480 = vmatprep.subr.mxu0 0.0
        %1481 = vmatpush1.msra.mxu0 0.0
        %1482 = vmatprep.subr.mxu0 0.0
        %1483 = vmatpush1.msra.mxu0 0.0
        %1484 = vmatprep.mubr.f32.mxu0 0.0
        %1485 = vmatmul.mubr.f32.gmra.mrb[0].mxu0 %v1418
        %v1486 = vpop.f32.mrb[0].mxu0
        %v1487 = vadd.f32 %v1415, %v1486
        %v1488 = vpop.f32.mrb[0].mxu0
        %1489 = vdwg.mxu0
        %s1490 = scalar_lea.vmem [#allocation6], 96
        %v1491 = vld [vmem:[%s1490] sm:$0xff]
        %v1492 = vld [vmem:[%s1490 + $0x8] sm:$0xff]
        %v1493 = vld [vmem:[%s1490 + $0x10] sm:$0xff]
        %v1494 = vld [vmem:[%s1490 + $0x18] sm:$0xff]
        %v1495 = vld [vmem:[%s1490 + $0x20] sm:$0xff]
        %v1496 = vld [vmem:[%s1490 + $0x28] sm:$0xff]
        %v1497 = vrot.slane %v1329, 2
        %v1498 = vsel %vm1345, %v1497, 0
        %1500 = vmatprep.subr.mxu0 0.0
        %1501 = vmatpush1.msra.mxu0 %v1491
        %1502 = vmatprep.subr.mxu0 0.0
        %1503 = vmatpush1.msra.mxu0 %v1492
        %1504 = vmatprep.subr.mxu0 0.0
        %1505 = vmatpush1.msra.mxu0 %v1493
        %1506 = vmatprep.subr.mxu0 0.0
        %1507 = vmatpush1.msra.mxu0 %v1494
        %1508 = vmatprep.subr.mxu0 0.0
        %1509 = vmatpush1.msra.mxu0 %v1495
        %1510 = vmatprep.subr.mxu0 0.0
        %1511 = vmatpush1.msra.mxu0 %v1496
        %1512 = vmatprep.subr.mxu0 0.0
        %1513 = vmatpush1.msra.mxu0 0.0
        %1514 = vmatprep.subr.mxu0 0.0
        %1515 = vmatpush1.msra.mxu0 0.0
        %1516 = vmatprep.subr.mxu0 0.0
        %1517 = vmatpush1.msra.mxu0 0.0
        %1518 = vmatprep.subr.mxu0 0.0
        %1519 = vmatpush1.msra.mxu0 0.0
        %1520 = vmatprep.subr.mxu0 0.0
        %1521 = vmatpush1.msra.mxu0 0.0
        %1522 = vmatprep.subr.mxu0 0.0
        %1523 = vmatpush1.msra.mxu0 0.0
        %1524 = vmatprep.subr.mxu0 0.0
        %1525 = vmatpush1.msra.mxu0 0.0
        %1526 = vmatprep.subr.mxu0 0.0
        %1527 = vmatpush1.msra.mxu0 0.0
        %1528 = vmatprep.subr.mxu0 0.0
        %1529 = vmatpush1.msra.mxu0 0.0
        %1530 = vmatprep.subr.mxu0 0.0
        %1531 = vmatpush1.msra.mxu0 0.0
        %1532 = vmatprep.subr.mxu0 0.0
        %1533 = vmatpush1.msra.mxu0 0.0
        %1534 = vmatprep.subr.mxu0 0.0
        %1535 = vmatpush1.msra.mxu0 0.0
        %1536 = vmatprep.subr.mxu0 0.0
        %1537 = vmatpush1.msra.mxu0 0.0
        %1538 = vmatprep.subr.mxu0 0.0
        %1539 = vmatpush1.msra.mxu0 0.0
        %1540 = vmatprep.subr.mxu0 0.0
        %1541 = vmatpush1.msra.mxu0 0.0
        %1542 = vmatprep.subr.mxu0 0.0
        %1543 = vmatpush1.msra.mxu0 0.0
        %1544 = vmatprep.subr.mxu0 0.0
        %1545 = vmatpush1.msra.mxu0 0.0
        %1546 = vmatprep.subr.mxu0 0.0
        %1547 = vmatpush1.msra.mxu0 0.0
        %1548 = vmatprep.subr.mxu0 0.0
        %1549 = vmatpush1.msra.mxu0 0.0
        %1550 = vmatprep.subr.mxu0 0.0
        %1551 = vmatpush1.msra.mxu0 0.0
        %1552 = vmatprep.subr.mxu0 0.0
        %1553 = vmatpush1.msra.mxu0 0.0
        %1554 = vmatprep.subr.mxu0 0.0
        %1555 = vmatpush1.msra.mxu0 0.0
        %1556 = vmatprep.subr.mxu0 0.0
        %1557 = vmatpush1.msra.mxu0 0.0
        %1558 = vmatprep.subr.mxu0 0.0
        %1559 = vmatpush1.msra.mxu0 0.0
        %1560 = vmatprep.subr.mxu0 0.0
        %1561 = vmatpush1.msra.mxu0 0.0
        %1562 = vmatprep.subr.mxu0 0.0
        %1563 = vmatpush1.msra.mxu0 0.0
        %1564 = vmatprep.mubr.f32.mxu0 0.0
        %1565 = vmatmul.mubr.f32.gmra.mrb[0].mxu0 %v1498
        %v1566 = vpop.f32.mrb[0].mxu0
        %v1567 = vadd.f32 0.0, %v1566
        %v1568 = vpop.f32.mrb[0].mxu0
        %1569 = vdwg.mxu0
        %v1570 = vadd.f32 %v1487, %v1567
        %v1571 = vld [vmem:[#allocation7] sm:$0x3]
        %v1572 = vlaneseq
        %v1573 = vshrl.u32 %v1572, 7
        %v1574 = vsub.s32 0, %v1573
        %v1575 = vrot.slane %v1571, %v1574
        %v1576 = vmul.f32 %v1570, %v1575
        %v1577 = vlaneseq
        %v1578 = vshrl.u32 %v1577, 7
        %v1579 = vsub.s32 1, %v1578
        %v1580 = vrot.slane %v1571, %v1579
        %v1581 = vadd.f32 %v1576, %v1580
        %vm1582 = vcmp.ge.f32.partialorder %v1581, 0.0
        %v1583 = vmul.f32 %v1581, 0.1
        %v1584 = vsel %vm1582, %v1581, %v1583
        %v1586 = vrot.slane %v1584, 7
        %v1588 = vsel %vm858, 0.0, %v1586
        %v1589 = vsel %vm1212, %v1588, 0.0
        %1591 = vrot.lane.b32.xlu0 %v1589, 8
        %v1592 = vpop.permute.xlu0 %1591
        %v1594 = vsel %vm1244, 0.0, %v1592
        %v1595 = vsel %vm1328, %v1594, 0.0
        %v1596 = vld [vmem:[#allocation9] sm:$0xff]
        %v1597 = vld [vmem:[#allocation9 + $0x8] sm:$0xff]
        %v1598 = vld [vmem:[#allocation9 + $0x10] sm:$0xff]
        %v1599 = vld [vmem:[#allocation9 + $0x18] sm:$0xff]
        %v1600 = vld [vmem:[#allocation9 + $0x20] sm:$0xff]
        %v1601 = vld [vmem:[#allocation9 + $0x28] sm:$0xff]
        %s1602 = scalar_lea.vmem [#allocation9], 48
        %v1603 = vld [vmem:[%s1602] sm:$0xff]
        %v1604 = vld [vmem:[%s1602 + $0x8] sm:$0xff]
        %v1605 = vld [vmem:[%s1602 + $0x10] sm:$0xff]
        %v1606 = vld [vmem:[%s1602 + $0x18] sm:$0xff]
        %v1607 = vld [vmem:[%s1602 + $0x20] sm:$0xff]
        %v1608 = vld [vmem:[%s1602 + $0x28] sm:$0xff]
        %v1610 = vrot.slane %v1595, 1
        %v1611 = vsel %vm1345, %v1610, 0
        %1613 = vmatprep.subr.mxu0 0.0
        %1614 = vmatpush1.msra.mxu0 %v1603
        %1615 = vmatprep.subr.mxu0 0.0
        %1616 = vmatpush1.msra.mxu0 %v1604
        %1617 = vmatprep.subr.mxu0 0.0
        %1618 = vmatpush1.msra.mxu0 %v1605
        %1619 = vmatprep.subr.mxu0 0.0
        %1620 = vmatpush1.msra.mxu0 %v1606
        %1621 = vmatprep.subr.mxu0 0.0
        %1622 = vmatpush1.msra.mxu0 %v1607
        %1623 = vmatprep.subr.mxu0 0.0
        %1624 = vmatpush1.msra.mxu0 %v1608
        %1625 = vmatprep.subr.mxu0 0.0
        %1626 = vmatpush1.msra.mxu0 0.0
        %1627 = vmatprep.subr.mxu0 0.0
        %1628 = vmatpush1.msra.mxu0 0.0
        %1629 = vmatprep.subr.mxu0 0.0
        %1630 = vmatpush1.msra.mxu0 0.0
        %1631 = vmatprep.subr.mxu0 0.0
        %1632 = vmatpush1.msra.mxu0 0.0
        %1633 = vmatprep.subr.mxu0 0.0
        %1634 = vmatpush1.msra.mxu0 0.0
        %1635 = vmatprep.subr.mxu0 0.0
        %1636 = vmatpush1.msra.mxu0 0.0
        %1637 = vmatprep.subr.mxu0 0.0
        %1638 = vmatpush1.msra.mxu0 0.0
        %1639 = vmatprep.subr.mxu0 0.0
        %1640 = vmatpush1.msra.mxu0 0.0
        %1641 = vmatprep.subr.mxu0 0.0
        %1642 = vmatpush1.msra.mxu0 0.0
        %1643 = vmatprep.subr.mxu0 0.0
        %1644 = vmatpush1.msra.mxu0 0.0
        %1645 = vmatprep.subr.mxu0 0.0
        %1646 = vmatpush1.msra.mxu0 0.0
        %1647 = vmatprep.subr.mxu0 0.0
        %1648 = vmatpush1.msra.mxu0 0.0
        %1649 = vmatprep.subr.mxu0 0.0
        %1650 = vmatpush1.msra.mxu0 0.0
        %1651 = vmatprep.subr.mxu0 0.0
        %1652 = vmatpush1.msra.mxu0 0.0
        %1653 = vmatprep.subr.mxu0 0.0
        %1654 = vmatpush1.msra.mxu0 0.0
        %1655 = vmatprep.subr.mxu0 0.0
        %1656 = vmatpush1.msra.mxu0 0.0
        %1657 = vmatprep.subr.mxu0 0.0
        %1658 = vmatpush1.msra.mxu0 0.0
        %1659 = vmatprep.subr.mxu0 0.0
        %1660 = vmatpush1.msra.mxu0 0.0
        %1661 = vmatprep.subr.mxu0 0.0
        %1662 = vmatpush1.msra.mxu0 0.0
        %1663 = vmatprep.subr.mxu0 0.0
        %1664 = vmatpush1.msra.mxu0 0.0
        %1665 = vmatprep.subr.mxu0 0.0
        %1666 = vmatpush1.msra.mxu0 0.0
        %1667 = vmatprep.subr.mxu0 0.0
        %1668 = vmatpush1.msra.mxu0 0.0
        %1669 = vmatprep.subr.mxu0 0.0
        %1670 = vmatpush1.msra.mxu0 0.0
        %1671 = vmatprep.subr.mxu0 0.0
        %1672 = vmatpush1.msra.mxu0 0.0
        %1673 = vmatprep.subr.mxu0 0.0
        %1674 = vmatpush1.msra.mxu0 0.0
        %1675 = vmatprep.subr.mxu0 0.0
        %1676 = vmatpush1.msra.mxu0 0.0
        %1677 = vmatprep.mubr.f32.mxu0 0.0
        %1678 = vmatmul.mubr.f32.gmra.mrb[0].mxu0 %v1611
        %v1679 = vpop.f32.mrb[0].mxu0
        %v1680 = vadd.f32 0.0, %v1679
        %v1681 = vpop.f32.mrb[0].mxu0
        %1682 = vdwg.mxu0
        %v1683 = vsel %vm1345, %v1595, 0
        %1685 = vmatprep.subr.mxu0 0.0
        %1686 = vmatpush1.msra.mxu0 %v1596
        %1687 = vmatprep.subr.mxu0 0.0
        %1688 = vmatpush1.msra.mxu0 %v1597
        %1689 = vmatprep.subr.mxu0 0.0
        %1690 = vmatpush1.msra.mxu0 %v1598
        %1691 = vmatprep.subr.mxu0 0.0
        %1692 = vmatpush1.msra.mxu0 %v1599
        %1693 = vmatprep.subr.mxu0 0.0
        %1694 = vmatpush1.msra.mxu0 %v1600
        %1695 = vmatprep.subr.mxu0 0.0
        %1696 = vmatpush1.msra.mxu0 %v1601
        %1697 = vmatprep.subr.mxu0 0.0
        %1698 = vmatpush1.msra.mxu0 0.0
        %1699 = vmatprep.subr.mxu0 0.0
        %1700 = vmatpush1.msra.mxu0 0.0
        %1701 = vmatprep.subr.mxu0 0.0
        %1702 = vmatpush1.msra.mxu0 0.0
        %1703 = vmatprep.subr.mxu0 0.0
        %1704 = vmatpush1.msra.mxu0 0.0
        %1705 = vmatprep.subr.mxu0 0.0
        %1706 = vmatpush1.msra.mxu0 0.0
        %1707 = vmatprep.subr.mxu0 0.0
        %1708 = vmatpush1.msra.mxu0 0.0
        %1709 = vmatprep.subr.mxu0 0.0
        %1710 = vmatpush1.msra.mxu0 0.0
        %1711 = vmatprep.subr.mxu0 0.0
        %1712 = vmatpush1.msra.mxu0 0.0
        %1713 = vmatprep.subr.mxu0 0.0
        %1714 = vmatpush1.msra.mxu0 0.0
        %1715 = vmatprep.subr.mxu0 0.0
        %1716 = vmatpush1.msra.mxu0 0.0
        %1717 = vmatprep.subr.mxu0 0.0
        %1718 = vmatpush1.msra.mxu0 0.0
        %1719 = vmatprep.subr.mxu0 0.0
        %1720 = vmatpush1.msra.mxu0 0.0
        %1721 = vmatprep.subr.mxu0 0.0
        %1722 = vmatpush1.msra.mxu0 0.0
        %1723 = vmatprep.subr.mxu0 0.0
        %1724 = vmatpush1.msra.mxu0 0.0
        %1725 = vmatprep.subr.mxu0 0.0
        %1726 = vmatpush1.msra.mxu0 0.0
        %1727 = vmatprep.subr.mxu0 0.0
        %1728 = vmatpush1.msra.mxu0 0.0
        %1729 = vmatprep.subr.mxu0 0.0
        %1730 = vmatpush1.msra.mxu0 0.0
        %1731 = vmatprep.subr.mxu0 0.0
        %1732 = vmatpush1.msra.mxu0 0.0
        %1733 = vmatprep.subr.mxu0 0.0
        %1734 = vmatpush1.msra.mxu0 0.0
        %1735 = vmatprep.subr.mxu0 0.0
        %1736 = vmatpush1.msra.mxu0 0.0
        %1737 = vmatprep.subr.mxu0 0.0
        %1738 = vmatpush1.msra.mxu0 0.0
        %1739 = vmatprep.subr.mxu0 0.0
        %1740 = vmatpush1.msra.mxu0 0.0
        %1741 = vmatprep.subr.mxu0 0.0
        %1742 = vmatpush1.msra.mxu0 0.0
        %1743 = vmatprep.subr.mxu0 0.0
        %1744 = vmatpush1.msra.mxu0 0.0
        %1745 = vmatprep.subr.mxu0 0.0
        %1746 = vmatpush1.msra.mxu0 0.0
        %1747 = vmatprep.subr.mxu0 0.0
        %1748 = vmatpush1.msra.mxu0 0.0
        %1749 = vmatprep.mubr.f32.mxu0 0.0
        %1750 = vmatmul.mubr.f32.gmra.mrb[0].mxu0 %v1683
        %v1751 = vpop.f32.mrb[0].mxu0
        %v1752 = vadd.f32 %v1680, %v1751
        %v1753 = vpop.f32.mrb[0].mxu0
        %1754 = vdwg.mxu0
        %s1755 = scalar_lea.vmem [#allocation9], 96
        %v1756 = vld [vmem:[%s1755] sm:$0xff]
        %v1757 = vld [vmem:[%s1755 + $0x8] sm:$0xff]
        %v1758 = vld [vmem:[%s1755 + $0x10] sm:$0xff]
        %v1759 = vld [vmem:[%s1755 + $0x18] sm:$0xff]
        %v1760 = vld [vmem:[%s1755 + $0x20] sm:$0xff]
        %v1761 = vld [vmem:[%s1755 + $0x28] sm:$0xff]
        %v1762 = vrot.slane %v1595, 2
        %v1763 = vsel %vm1345, %v1762, 0
        %1765 = vmatprep.subr.mxu0 0.0
        %1766 = vmatpush1.msra.mxu0 %v1756
        %1767 = vmatprep.subr.mxu0 0.0
        %1768 = vmatpush1.msra.mxu0 %v1757
        %1769 = vmatprep.subr.mxu0 0.0
        %1770 = vmatpush1.msra.mxu0 %v1758
        %1771 = vmatprep.subr.mxu0 0.0
        %1772 = vmatpush1.msra.mxu0 %v1759
        %1773 = vmatprep.subr.mxu0 0.0
        %1774 = vmatpush1.msra.mxu0 %v1760
        %1775 = vmatprep.subr.mxu0 0.0
        %1776 = vmatpush1.msra.mxu0 %v1761
        %1777 = vmatprep.subr.mxu0 0.0
        %1778 = vmatpush1.msra.mxu0 0.0
        %1779 = vmatprep.subr.mxu0 0.0
        %1780 = vmatpush1.msra.mxu0 0.0
        %1781 = vmatprep.subr.mxu0 0.0
        %1782 = vmatpush1.msra.mxu0 0.0
        %1783 = vmatprep.subr.mxu0 0.0
        %1784 = vmatpush1.msra.mxu0 0.0
        %1785 = vmatprep.subr.mxu0 0.0
        %1786 = vmatpush1.msra.mxu0 0.0
        %1787 = vmatprep.subr.mxu0 0.0
        %1788 = vmatpush1.msra.mxu0 0.0
        %1789 = vmatprep.subr.mxu0 0.0
        %1790 = vmatpush1.msra.mxu0 0.0
        %1791 = vmatprep.subr.mxu0 0.0
        %1792 = vmatpush1.msra.mxu0 0.0
        %1793 = vmatprep.subr.mxu0 0.0
        %1794 = vmatpush1.msra.mxu0 0.0
        %1795 = vmatprep.subr.mxu0 0.0
        %1796 = vmatpush1.msra.mxu0 0.0
        %1797 = vmatprep.subr.mxu0 0.0
        %1798 = vmatpush1.msra.mxu0 0.0
        %1799 = vmatprep.subr.mxu0 0.0
        %1800 = vmatpush1.msra.mxu0 0.0
        %1801 = vmatprep.subr.mxu0 0.0
        %1802 = vmatpush1.msra.mxu0 0.0
        %1803 = vmatprep.subr.mxu0 0.0
        %1804 = vmatpush1.msra.mxu0 0.0
        %1805 = vmatprep.subr.mxu0 0.0
        %1806 = vmatpush1.msra.mxu0 0.0
        %1807 = vmatprep.subr.mxu0 0.0
        %1808 = vmatpush1.msra.mxu0 0.0
        %1809 = vmatprep.subr.mxu0 0.0
        %1810 = vmatpush1.msra.mxu0 0.0
        %1811 = vmatprep.subr.mxu0 0.0
        %1812 = vmatpush1.msra.mxu0 0.0
        %1813 = vmatprep.subr.mxu0 0.0
        %1814 = vmatpush1.msra.mxu0 0.0
        %1815 = vmatprep.subr.mxu0 0.0
        %1816 = vmatpush1.msra.mxu0 0.0
        %1817 = vmatprep.subr.mxu0 0.0
        %1818 = vmatpush1.msra.mxu0 0.0
        %1819 = vmatprep.subr.mxu0 0.0
        %1820 = vmatpush1.msra.mxu0 0.0
        %1821 = vmatprep.subr.mxu0 0.0
        %1822 = vmatpush1.msra.mxu0 0.0
        %1823 = vmatprep.subr.mxu0 0.0
        %1824 = vmatpush1.msra.mxu0 0.0
        %1825 = vmatprep.subr.mxu0 0.0
        %1826 = vmatpush1.msra.mxu0 0.0
        %1827 = vmatprep.subr.mxu0 0.0
        %1828 = vmatpush1.msra.mxu0 0.0
        %1829 = vmatprep.mubr.f32.mxu0 0.0
        %1830 = vmatmul.mubr.f32.gmra.mrb[0].mxu0 %v1763
        %v1831 = vpop.f32.mrb[0].mxu0
        %v1832 = vadd.f32 0.0, %v1831
        %v1833 = vpop.f32.mrb[0].mxu0
        %1834 = vdwg.mxu0
        %v1835 = vadd.f32 %v1752, %v1832
        %v1836 = vld [vmem:[#allocation10] sm:$0x3]
        %v1837 = vlaneseq
        %v1838 = vshrl.u32 %v1837, 7
        %v1839 = vsub.s32 0, %v1838
        %v1840 = vrot.slane %v1836, %v1839
        %v1841 = vmul.f32 %v1835, %v1840
        %v1842 = vlaneseq
        %v1843 = vshrl.u32 %v1842, 7
        %v1844 = vsub.s32 1, %v1843
        %v1845 = vrot.slane %v1836, %v1844
        %v1846 = vadd.f32 %v1841, %v1845
        %vm1847 = vcmp.ge.f32.partialorder %v1846, 0.0
        %v1848 = vmul.f32 %v1846, 0.1
        %v1849 = vsel %vm1847, %v1846, %v1848
        %v1851 = vrot.slane %v1849, 7
        %v1853 = vsel %vm858, 0.0, %v1851
        %v1854 = vsel %vm1212, %v1853, 0.0
        %1856 = vrot.lane.b32.xlu0 %v1854, 4
        %v1857 = vpop.permute.xlu0 %1856
        %vm1859 = vcmask 31744
        %v1860 = vsel %vm1859, 0.0, %v1857
        %vm1861 = vcmask 162816
        %v1862 = vsel %vm1861, %v1860, 0.0
        %v1863 = vld [vmem:[%s7] sm:$0xff]
        %v1864 = vld [vmem:[%s7 + $0x8] sm:$0xff]
        %v1865 = vld [vmem:[%s7 + $0x10] sm:$0xff]
        %s1866 = scalar_lea.vmem %s7, 24
        %v1867 = vld [vmem:[%s1866] sm:$0xff]
        %v1868 = vld [vmem:[%s1866 + $0x8] sm:$0xff]
        %v1869 = vld [vmem:[%s1866 + $0x10] sm:$0xff]
        %v1871 = vrot.slane %v1862, 1
        %v1872 = vsel %vm1279, %v1871, 0
        %1874 = vmatprep.subr.mxu0 0.0
        %1875 = vmatpush1.msra.mxu0 %v1867
        %1876 = vmatprep.subr.mxu0 0.0
        %1877 = vmatpush1.msra.mxu0 %v1868
        %1878 = vmatprep.subr.mxu0 0.0
        %1879 = vmatpush1.msra.mxu0 %v1869
        %1880 = vmatprep.subr.mxu0 0.0
        %1881 = vmatpush1.msra.mxu0 0.0
        %1882 = vmatprep.subr.mxu0 0.0
        %1883 = vmatpush1.msra.mxu0 0.0
        %1884 = vmatprep.subr.mxu0 0.0
        %1885 = vmatpush1.msra.mxu0 0.0
        %1886 = vmatprep.subr.mxu0 0.0
        %1887 = vmatpush1.msra.mxu0 0.0
        %1888 = vmatprep.subr.mxu0 0.0
        %1889 = vmatpush1.msra.mxu0 0.0
        %1890 = vmatprep.subr.mxu0 0.0
        %1891 = vmatpush1.msra.mxu0 0.0
        %1892 = vmatprep.subr.mxu0 0.0
        %1893 = vmatpush1.msra.mxu0 0.0
        %1894 = vmatprep.subr.mxu0 0.0
        %1895 = vmatpush1.msra.mxu0 0.0
        %1896 = vmatprep.subr.mxu0 0.0
        %1897 = vmatpush1.msra.mxu0 0.0
        %1898 = vmatprep.subr.mxu0 0.0
        %1899 = vmatpush1.msra.mxu0 0.0
        %1900 = vmatprep.subr.mxu0 0.0
        %1901 = vmatpush1.msra.mxu0 0.0
        %1902 = vmatprep.subr.mxu0 0.0
        %1903 = vmatpush1.msra.mxu0 0.0
        %1904 = vmatprep.subr.mxu0 0.0
        %1905 = vmatpush1.msra.mxu0 0.0
        %1906 = vmatprep.subr.mxu0 0.0
        %1907 = vmatpush1.msra.mxu0 0.0
        %1908 = vmatprep.subr.mxu0 0.0
        %1909 = vmatpush1.msra.mxu0 0.0
        %1910 = vmatprep.subr.mxu0 0.0
        %1911 = vmatpush1.msra.mxu0 0.0
        %1912 = vmatprep.subr.mxu0 0.0
        %1913 = vmatpush1.msra.mxu0 0.0
        %1914 = vmatprep.subr.mxu0 0.0
        %1915 = vmatpush1.msra.mxu0 0.0
        %1916 = vmatprep.subr.mxu0 0.0
        %1917 = vmatpush1.msra.mxu0 0.0
        %1918 = vmatprep.subr.mxu0 0.0
        %1919 = vmatpush1.msra.mxu0 0.0
        %1920 = vmatprep.subr.mxu0 0.0
        %1921 = vmatpush1.msra.mxu0 0.0
        %1922 = vmatprep.subr.mxu0 0.0
        %1923 = vmatpush1.msra.mxu0 0.0
        %1924 = vmatprep.subr.mxu0 0.0
        %1925 = vmatpush1.msra.mxu0 0.0
        %1926 = vmatprep.subr.mxu0 0.0
        %1927 = vmatpush1.msra.mxu0 0.0
        %1928 = vmatprep.subr.mxu0 0.0
        %1929 = vmatpush1.msra.mxu0 0.0
        %1930 = vmatprep.subr.mxu0 0.0
        %1931 = vmatpush1.msra.mxu0 0.0
        %1932 = vmatprep.subr.mxu0 0.0
        %1933 = vmatpush1.msra.mxu0 0.0
        %1934 = vmatprep.subr.mxu0 0.0
        %1935 = vmatpush1.msra.mxu0 0.0
        %1936 = vmatprep.subr.mxu0 0.0
        %1937 = vmatpush1.msra.mxu0 0.0
        %1938 = vmatprep.mubr.f32.mxu0 0.0
        %1939 = vmatmul.mubr.f32.gmra.mrb[0].mxu0 %v1872
        %v1940 = vpop.f32.mrb[0].mxu0
        %v1941 = vadd.f32 0.0, %v1940
        %v1942 = vpop.f32.mrb[0].mxu0
        %1943 = vdwg.mxu0
        %v1944 = vsel %vm1279, %v1862, 0
        %1946 = vmatprep.subr.mxu0 0.0
        %1947 = vmatpush1.msra.mxu0 %v1863
        %1948 = vmatprep.subr.mxu0 0.0
        %1949 = vmatpush1.msra.mxu0 %v1864
        %1950 = vmatprep.subr.mxu0 0.0
        %1951 = vmatpush1.msra.mxu0 %v1865
        %1952 = vmatprep.subr.mxu0 0.0
        %1953 = vmatpush1.msra.mxu0 0.0
        %1954 = vmatprep.subr.mxu0 0.0
        %1955 = vmatpush1.msra.mxu0 0.0
        %1956 = vmatprep.subr.mxu0 0.0
        %1957 = vmatpush1.msra.mxu0 0.0
        %1958 = vmatprep.subr.mxu0 0.0
        %1959 = vmatpush1.msra.mxu0 0.0
        %1960 = vmatprep.subr.mxu0 0.0
        %1961 = vmatpush1.msra.mxu0 0.0
        %1962 = vmatprep.subr.mxu0 0.0
        %1963 = vmatpush1.msra.mxu0 0.0
        %1964 = vmatprep.subr.mxu0 0.0
        %1965 = vmatpush1.msra.mxu0 0.0
        %1966 = vmatprep.subr.mxu0 0.0
        %1967 = vmatpush1.msra.mxu0 0.0
        %1968 = vmatprep.subr.mxu0 0.0
        %1969 = vmatpush1.msra.mxu0 0.0
        %1970 = vmatprep.subr.mxu0 0.0
        %1971 = vmatpush1.msra.mxu0 0.0
        %1972 = vmatprep.subr.mxu0 0.0
        %1973 = vmatpush1.msra.mxu0 0.0
        %1974 = vmatprep.subr.mxu0 0.0
        %1975 = vmatpush1.msra.mxu0 0.0
        %1976 = vmatprep.subr.mxu0 0.0
        %1977 = vmatpush1.msra.mxu0 0.0
        %1978 = vmatprep.subr.mxu0 0.0
        %1979 = vmatpush1.msra.mxu0 0.0
        %1980 = vmatprep.subr.mxu0 0.0
        %1981 = vmatpush1.msra.mxu0 0.0
        %1982 = vmatprep.subr.mxu0 0.0
        %1983 = vmatpush1.msra.mxu0 0.0
        %1984 = vmatprep.subr.mxu0 0.0
        %1985 = vmatpush1.msra.mxu0 0.0
        %1986 = vmatprep.subr.mxu0 0.0
        %1987 = vmatpush1.msra.mxu0 0.0
        %1988 = vmatprep.subr.mxu0 0.0
        %1989 = vmatpush1.msra.mxu0 0.0
        %1990 = vmatprep.subr.mxu0 0.0
        %1991 = vmatpush1.msra.mxu0 0.0
        %1992 = vmatprep.subr.mxu0 0.0
        %1993 = vmatpush1.msra.mxu0 0.0
        %1994 = vmatprep.subr.mxu0 0.0
        %1995 = vmatpush1.msra.mxu0 0.0
        %1996 = vmatprep.subr.mxu0 0.0
        %1997 = vmatpush1.msra.mxu0 0.0
        %1998 = vmatprep.subr.mxu0 0.0
        %1999 = vmatpush1.msra.mxu0 0.0
        %2000 = vmatprep.subr.mxu0 0.0
        %2001 = vmatpush1.msra.mxu0 0.0
        %2002 = vmatprep.subr.mxu0 0.0
        %2003 = vmatpush1.msra.mxu0 0.0
        %2004 = vmatprep.subr.mxu0 0.0
        %2005 = vmatpush1.msra.mxu0 0.0
        %2006 = vmatprep.subr.mxu0 0.0
        %2007 = vmatpush1.msra.mxu0 0.0
        %2008 = vmatprep.subr.mxu0 0.0
        %2009 = vmatpush1.msra.mxu0 0.0
        %2010 = vmatprep.mubr.f32.mxu0 0.0
        %2011 = vmatmul.mubr.f32.gmra.mrb[0].mxu0 %v1944
        %v2012 = vpop.f32.mrb[0].mxu0
        %v2013 = vadd.f32 %v1941, %v2012
        %v2014 = vpop.f32.mrb[0].mxu0
        %2015 = vdwg.mxu0
        %s2016 = scalar_lea.vmem %s7, 48
        %v2017 = vld [vmem:[%s2016] sm:$0xff]
        %v2018 = vld [vmem:[%s2016 + $0x8] sm:$0xff]
        %v2019 = vld [vmem:[%s2016 + $0x10] sm:$0xff]
        %v2020 = vrot.slane %v1862, 2
        %v2021 = vsel %vm1279, %v2020, 0
        %2023 = vmatprep.subr.mxu0 0.0
        %2024 = vmatpush1.msra.mxu0 %v2017
        %2025 = vmatprep.subr.mxu0 0.0
        %2026 = vmatpush1.msra.mxu0 %v2018
        %2027 = vmatprep.subr.mxu0 0.0
        %2028 = vmatpush1.msra.mxu0 %v2019
        %2029 = vmatprep.subr.mxu0 0.0
        %2030 = vmatpush1.msra.mxu0 0.0
        %2031 = vmatprep.subr.mxu0 0.0
        %2032 = vmatpush1.msra.mxu0 0.0
        %2033 = vmatprep.subr.mxu0 0.0
        %2034 = vmatpush1.msra.mxu0 0.0
        %2035 = vmatprep.subr.mxu0 0.0
        %2036 = vmatpush1.msra.mxu0 0.0
        %2037 = vmatprep.subr.mxu0 0.0
        %2038 = vmatpush1.msra.mxu0 0.0
        %2039 = vmatprep.subr.mxu0 0.0
        %2040 = vmatpush1.msra.mxu0 0.0
        %2041 = vmatprep.subr.mxu0 0.0
        %2042 = vmatpush1.msra.mxu0 0.0
        %2043 = vmatprep.subr.mxu0 0.0
        %2044 = vmatpush1.msra.mxu0 0.0
        %2045 = vmatprep.subr.mxu0 0.0
        %2046 = vmatpush1.msra.mxu0 0.0
        %2047 = vmatprep.subr.mxu0 0.0
        %2048 = vmatpush1.msra.mxu0 0.0
        %2049 = vmatprep.subr.mxu0 0.0
        %2050 = vmatpush1.msra.mxu0 0.0
        %2051 = vmatprep.subr.mxu0 0.0
        %2052 = vmatpush1.msra.mxu0 0.0
        %2053 = vmatprep.subr.mxu0 0.0
        %2054 = vmatpush1.msra.mxu0 0.0
        %2055 = vmatprep.subr.mxu0 0.0
        %2056 = vmatpush1.msra.mxu0 0.0
        %2057 = vmatprep.subr.mxu0 0.0
        %2058 = vmatpush1.msra.mxu0 0.0
        %2059 = vmatprep.subr.mxu0 0.0
        %2060 = vmatpush1.msra.mxu0 0.0
        %2061 = vmatprep.subr.mxu0 0.0
        %2062 = vmatpush1.msra.mxu0 0.0
        %2063 = vmatprep.subr.mxu0 0.0
        %2064 = vmatpush1.msra.mxu0 0.0
        %2065 = vmatprep.subr.mxu0 0.0
        %2066 = vmatpush1.msra.mxu0 0.0
        %2067 = vmatprep.subr.mxu0 0.0
        %2068 = vmatpush1.msra.mxu0 0.0
        %2069 = vmatprep.subr.mxu0 0.0
        %2070 = vmatpush1.msra.mxu0 0.0
        %2071 = vmatprep.subr.mxu0 0.0
        %2072 = vmatpush1.msra.mxu0 0.0
        %2073 = vmatprep.subr.mxu0 0.0
        %2074 = vmatpush1.msra.mxu0 0.0
        %2075 = vmatprep.subr.mxu0 0.0
        %2076 = vmatpush1.msra.mxu0 0.0
        %2077 = vmatprep.subr.mxu0 0.0
        %2078 = vmatpush1.msra.mxu0 0.0
        %2079 = vmatprep.subr.mxu0 0.0
        %2080 = vmatpush1.msra.mxu0 0.0
        %2081 = vmatprep.subr.mxu0 0.0
        %2082 = vmatpush1.msra.mxu0 0.0
        %2083 = vmatprep.subr.mxu0 0.0
        %2084 = vmatpush1.msra.mxu0 0.0
        %2085 = vmatprep.subr.mxu0 0.0
        %2086 = vmatpush1.msra.mxu0 0.0
        %2087 = vmatprep.mubr.f32.mxu0 0.0
        %2088 = vmatmul.mubr.f32.gmra.mrb[0].mxu0 %v2021
        %v2089 = vpop.f32.mrb[0].mxu0
        %v2090 = vadd.f32 0.0, %v2089
        %v2091 = vpop.f32.mrb[0].mxu0
        %2092 = vdwg.mxu0
        %v2093 = vadd.f32 %v2013, %v2090
        %v2094 = vld [vmem:[#allocation12] sm:$0x3]
        %v2095 = vlaneseq
        %v2096 = vshrl.u32 %v2095, 7
        %v2097 = vsub.s32 0, %v2096
        %v2098 = vrot.slane %v2094, %v2097
        %v2099 = vmul.f32 %v2093, %v2098
        %v2100 = vlaneseq
        %v2101 = vshrl.u32 %v2100, 7
        %v2102 = vsub.s32 1, %v2101
        %v2103 = vrot.slane %v2094, %v2102
        %v2104 = vadd.f32 %v2099, %v2103
        %vm2105 = vcmp.ge.f32.partialorder %v2104, 0.0
        %v2106 = vmul.f32 %v2104, 0.1
        %v2107 = vsel %vm2105, %v2104, %v2106
        %2108 = vrot.lane.b32.xlu0 %v1849, 4
        %v2109 = vpop.permute.xlu0 %2108
        %2112 = vrot.lane.b32.xlu0 %v2107, 4
        %v2113 = vpop.permute.xlu0 %2112
        %2115 = vrot.lane.b32.xlu0 %v1849, 8
        %v2116 = vpop.permute.xlu0 %2115
        %2118 = vrot.lane.b32.xlu0 %v2107, 8
        %v2119 = vpop.permute.xlu0 %2118
        %2121 = vrot.lane.b32.xlu0 %v1849, 12
        %v2122 = vpop.permute.xlu0 %2121
        %2124 = vrot.lane.b32.xlu0 %v2107, 12
        %v2125 = vpop.permute.xlu0 %2124
        %2127 = vrot.lane.b32.xlu0 %v1849, 16
        %v2128 = vpop.permute.xlu0 %2127
        %v2130 = vsel %vm1859, %v2107, %v2109
        %v2131 = vsel %vm1244, %v2130, %v2113
        %vm2132 = vcmask 97280
        %v2133 = vsel %vm2132, %v2131, %v2116
        %v2134 = vsel %vm1277, %v2133, %v2119
        %v2135 = vsel %vm1861, %v2134, %v2122
        %v2136 = vsel %vm1279, %v2135, %v2125
        %vm2137 = vcmask 228352
        %v2138 = vsel %vm2137, %v2136, %v2128
        %v2140 = vrot.slane %v2138, 7
        %v2142 = vsel %vm858, 0.0, %v2140
        %v2143 = vsel %vm1212, %v2142, 0.0
        %2145 = vrot.lane.b32.xlu0 %v2143, 8
        %v2146 = vpop.permute.xlu0 %2145
        %v2148 = vsel %vm1244, 0.0, %v2146
        %v2149 = vsel %vm1328, %v2148, 0.0
        %v2150 = vld [vmem:[#allocation13] sm:$0xff]
        %v2151 = vld [vmem:[#allocation13 + $0x8] sm:$0xff]
        %v2152 = vld [vmem:[#allocation13 + $0x10] sm:$0xff]
        %v2153 = vld [vmem:[#allocation13 + $0x18] sm:$0xff]
        %v2154 = vld [vmem:[#allocation13 + $0x20] sm:$0xff]
        %v2155 = vld [vmem:[#allocation13 + $0x28] sm:$0xff]
        %s2156 = scalar_lea.vmem [#allocation13], 48
        %v2157 = vld [vmem:[%s2156] sm:$0xff]
        %v2158 = vld [vmem:[%s2156 + $0x8] sm:$0xff]
        %v2159 = vld [vmem:[%s2156 + $0x10] sm:$0xff]
        %v2160 = vld [vmem:[%s2156 + $0x18] sm:$0xff]
        %v2161 = vld [vmem:[%s2156 + $0x20] sm:$0xff]
        %v2162 = vld [vmem:[%s2156 + $0x28] sm:$0xff]
        %v2164 = vrot.slane %v2149, 1
        %v2165 = vsel %vm1345, %v2164, 0
        %2167 = vmatprep.subr.mxu0 0.0
        %2168 = vmatpush1.msra.mxu0 %v2157
        %2169 = vmatprep.subr.mxu0 0.0
        %2170 = vmatpush1.msra.mxu0 %v2158
        %2171 = vmatprep.subr.mxu0 0.0
        %2172 = vmatpush1.msra.mxu0 %v2159
        %2173 = vmatprep.subr.mxu0 0.0
        %2174 = vmatpush1.msra.mxu0 %v2160
        %2175 = vmatprep.subr.mxu0 0.0
        %2176 = vmatpush1.msra.mxu0 %v2161
        %2177 = vmatprep.subr.mxu0 0.0
        %2178 = vmatpush1.msra.mxu0 %v2162
        %2179 = vmatprep.subr.mxu0 0.0
        %2180 = vmatpush1.msra.mxu0 0.0
        %2181 = vmatprep.subr.mxu0 0.0
        %2182 = vmatpush1.msra.mxu0 0.0
        %2183 = vmatprep.subr.mxu0 0.0
        %2184 = vmatpush1.msra.mxu0 0.0
        %2185 = vmatprep.subr.mxu0 0.0
        %2186 = vmatpush1.msra.mxu0 0.0
        %2187 = vmatprep.subr.mxu0 0.0
        %2188 = vmatpush1.msra.mxu0 0.0
        %2189 = vmatprep.subr.mxu0 0.0
        %2190 = vmatpush1.msra.mxu0 0.0
        %2191 = vmatprep.subr.mxu0 0.0
        %2192 = vmatpush1.msra.mxu0 0.0
        %2193 = vmatprep.subr.mxu0 0.0
        %2194 = vmatpush1.msra.mxu0 0.0
        %2195 = vmatprep.subr.mxu0 0.0
        %2196 = vmatpush1.msra.mxu0 0.0
        %2197 = vmatprep.subr.mxu0 0.0
        %2198 = vmatpush1.msra.mxu0 0.0
        %2199 = vmatprep.subr.mxu0 0.0
        %2200 = vmatpush1.msra.mxu0 0.0
        %2201 = vmatprep.subr.mxu0 0.0
        %2202 = vmatpush1.msra.mxu0 0.0
        %2203 = vmatprep.subr.mxu0 0.0
        %2204 = vmatpush1.msra.mxu0 0.0
        %2205 = vmatprep.subr.mxu0 0.0
        %2206 = vmatpush1.msra.mxu0 0.0
        %2207 = vmatprep.subr.mxu0 0.0
        %2208 = vmatpush1.msra.mxu0 0.0
        %2209 = vmatprep.subr.mxu0 0.0
        %2210 = vmatpush1.msra.mxu0 0.0
        %2211 = vmatprep.subr.mxu0 0.0
        %2212 = vmatpush1.msra.mxu0 0.0
        %2213 = vmatprep.subr.mxu0 0.0
        %2214 = vmatpush1.msra.mxu0 0.0
        %2215 = vmatprep.subr.mxu0 0.0
        %2216 = vmatpush1.msra.mxu0 0.0
        %2217 = vmatprep.subr.mxu0 0.0
        %2218 = vmatpush1.msra.mxu0 0.0
        %2219 = vmatprep.subr.mxu0 0.0
        %2220 = vmatpush1.msra.mxu0 0.0
        %2221 = vmatprep.subr.mxu0 0.0
        %2222 = vmatpush1.msra.mxu0 0.0
        %2223 = vmatprep.subr.mxu0 0.0
        %2224 = vmatpush1.msra.mxu0 0.0
        %2225 = vmatprep.subr.mxu0 0.0
        %2226 = vmatpush1.msra.mxu0 0.0
        %2227 = vmatprep.subr.mxu0 0.0
        %2228 = vmatpush1.msra.mxu0 0.0
        %2229 = vmatprep.subr.mxu0 0.0
        %2230 = vmatpush1.msra.mxu0 0.0
        %2231 = vmatprep.mubr.f32.mxu0 0.0
        %2232 = vmatmul.mubr.f32.gmra.mrb[0].mxu0 %v2165
        %v2233 = vpop.f32.mrb[0].mxu0
        %v2234 = vadd.f32 0.0, %v2233
        %v2235 = vpop.f32.mrb[0].mxu0
        %2236 = vdwg.mxu0
        %v2237 = vsel %vm1345, %v2149, 0
        %2239 = vmatprep.subr.mxu0 0.0
        %2240 = vmatpush1.msra.mxu0 %v2150
        %2241 = vmatprep.subr.mxu0 0.0
        %2242 = vmatpush1.msra.mxu0 %v2151
        %2243 = vmatprep.subr.mxu0 0.0
        %2244 = vmatpush1.msra.mxu0 %v2152
        %2245 = vmatprep.subr.mxu0 0.0
        %2246 = vmatpush1.msra.mxu0 %v2153
        %2247 = vmatprep.subr.mxu0 0.0
        %2248 = vmatpush1.msra.mxu0 %v2154
        %2249 = vmatprep.subr.mxu0 0.0
        %2250 = vmatpush1.msra.mxu0 %v2155
        %2251 = vmatprep.subr.mxu0 0.0
        %2252 = vmatpush1.msra.mxu0 0.0
        %2253 = vmatprep.subr.mxu0 0.0
        %2254 = vmatpush1.msra.mxu0 0.0
        %2255 = vmatprep.subr.mxu0 0.0
        %2256 = vmatpush1.msra.mxu0 0.0
        %2257 = vmatprep.subr.mxu0 0.0
        %2258 = vmatpush1.msra.mxu0 0.0
        %2259 = vmatprep.subr.mxu0 0.0
        %2260 = vmatpush1.msra.mxu0 0.0
        %2261 = vmatprep.subr.mxu0 0.0
        %2262 = vmatpush1.msra.mxu0 0.0
        %2263 = vmatprep.subr.mxu0 0.0
        %2264 = vmatpush1.msra.mxu0 0.0
        %2265 = vmatprep.subr.mxu0 0.0
        %2266 = vmatpush1.msra.mxu0 0.0
        %2267 = vmatprep.subr.mxu0 0.0
        %2268 = vmatpush1.msra.mxu0 0.0
        %2269 = vmatprep.subr.mxu0 0.0
        %2270 = vmatpush1.msra.mxu0 0.0
        %2271 = vmatprep.subr.mxu0 0.0
        %2272 = vmatpush1.msra.mxu0 0.0
        %2273 = vmatprep.subr.mxu0 0.0
        %2274 = vmatpush1.msra.mxu0 0.0
        %2275 = vmatprep.subr.mxu0 0.0
        %2276 = vmatpush1.msra.mxu0 0.0
        %2277 = vmatprep.subr.mxu0 0.0
        %2278 = vmatpush1.msra.mxu0 0.0
        %2279 = vmatprep.subr.mxu0 0.0
        %2280 = vmatpush1.msra.mxu0 0.0
        %2281 = vmatprep.subr.mxu0 0.0
        %2282 = vmatpush1.msra.mxu0 0.0
        %2283 = vmatprep.subr.mxu0 0.0
        %2284 = vmatpush1.msra.mxu0 0.0
        %2285 = vmatprep.subr.mxu0 0.0
        %2286 = vmatpush1.msra.mxu0 0.0
        %2287 = vmatprep.subr.mxu0 0.0
        %2288 = vmatpush1.msra.mxu0 0.0
        %2289 = vmatprep.subr.mxu0 0.0
        %2290 = vmatpush1.msra.mxu0 0.0
        %2291 = vmatprep.subr.mxu0 0.0
        %2292 = vmatpush1.msra.mxu0 0.0
        %2293 = vmatprep.subr.mxu0 0.0
        %2294 = vmatpush1.msra.mxu0 0.0
        %2295 = vmatprep.subr.mxu0 0.0
        %2296 = vmatpush1.msra.mxu0 0.0
        %2297 = vmatprep.subr.mxu0 0.0
        %2298 = vmatpush1.msra.mxu0 0.0
        %2299 = vmatprep.subr.mxu0 0.0
        %2300 = vmatpush1.msra.mxu0 0.0
        %2301 = vmatprep.subr.mxu0 0.0
        %2302 = vmatpush1.msra.mxu0 0.0
        %2303 = vmatprep.mubr.f32.mxu0 0.0
        %2304 = vmatmul.mubr.f32.gmra.mrb[0].mxu0 %v2237
        %v2305 = vpop.f32.mrb[0].mxu0
        %v2306 = vadd.f32 %v2234, %v2305
        %v2307 = vpop.f32.mrb[0].mxu0
        %2308 = vdwg.mxu0
        %s2309 = scalar_lea.vmem [#allocation13], 96
        %v2310 = vld [vmem:[%s2309] sm:$0xff]
        %v2311 = vld [vmem:[%s2309 + $0x8] sm:$0xff]
        %v2312 = vld [vmem:[%s2309 + $0x10] sm:$0xff]
        %v2313 = vld [vmem:[%s2309 + $0x18] sm:$0xff]
        %v2314 = vld [vmem:[%s2309 + $0x20] sm:$0xff]
        %v2315 = vld [vmem:[%s2309 + $0x28] sm:$0xff]
        %v2316 = vrot.slane %v2149, 2
        %v2317 = vsel %vm1345, %v2316, 0
        %2319 = vmatprep.subr.mxu0 0.0
        %2320 = vmatpush1.msra.mxu0 %v2310
        %2321 = vmatprep.subr.mxu0 0.0
        %2322 = vmatpush1.msra.mxu0 %v2311
        %2323 = vmatprep.subr.mxu0 0.0
        %2324 = vmatpush1.msra.mxu0 %v2312
        %2325 = vmatprep.subr.mxu0 0.0
        %2326 = vmatpush1.msra.mxu0 %v2313
        %2327 = vmatprep.subr.mxu0 0.0
        %2328 = vmatpush1.msra.mxu0 %v2314
        %2329 = vmatprep.subr.mxu0 0.0
        %2330 = vmatpush1.msra.mxu0 %v2315
        %2331 = vmatprep.subr.mxu0 0.0
        %2332 = vmatpush1.msra.mxu0 0.0
        %2333 = vmatprep.subr.mxu0 0.0
        %2334 = vmatpush1.msra.mxu0 0.0
        %2335 = vmatprep.subr.mxu0 0.0
        %2336 = vmatpush1.msra.mxu0 0.0
        %2337 = vmatprep.subr.mxu0 0.0
        %2338 = vmatpush1.msra.mxu0 0.0
        %2339 = vmatprep.subr.mxu0 0.0
        %2340 = vmatpush1.msra.mxu0 0.0
        %2341 = vmatprep.subr.mxu0 0.0
        %2342 = vmatpush1.msra.mxu0 0.0
        %2343 = vmatprep.subr.mxu0 0.0
        %2344 = vmatpush1.msra.mxu0 0.0
        %2345 = vmatprep.subr.mxu0 0.0
        %2346 = vmatpush1.msra.mxu0 0.0
        %2347 = vmatprep.subr.mxu0 0.0
        %2348 = vmatpush1.msra.mxu0 0.0
        %2349 = vmatprep.subr.mxu0 0.0
        %2350 = vmatpush1.msra.mxu0 0.0
        %2351 = vmatprep.subr.mxu0 0.0
        %2352 = vmatpush1.msra.mxu0 0.0
        %2353 = vmatprep.subr.mxu0 0.0
        %2354 = vmatpush1.msra.mxu0 0.0
        %2355 = vmatprep.subr.mxu0 0.0
        %2356 = vmatpush1.msra.mxu0 0.0
        %2357 = vmatprep.subr.mxu0 0.0
        %2358 = vmatpush1.msra.mxu0 0.0
        %2359 = vmatprep.subr.mxu0 0.0
        %2360 = vmatpush1.msra.mxu0 0.0
        %2361 = vmatprep.subr.mxu0 0.0
        %2362 = vmatpush1.msra.mxu0 0.0
        %2363 = vmatprep.subr.mxu0 0.0
        %2364 = vmatpush1.msra.mxu0 0.0
        %2365 = vmatprep.subr.mxu0 0.0
        %2366 = vmatpush1.msra.mxu0 0.0
        %2367 = vmatprep.subr.mxu0 0.0
        %2368 = vmatpush1.msra.mxu0 0.0
        %2369 = vmatprep.subr.mxu0 0.0
        %2370 = vmatpush1.msra.mxu0 0.0
        %2371 = vmatprep.subr.mxu0 0.0
        %2372 = vmatpush1.msra.mxu0 0.0
        %2373 = vmatprep.subr.mxu0 0.0
        %2374 = vmatpush1.msra.mxu0 0.0
        %2375 = vmatprep.subr.mxu0 0.0
        %2376 = vmatpush1.msra.mxu0 0.0
        %2377 = vmatprep.subr.mxu0 0.0
        %2378 = vmatpush1.msra.mxu0 0.0
        %2379 = vmatprep.subr.mxu0 0.0
        %2380 = vmatpush1.msra.mxu0 0.0
        %2381 = vmatprep.subr.mxu0 0.0
        %2382 = vmatpush1.msra.mxu0 0.0
        %2383 = vmatprep.mubr.f32.mxu0 0.0
        %2384 = vmatmul.mubr.f32.gmra.mrb[0].mxu0 %v2317
        %v2385 = vpop.f32.mrb[0].mxu0
        %v2386 = vadd.f32 0.0, %v2385
        %v2387 = vpop.f32.mrb[0].mxu0
        %2388 = vdwg.mxu0
        %v2389 = vadd.f32 %v2306, %v2386
        %v2390 = vld [vmem:[#allocation15] sm:$0x3]
        %v2391 = vlaneseq
        %v2392 = vshrl.u32 %v2391, 7
        %v2393 = vsub.s32 0, %v2392
        %v2394 = vrot.slane %v2390, %v2393
        %v2395 = vmul.f32 %v2389, %v2394
        %v2396 = vlaneseq
        %v2397 = vshrl.u32 %v2396, 7
        %v2398 = vsub.s32 1, %v2397
        %v2399 = vrot.slane %v2390, %v2398
        %v2400 = vadd.f32 %v2395, %v2399
        %vm2401 = vcmp.ge.f32.partialorder %v2400, 0.0
        %v2402 = vmul.f32 %v2400, 0.1
        %v2403 = vsel %vm2401, %v2400, %v2402
        %2404 = vrot.lane.b32.xlu0 %v1584, 8
        %v2405 = vpop.permute.xlu0 %2404
        %2408 = vrot.lane.b32.xlu0 %v2403, 8
        %v2409 = vpop.permute.xlu0 %2408
        %2411 = vrot.lane.b32.xlu0 %v1584, 16
        %v2412 = vpop.permute.xlu0 %2411
        %2414 = vrot.lane.b32.xlu0 %v2403, 16
        %v2415 = vpop.permute.xlu0 %2414
        %2417 = vrot.lane.b32.xlu0 %v1584, 24
        %v2418 = vpop.permute.xlu0 %2417
        %2420 = vrot.lane.b32.xlu0 %v2403, 24
        %v2421 = vpop.permute.xlu0 %2420
        %2423 = vrot.lane.b32.xlu0 %v1584, 32
        %v2424 = vpop.permute.xlu0 %2423
        %v2426 = vsel %vm1244, %v2403, %v2405
        %v2427 = vsel %vm1277, %v2426, %v2409
        %v2428 = vsel %vm1279, %v2427, %v2412
        %vm2429 = vcmask 261120
        %v2430 = vsel %vm2429, %v2428, %v2415
        %v2431 = vsel %vm1328, %v2430, %v2418
        %v2432 = vsel %vm1345, %v2431, %v2421
        %vm2433 = vcmask 457728
        %v2434 = vsel %vm2433, %v2432, %v2424
        %vm2435 = vcmask 519168
        %2436 = vst.msk [vmem:[%s849] sm:$0xf] %vm2435, %v2434
        %v2438 = vrot.slane %v2434, 7
        %v2440 = vsel %vm858, 0.0, %v2438
        %v2441 = vsel %vm1212, %v2440, 0.0
        %2443 = vrot.lane.b32.xlu0 %v2441, 16
        %v2444 = vpop.permute.xlu0 %2443
        %v2446 = vsel %vm1277, 0.0, %v2444
        %vm2447 = vcmask 654336
        %v2448 = vsel %vm2447, %v2446, 0.0
        %v2449 = vld [vmem:[%s11] sm:$0xff]
        %v2450 = vld [vmem:[%s11 + $0x8] sm:$0xff]
        %v2451 = vld [vmem:[%s11 + $0x10] sm:$0xff]
        %v2452 = vld [vmem:[%s11 + $0x18] sm:$0xff]
        %v2453 = vld [vmem:[%s11 + $0x20] sm:$0xff]
        %v2454 = vld [vmem:[%s11 + $0x28] sm:$0xff]
        %v2455 = vld [vmem:[%s11 + $0x30] sm:$0xff]
        %v2456 = vld [vmem:[%s11 + $0x38] sm:$0xff]
        %v2457 = vld [vmem:[%s11 + $0x40] sm:$0xff]
        %v2458 = vld [vmem:[%s11 + $0x48] sm:$0xff]
        %v2459 = vld [vmem:[%s11 + $0x50] sm:$0xff]
        %v2460 = vld [vmem:[%s11 + $0x58] sm:$0xff]
        %vm2461 = vcmask 785408
        %v2463 = vsel %vm2461, %v2448, 0
        %2465 = vmatprep.subr.mxu0 0.0
        %2466 = vmatpush1.msra.mxu0 %v2449
        %2467 = vmatprep.subr.mxu0 0.0
        %2468 = vmatpush1.msra.mxu0 %v2450
        %2469 = vmatprep.subr.mxu0 0.0
        %2470 = vmatpush1.msra.mxu0 %v2451
        %2471 = vmatprep.subr.mxu0 0.0
        %2472 = vmatpush1.msra.mxu0 %v2452
        %2473 = vmatprep.subr.mxu0 0.0
        %2474 = vmatpush1.msra.mxu0 %v2453
        %2475 = vmatprep.subr.mxu0 0.0
        %2476 = vmatpush1.msra.mxu0 %v2454
        %2477 = vmatprep.subr.mxu0 0.0
        %2478 = vmatpush1.msra.mxu0 %v2455
        %2479 = vmatprep.subr.mxu0 0.0
        %2480 = vmatpush1.msra.mxu0 %v2456
        %2481 = vmatprep.subr.mxu0 0.0
        %2482 = vmatpush1.msra.mxu0 %v2457
        %2483 = vmatprep.subr.mxu0 0.0
        %2484 = vmatpush1.msra.mxu0 %v2458
        %2485 = vmatprep.subr.mxu0 0.0
        %2486 = vmatpush1.msra.mxu0 %v2459
        %2487 = vmatprep.subr.mxu0 0.0
        %2488 = vmatpush1.msra.mxu0 %v2460
        %2489 = vmatprep.subr.mxu0 0.0
        %2490 = vmatpush1.msra.mxu0 0.0
        %2491 = vmatprep.subr.mxu0 0.0
        %2492 = vmatpush1.msra.mxu0 0.0
        %2493 = vmatprep.subr.mxu0 0.0
        %2494 = vmatpush1.msra.mxu0 0.0
        %2495 = vmatprep.subr.mxu0 0.0
        %2496 = vmatpush1.msra.mxu0 0.0
        %2497 = vmatprep.subr.mxu0 0.0
        %2498 = vmatpush1.msra.mxu0 0.0
        %2499 = vmatprep.subr.mxu0 0.0
        %2500 = vmatpush1.msra.mxu0 0.0
        %2501 = vmatprep.subr.mxu0 0.0
        %2502 = vmatpush1.msra.mxu0 0.0
        %2503 = vmatprep.subr.mxu0 0.0
        %2504 = vmatpush1.msra.mxu0 0.0
        %2505 = vmatprep.subr.mxu0 0.0
        %2506 = vmatpush1.msra.mxu0 0.0
        %2507 = vmatprep.subr.mxu0 0.0
        %2508 = vmatpush1.msra.mxu0 0.0
        %2509 = vmatprep.subr.mxu0 0.0
        %2510 = vmatpush1.msra.mxu0 0.0
        %2511 = vmatprep.subr.mxu0 0.0
        %2512 = vmatpush1.msra.mxu0 0.0
        %2513 = vmatprep.subr.mxu0 0.0
        %2514 = vmatpush1.msra.mxu0 0.0
        %2515 = vmatprep.subr.mxu0 0.0
        %2516 = vmatpush1.msra.mxu0 0.0
        %2517 = vmatprep.subr.mxu0 0.0
        %2518 = vmatpush1.msra.mxu0 0.0
        %2519 = vmatprep.subr.mxu0 0.0
        %2520 = vmatpush1.msra.mxu0 0.0
        %2521 = vmatprep.subr.mxu0 0.0
        %2522 = vmatpush1.msra.mxu0 0.0
        %2523 = vmatprep.subr.mxu0 0.0
        %2524 = vmatpush1.msra.mxu0 0.0
        %2525 = vmatprep.subr.mxu0 0.0
        %2526 = vmatpush1.msra.mxu0 0.0
        %2527 = vmatprep.subr.mxu0 0.0
        %2528 = vmatpush1.msra.mxu0 0.0
        %2529 = vmatprep.mubr.f32.mxu0 0.0
        %2530 = vmatmul.mubr.f32.gmra.mrb[0].mxu0 %v2463
        %v2531 = vpop.f32.mrb[0].mxu0
        %v2532 = vadd.f32 0.0, %v2531
        %v2533 = vpop.f32.mrb[0].mxu0
        %2534 = vdwg.mxu0
        %s2535 = scalar_lea.vmem %s11, 96
        %v2536 = vld [vmem:[%s2535] sm:$0xff]
        %v2537 = vld [vmem:[%s2535 + $0x8] sm:$0xff]
        %v2538 = vld [vmem:[%s2535 + $0x10] sm:$0xff]
        %v2539 = vld [vmem:[%s2535 + $0x18] sm:$0xff]
        %v2540 = vld [vmem:[%s2535 + $0x20] sm:$0xff]
        %v2541 = vld [vmem:[%s2535 + $0x28] sm:$0xff]
        %v2542 = vld [vmem:[%s2535 + $0x30] sm:$0xff]
        %v2543 = vld [vmem:[%s2535 + $0x38] sm:$0xff]
        %v2544 = vld [vmem:[%s2535 + $0x40] sm:$0xff]
        %v2545 = vld [vmem:[%s2535 + $0x48] sm:$0xff]
        %v2546 = vld [vmem:[%s2535 + $0x50] sm:$0xff]
        %v2547 = vld [vmem:[%s2535 + $0x58] sm:$0xff]
        %2548 = vmatprep.subr.mxu0 0.0
        %2549 = vmatpush1.msra.mxu0 %v2536
        %2550 = vmatprep.subr.mxu0 0.0
        %2551 = vmatpush1.msra.mxu0 %v2537
        %2552 = vmatprep.subr.mxu0 0.0
        %2553 = vmatpush1.msra.mxu0 %v2538
        %2554 = vmatprep.subr.mxu0 0.0
        %2555 = vmatpush1.msra.mxu0 %v2539
        %2556 = vmatprep.subr.mxu0 0.0
        %2557 = vmatpush1.msra.mxu0 %v2540
        %2558 = vmatprep.subr.mxu0 0.0
        %2559 = vmatpush1.msra.mxu0 %v2541
        %2560 = vmatprep.subr.mxu0 0.0
        %2561 = vmatpush1.msra.mxu0 %v2542
        %2562 = vmatprep.subr.mxu0 0.0
        %2563 = vmatpush1.msra.mxu0 %v2543
        %2564 = vmatprep.subr.mxu0 0.0
        %2565 = vmatpush1.msra.mxu0 %v2544
        %2566 = vmatprep.subr.mxu0 0.0
        %2567 = vmatpush1.msra.mxu0 %v2545
        %2568 = vmatprep.subr.mxu0 0.0
        %2569 = vmatpush1.msra.mxu0 %v2546
        %2570 = vmatprep.subr.mxu0 0.0
        %2571 = vmatpush1.msra.mxu0 %v2547
        %2572 = vmatprep.subr.mxu0 0.0
        %2573 = vmatpush1.msra.mxu0 0.0
        %2574 = vmatprep.subr.mxu0 0.0
        %2575 = vmatpush1.msra.mxu0 0.0
        %2576 = vmatprep.subr.mxu0 0.0
        %2577 = vmatpush1.msra.mxu0 0.0
        %2578 = vmatprep.subr.mxu0 0.0
        %2579 = vmatpush1.msra.mxu0 0.0
        %2580 = vmatprep.subr.mxu0 0.0
        %2581 = vmatpush1.msra.mxu0 0.0
        %2582 = vmatprep.subr.mxu0 0.0
        %2583 = vmatpush1.msra.mxu0 0.0
        %2584 = vmatprep.subr.mxu0 0.0
        %2585 = vmatpush1.msra.mxu0 0.0
        %2586 = vmatprep.subr.mxu0 0.0
        %2587 = vmatpush1.msra.mxu0 0.0
        %2588 = vmatprep.subr.mxu0 0.0
        %2589 = vmatpush1.msra.mxu0 0.0
        %2590 = vmatprep.subr.mxu0 0.0
        %2591 = vmatpush1.msra.mxu0 0.0
        %2592 = vmatprep.subr.mxu0 0.0
        %2593 = vmatpush1.msra.mxu0 0.0
        %2594 = vmatprep.subr.mxu0 0.0
        %2595 = vmatpush1.msra.mxu0 0.0
        %2596 = vmatprep.subr.mxu0 0.0
        %2597 = vmatpush1.msra.mxu0 0.0
        %2598 = vmatprep.subr.mxu0 0.0
        %2599 = vmatpush1.msra.mxu0 0.0
        %2600 = vmatprep.subr.mxu0 0.0
        %2601 = vmatpush1.msra.mxu0 0.0
        %2602 = vmatprep.subr.mxu0 0.0
        %2603 = vmatpush1.msra.mxu0 0.0
        %2604 = vmatprep.subr.mxu0 0.0
        %2605 = vmatpush1.msra.mxu0 0.0
        %2606 = vmatprep.subr.mxu0 0.0
        %2607 = vmatpush1.msra.mxu0 0.0
        %2608 = vmatprep.subr.mxu0 0.0
        %2609 = vmatpush1.msra.mxu0 0.0
        %2610 = vmatprep.subr.mxu0 0.0
        %2611 = vmatpush1.msra.mxu0 0.0
        %2612 = vmatprep.mubr.f32.mxu0 0.0
        %2613 = vmatmul.mubr.f32.gmra.mrb[0].mxu0 %v2463
        %v2614 = vpop.f32.mrb[0].mxu0
        %v2615 = vadd.f32 0.0, %v2614
        %v2616 = vpop.f32.mrb[0].mxu0
        %2617 = vdwg.mxu0
        %s2618 = scalar_lea.vmem %s11, 192
        %v2619 = vld [vmem:[%s2618] sm:$0xff]
        %v2620 = vld [vmem:[%s2618 + $0x8] sm:$0xff]
        %v2621 = vld [vmem:[%s2618 + $0x10] sm:$0xff]
        %v2622 = vld [vmem:[%s2618 + $0x18] sm:$0xff]
        %v2623 = vld [vmem:[%s2618 + $0x20] sm:$0xff]
        %v2624 = vld [vmem:[%s2618 + $0x28] sm:$0xff]
        %v2625 = vld [vmem:[%s2618 + $0x30] sm:$0xff]
        %v2626 = vld [vmem:[%s2618 + $0x38] sm:$0xff]
        %v2627 = vld [vmem:[%s2618 + $0x40] sm:$0xff]
        %v2628 = vld [vmem:[%s2618 + $0x48] sm:$0xff]
        %v2629 = vld [vmem:[%s2618 + $0x50] sm:$0xff]
        %v2630 = vld [vmem:[%s2618 + $0x58] sm:$0xff]
        %2631 = vmatprep.subr.mxu0 0.0
        %2632 = vmatpush1.msra.mxu0 %v2619
        %2633 = vmatprep.subr.mxu0 0.0
        %2634 = vmatpush1.msra.mxu0 %v2620
        %2635 = vmatprep.subr.mxu0 0.0
        %2636 = vmatpush1.msra.mxu0 %v2621
        %2637 = vmatprep.subr.mxu0 0.0
        %2638 = vmatpush1.msra.mxu0 %v2622
        %2639 = vmatprep.subr.mxu0 0.0
        %2640 = vmatpush1.msra.mxu0 %v2623
        %2641 = vmatprep.subr.mxu0 0.0
        %2642 = vmatpush1.msra.mxu0 %v2624
        %2643 = vmatprep.subr.mxu0 0.0
        %2644 = vmatpush1.msra.mxu0 %v2625
        %2645 = vmatprep.subr.mxu0 0.0
        %2646 = vmatpush1.msra.mxu0 %v2626
        %2647 = vmatprep.subr.mxu0 0.0
        %2648 = vmatpush1.msra.mxu0 %v2627
        %2649 = vmatprep.subr.mxu0 0.0
        %2650 = vmatpush1.msra.mxu0 %v2628
        %2651 = vmatprep.subr.mxu0 0.0
        %2652 = vmatpush1.msra.mxu0 %v2629
        %2653 = vmatprep.subr.mxu0 0.0
        %2654 = vmatpush1.msra.mxu0 %v2630
        %2655 = vmatprep.subr.mxu0 0.0
        %2656 = vmatpush1.msra.mxu0 0.0
        %2657 = vmatprep.subr.mxu0 0.0
        %2658 = vmatpush1.msra.mxu0 0.0
        %2659 = vmatprep.subr.mxu0 0.0
        %2660 = vmatpush1.msra.mxu0 0.0
        %2661 = vmatprep.subr.mxu0 0.0
        %2662 = vmatpush1.msra.mxu0 0.0
        %2663 = vmatprep.subr.mxu0 0.0
        %2664 = vmatpush1.msra.mxu0 0.0
        %2665 = vmatprep.subr.mxu0 0.0
        %2666 = vmatpush1.msra.mxu0 0.0
        %2667 = vmatprep.subr.mxu0 0.0
        %2668 = vmatpush1.msra.mxu0 0.0
        %2669 = vmatprep.subr.mxu0 0.0
        %2670 = vmatpush1.msra.mxu0 0.0
        %2671 = vmatprep.subr.mxu0 0.0
        %2672 = vmatpush1.msra.mxu0 0.0
        %2673 = vmatprep.subr.mxu0 0.0
        %2674 = vmatpush1.msra.mxu0 0.0
        %2675 = vmatprep.subr.mxu0 0.0
        %2676 = vmatpush1.msra.mxu0 0.0
        %2677 = vmatprep.subr.mxu0 0.0
        %2678 = vmatpush1.msra.mxu0 0.0
        %2679 = vmatprep.subr.mxu0 0.0
        %2680 = vmatpush1.msra.mxu0 0.0
        %2681 = vmatprep.subr.mxu0 0.0
        %2682 = vmatpush1.msra.mxu0 0.0
        %2683 = vmatprep.subr.mxu0 0.0
        %2684 = vmatpush1.msra.mxu0 0.0
        %2685 = vmatprep.subr.mxu0 0.0
        %2686 = vmatpush1.msra.mxu0 0.0
        %2687 = vmatprep.subr.mxu0 0.0
        %2688 = vmatpush1.msra.mxu0 0.0
        %2689 = vmatprep.subr.mxu0 0.0
        %2690 = vmatpush1.msra.mxu0 0.0
        %2691 = vmatprep.subr.mxu0 0.0
        %2692 = vmatpush1.msra.mxu0 0.0
        %2693 = vmatprep.subr.mxu0 0.0
        %2694 = vmatpush1.msra.mxu0 0.0
        %2695 = vmatprep.mubr.f32.mxu0 0.0
        %2696 = vmatmul.mubr.f32.gmra.mrb[0].mxu0 %v2463
        %v2697 = vpop.f32.mrb[0].mxu0
        %v2698 = vadd.f32 0.0, %v2697
        %v2699 = vpop.f32.mrb[0].mxu0
        %2700 = vdwg.mxu0
        %v2702 = vrot.slane %v2615, 1
        %v2704 = vadd.f32 %v2532, %v2702
        %v2706 = vrot.slane %v2698, 2
        %v2708 = vadd.f32 %v2704, %v2706
        %v2710 = vrot.slane %v2708, 1
        %v2712 = vsel %vm858, %v2708, %v2710
        %v2713 = vld [vmem:[#allocation16] sm:$0x3]
        %v2714 = vlaneseq
        %v2715 = vshrl.u32 %v2714, 7
        %v2716 = vsub.s32 0, %v2715
        %v2717 = vrot.slane %v2713, %v2716
        %v2718 = vmul.f32 %v2712, %v2717
        %v2719 = vlaneseq
        %v2720 = vshrl.u32 %v2719, 7
        %v2721 = vsub.s32 1, %v2720
        %v2722 = vrot.slane %v2713, %v2721
        %v2723 = vadd.f32 %v2718, %v2722
        %vm2724 = vcmp.ge.f32.partialorder %v2723, 0.0
        %v2725 = vmul.f32 %v2723, 0.1
        %v2726 = vsel %vm2724, %v2723, %v2725
        %v2728 = vrot.slane %v2726, 7
        %v2730 = vsel %vm858, 0.0, %v2728
        %v2731 = vsel %vm1208, %v2730, 0.0
        %2733 = vrot.lane.b32.xlu0 %v2731, 16
        %v2734 = vpop.permute.xlu0 %2733
        %v2736 = vsel %vm1277, 0.0, %v2734
        %v2737 = vsel %vm1345, %v2736, 0.0
        %v2738 = vld [vmem:[#allocation18] sm:$0xff]
        %v2739 = vld [vmem:[#allocation18 + $0x8] sm:$0xff]
        %v2740 = vld [vmem:[#allocation18 + $0x10] sm:$0xff]
        %v2741 = vld [vmem:[#allocation18 + $0x18] sm:$0xff]
        %v2742 = vld [vmem:[#allocation18 + $0x20] sm:$0xff]
        %v2743 = vld [vmem:[#allocation18 + $0x28] sm:$0xff]
        %v2744 = vld [vmem:[#allocation18 + $0x30] sm:$0xff]
        %v2745 = vld [vmem:[#allocation18 + $0x38] sm:$0xff]
        %s2746 = scalar_lea.vmem [#allocation18], 64
        %v2747 = vld [vmem:[%s2746] sm:$0xff]
        %v2748 = vld [vmem:[%s2746 + $0x8] sm:$0xff]
        %v2749 = vld [vmem:[%s2746 + $0x10] sm:$0xff]
        %v2750 = vld [vmem:[%s2746 + $0x18] sm:$0xff]
        %v2751 = vld [vmem:[%s2746 + $0x20] sm:$0xff]
        %v2752 = vld [vmem:[%s2746 + $0x28] sm:$0xff]
        %v2753 = vld [vmem:[%s2746 + $0x30] sm:$0xff]
        %v2754 = vld [vmem:[%s2746 + $0x38] sm:$0xff]
        %v2756 = vrot.slane %v2737, 1
        %vm2757 = vcmask 523264
        %v2758 = vsel %vm2757, %v2756, 0
        %2760 = vmatprep.subr.mxu0 0.0
        %2761 = vmatpush1.msra.mxu0 %v2747
        %2762 = vmatprep.subr.mxu0 0.0
        %2763 = vmatpush1.msra.mxu0 %v2748
        %2764 = vmatprep.subr.mxu0 0.0
        %2765 = vmatpush1.msra.mxu0 %v2749
        %2766 = vmatprep.subr.mxu0 0.0
        %2767 = vmatpush1.msra.mxu0 %v2750
        %2768 = vmatprep.subr.mxu0 0.0
        %2769 = vmatpush1.msra.mxu0 %v2751
        %2770 = vmatprep.subr.mxu0 0.0
        %2771 = vmatpush1.msra.mxu0 %v2752
        %2772 = vmatprep.subr.mxu0 0.0
        %2773 = vmatpush1.msra.mxu0 %v2753
        %2774 = vmatprep.subr.mxu0 0.0
        %2775 = vmatpush1.msra.mxu0 %v2754
        %2776 = vmatprep.subr.mxu0 0.0
        %2777 = vmatpush1.msra.mxu0 0.0
        %2778 = vmatprep.subr.mxu0 0.0
        %2779 = vmatpush1.msra.mxu0 0.0
        %2780 = vmatprep.subr.mxu0 0.0
        %2781 = vmatpush1.msra.mxu0 0.0
        %2782 = vmatprep.subr.mxu0 0.0
        %2783 = vmatpush1.msra.mxu0 0.0
        %2784 = vmatprep.subr.mxu0 0.0
        %2785 = vmatpush1.msra.mxu0 0.0
        %2786 = vmatprep.subr.mxu0 0.0
        %2787 = vmatpush1.msra.mxu0 0.0
        %2788 = vmatprep.subr.mxu0 0.0
        %2789 = vmatpush1.msra.mxu0 0.0
        %2790 = vmatprep.subr.mxu0 0.0
        %2791 = vmatpush1.msra.mxu0 0.0
        %2792 = vmatprep.subr.mxu0 0.0
        %2793 = vmatpush1.msra.mxu0 0.0
        %2794 = vmatprep.subr.mxu0 0.0
        %2795 = vmatpush1.msra.mxu0 0.0
        %2796 = vmatprep.subr.mxu0 0.0
        %2797 = vmatpush1.msra.mxu0 0.0
        %2798 = vmatprep.subr.mxu0 0.0
        %2799 = vmatpush1.msra.mxu0 0.0
        %2800 = vmatprep.subr.mxu0 0.0
        %2801 = vmatpush1.msra.mxu0 0.0
        %2802 = vmatprep.subr.mxu0 0.0
        %2803 = vmatpush1.msra.mxu0 0.0
        %2804 = vmatprep.subr.mxu0 0.0
        %2805 = vmatpush1.msra.mxu0 0.0
        %2806 = vmatprep.subr.mxu0 0.0
        %2807 = vmatpush1.msra.mxu0 0.0
        %2808 = vmatprep.subr.mxu0 0.0
        %2809 = vmatpush1.msra.mxu0 0.0
        %2810 = vmatprep.subr.mxu0 0.0
        %2811 = vmatpush1.msra.mxu0 0.0
        %2812 = vmatprep.subr.mxu0 0.0
        %2813 = vmatpush1.msra.mxu0 0.0
        %2814 = vmatprep.subr.mxu0 0.0
        %2815 = vmatpush1.msra.mxu0 0.0
        %2816 = vmatprep.subr.mxu0 0.0
        %2817 = vmatpush1.msra.mxu0 0.0
        %2818 = vmatprep.subr.mxu0 0.0
        %2819 = vmatpush1.msra.mxu0 0.0
        %2820 = vmatprep.subr.mxu0 0.0
        %2821 = vmatpush1.msra.mxu0 0.0
        %2822 = vmatprep.subr.mxu0 0.0
        %2823 = vmatpush1.msra.mxu0 0.0
        %2824 = vmatprep.mubr.f32.mxu0 0.0
        %2825 = vmatmul.mubr.f32.gmra.mrb[0].mxu0 %v2758
        %v2826 = vpop.f32.mrb[0].mxu0
        %v2827 = vadd.f32 0.0, %v2826
        %v2828 = vpop.f32.mrb[0].mxu0
        %2829 = vdwg.mxu0
        %v2830 = vsel %vm2757, %v2737, 0
        %2832 = vmatprep.subr.mxu0 0.0
        %2833 = vmatpush1.msra.mxu0 %v2738
        %2834 = vmatprep.subr.mxu0 0.0
        %2835 = vmatpush1.msra.mxu0 %v2739
        %2836 = vmatprep.subr.mxu0 0.0
        %2837 = vmatpush1.msra.mxu0 %v2740
        %2838 = vmatprep.subr.mxu0 0.0
        %2839 = vmatpush1.msra.mxu0 %v2741
        %2840 = vmatprep.subr.mxu0 0.0
        %2841 = vmatpush1.msra.mxu0 %v2742
        %2842 = vmatprep.subr.mxu0 0.0
        %2843 = vmatpush1.msra.mxu0 %v2743
        %2844 = vmatprep.subr.mxu0 0.0
        %2845 = vmatpush1.msra.mxu0 %v2744
        %2846 = vmatprep.subr.mxu0 0.0
        %2847 = vmatpush1.msra.mxu0 %v2745
        %2848 = vmatprep.subr.mxu0 0.0
        %2849 = vmatpush1.msra.mxu0 0.0
        %2850 = vmatprep.subr.mxu0 0.0
        %2851 = vmatpush1.msra.mxu0 0.0
        %2852 = vmatprep.subr.mxu0 0.0
        %2853 = vmatpush1.msra.mxu0 0.0
        %2854 = vmatprep.subr.mxu0 0.0
        %2855 = vmatpush1.msra.mxu0 0.0
        %2856 = vmatprep.subr.mxu0 0.0
        %2857 = vmatpush1.msra.mxu0 0.0
        %2858 = vmatprep.subr.mxu0 0.0
        %2859 = vmatpush1.msra.mxu0 0.0
        %2860 = vmatprep.subr.mxu0 0.0
        %2861 = vmatpush1.msra.mxu0 0.0
        %2862 = vmatprep.subr.mxu0 0.0
        %2863 = vmatpush1.msra.mxu0 0.0
        %2864 = vmatprep.subr.mxu0 0.0
        %2865 = vmatpush1.msra.mxu0 0.0
        %2866 = vmatprep.subr.mxu0 0.0
        %2867 = vmatpush1.msra.mxu0 0.0
        %2868 = vmatprep.subr.mxu0 0.0
        %2869 = vmatpush1.msra.mxu0 0.0
        %2870 = vmatprep.subr.mxu0 0.0
        %2871 = vmatpush1.msra.mxu0 0.0
        %2872 = vmatprep.subr.mxu0 0.0
        %2873 = vmatpush1.msra.mxu0 0.0
        %2874 = vmatprep.subr.mxu0 0.0
        %2875 = vmatpush1.msra.mxu0 0.0
        %2876 = vmatprep.subr.mxu0 0.0
        %2877 = vmatpush1.msra.mxu0 0.0
        %2878 = vmatprep.subr.mxu0 0.0
        %2879 = vmatpush1.msra.mxu0 0.0
        %2880 = vmatprep.subr.mxu0 0.0
        %2881 = vmatpush1.msra.mxu0 0.0
        %2882 = vmatprep.subr.mxu0 0.0
        %2883 = vmatpush1.msra.mxu0 0.0
        %2884 = vmatprep.subr.mxu0 0.0
        %2885 = vmatpush1.msra.mxu0 0.0
        %2886 = vmatprep.subr.mxu0 0.0
        %2887 = vmatpush1.msra.mxu0 0.0
        %2888 = vmatprep.subr.mxu0 0.0
        %2889 = vmatpush1.msra.mxu0 0.0
        %2890 = vmatprep.subr.mxu0 0.0
        %2891 = vmatpush1.msra.mxu0 0.0
        %2892 = vmatprep.subr.mxu0 0.0
        %2893 = vmatpush1.msra.mxu0 0.0
        %2894 = vmatprep.subr.mxu0 0.0
        %2895 = vmatpush1.msra.mxu0 0.0
        %2896 = vmatprep.mubr.f32.mxu0 0.0
        %2897 = vmatmul.mubr.f32.gmra.mrb[0].mxu0 %v2830
        %v2898 = vpop.f32.mrb[0].mxu0
        %v2899 = vadd.f32 %v2827, %v2898
        %v2900 = vpop.f32.mrb[0].mxu0
        %2901 = vdwg.mxu0
        %s2902 = scalar_lea.vmem [#allocation18], 128
        %v2903 = vld [vmem:[%s2902] sm:$0xff]
        %v2904 = vld [vmem:[%s2902 + $0x8] sm:$0xff]
        %v2905 = vld [vmem:[%s2902 + $0x10] sm:$0xff]
        %v2906 = vld [vmem:[%s2902 + $0x18] sm:$0xff]
        %v2907 = vld [vmem:[%s2902 + $0x20] sm:$0xff]
        %v2908 = vld [vmem:[%s2902 + $0x28] sm:$0xff]
        %v2909 = vld [vmem:[%s2902 + $0x30] sm:$0xff]
        %v2910 = vld [vmem:[%s2902 + $0x38] sm:$0xff]
        %v2911 = vrot.slane %v2737, 2
        %v2912 = vsel %vm2757, %v2911, 0
        %2914 = vmatprep.subr.mxu0 0.0
        %2915 = vmatpush1.msra.mxu0 %v2903
        %2916 = vmatprep.subr.mxu0 0.0
        %2917 = vmatpush1.msra.mxu0 %v2904
        %2918 = vmatprep.subr.mxu0 0.0
        %2919 = vmatpush1.msra.mxu0 %v2905
        %2920 = vmatprep.subr.mxu0 0.0
        %2921 = vmatpush1.msra.mxu0 %v2906
        %2922 = vmatprep.subr.mxu0 0.0
        %2923 = vmatpush1.msra.mxu0 %v2907
        %2924 = vmatprep.subr.mxu0 0.0
        %2925 = vmatpush1.msra.mxu0 %v2908
        %2926 = vmatprep.subr.mxu0 0.0
        %2927 = vmatpush1.msra.mxu0 %v2909
        %2928 = vmatprep.subr.mxu0 0.0
        %2929 = vmatpush1.msra.mxu0 %v2910
        %2930 = vmatprep.subr.mxu0 0.0
        %2931 = vmatpush1.msra.mxu0 0.0
        %2932 = vmatprep.subr.mxu0 0.0
        %2933 = vmatpush1.msra.mxu0 0.0
        %2934 = vmatprep.subr.mxu0 0.0
        %2935 = vmatpush1.msra.mxu0 0.0
        %2936 = vmatprep.subr.mxu0 0.0
        %2937 = vmatpush1.msra.mxu0 0.0
        %2938 = vmatprep.subr.mxu0 0.0
        %2939 = vmatpush1.msra.mxu0 0.0
        %2940 = vmatprep.subr.mxu0 0.0
        %2941 = vmatpush1.msra.mxu0 0.0
        %2942 = vmatprep.subr.mxu0 0.0
        %2943 = vmatpush1.msra.mxu0 0.0
        %2944 = vmatprep.subr.mxu0 0.0
        %2945 = vmatpush1.msra.mxu0 0.0
        %2946 = vmatprep.subr.mxu0 0.0
        %2947 = vmatpush1.msra.mxu0 0.0
        %2948 = vmatprep.subr.mxu0 0.0
        %2949 = vmatpush1.msra.mxu0 0.0
        %2950 = vmatprep.subr.mxu0 0.0
        %2951 = vmatpush1.msra.mxu0 0.0
        %2952 = vmatprep.subr.mxu0 0.0
        %2953 = vmatpush1.msra.mxu0 0.0
        %2954 = vmatprep.subr.mxu0 0.0
        %2955 = vmatpush1.msra.mxu0 0.0
        %2956 = vmatprep.subr.mxu0 0.0
        %2957 = vmatpush1.msra.mxu0 0.0
        %2958 = vmatprep.subr.mxu0 0.0
        %2959 = vmatpush1.msra.mxu0 0.0
        %2960 = vmatprep.subr.mxu0 0.0
        %2961 = vmatpush1.msra.mxu0 0.0
        %2962 = vmatprep.subr.mxu0 0.0
        %2963 = vmatpush1.msra.mxu0 0.0
        %2964 = vmatprep.subr.mxu0 0.0
        %2965 = vmatpush1.msra.mxu0 0.0
        %2966 = vmatprep.subr.mxu0 0.0
        %2967 = vmatpush1.msra.mxu0 0.0
        %2968 = vmatprep.subr.mxu0 0.0
        %2969 = vmatpush1.msra.mxu0 0.0
        %2970 = vmatprep.subr.mxu0 0.0
        %2971 = vmatpush1.msra.mxu0 0.0
        %2972 = vmatprep.subr.mxu0 0.0
        %2973 = vmatpush1.msra.mxu0 0.0
        %2974 = vmatprep.subr.mxu0 0.0
        %2975 = vmatpush1.msra.mxu0 0.0
        %2976 = vmatprep.subr.mxu0 0.0
        %2977 = vmatpush1.msra.mxu0 0.0
        %2978 = vmatprep.mubr.f32.mxu0 0.0
        %2979 = vmatmul.mubr.f32.gmra.mrb[0].mxu0 %v2912
        %v2980 = vpop.f32.mrb[0].mxu0
        %v2981 = vadd.f32 0.0, %v2980
        %v2982 = vpop.f32.mrb[0].mxu0
        %2983 = vdwg.mxu0
        %v2984 = vadd.f32 %v2899, %v2981
        %v2985 = vld [vmem:[#allocation19] sm:$0x3]
        %v2986 = vlaneseq
        %v2987 = vshrl.u32 %v2986, 7
        %v2988 = vsub.s32 0, %v2987
        %v2989 = vrot.slane %v2985, %v2988
        %v2990 = vmul.f32 %v2984, %v2989
        %v2991 = vlaneseq
        %v2992 = vshrl.u32 %v2991, 7
        %v2993 = vsub.s32 1, %v2992
        %v2994 = vrot.slane %v2985, %v2993
        %v2995 = vadd.f32 %v2990, %v2994
        %vm2996 = vcmp.ge.f32.partialorder %v2995, 0.0
        %v2997 = vmul.f32 %v2995, 0.1
        %v2998 = vsel %vm2996, %v2995, %v2997
        %v3000 = vrot.slane %v2998, 7
        %v3002 = vsel %vm858, 0.0, %v3000
        %v3003 = vsel %vm1208, %v3002, 0.0
        %3005 = vrot.lane.b32.xlu0 %v3003, 8
        %v3006 = vpop.permute.xlu0 %3005
        %v3008 = vsel %vm1244, 0.0, %v3006
        %v3009 = vsel %vm1279, %v3008, 0.0
        %v3010 = vld [vmem:[#allocation21] sm:$0xff]
        %v3011 = vld [vmem:[#allocation21 + $0x8] sm:$0xff]
        %v3012 = vld [vmem:[#allocation21 + $0x10] sm:$0xff]
        %v3013 = vld [vmem:[#allocation21 + $0x18] sm:$0xff]
        %s3014 = scalar_lea.vmem [#allocation21], 32
        %v3015 = vld [vmem:[%s3014] sm:$0xff]
        %v3016 = vld [vmem:[%s3014 + $0x8] sm:$0xff]
        %v3017 = vld [vmem:[%s3014 + $0x10] sm:$0xff]
        %v3018 = vld [vmem:[%s3014 + $0x18] sm:$0xff]
        %v3020 = vrot.slane %v3009, 1
        %v3021 = vsel %vm2429, %v3020, 0
        %3023 = vmatprep.subr.mxu0 0.0
        %3024 = vmatpush1.msra.mxu0 %v3015
        %3025 = vmatprep.subr.mxu0 0.0
        %3026 = vmatpush1.msra.mxu0 %v3016
        %3027 = vmatprep.subr.mxu0 0.0
        %3028 = vmatpush1.msra.mxu0 %v3017
        %3029 = vmatprep.subr.mxu0 0.0
        %3030 = vmatpush1.msra.mxu0 %v3018
        %3031 = vmatprep.subr.mxu0 0.0
        %3032 = vmatpush1.msra.mxu0 0.0
        %3033 = vmatprep.subr.mxu0 0.0
        %3034 = vmatpush1.msra.mxu0 0.0
        %3035 = vmatprep.subr.mxu0 0.0
        %3036 = vmatpush1.msra.mxu0 0.0
        %3037 = vmatprep.subr.mxu0 0.0
        %3038 = vmatpush1.msra.mxu0 0.0
        %3039 = vmatprep.subr.mxu0 0.0
        %3040 = vmatpush1.msra.mxu0 0.0
        %3041 = vmatprep.subr.mxu0 0.0
        %3042 = vmatpush1.msra.mxu0 0.0
        %3043 = vmatprep.subr.mxu0 0.0
        %3044 = vmatpush1.msra.mxu0 0.0
        %3045 = vmatprep.subr.mxu0 0.0
        %3046 = vmatpush1.msra.mxu0 0.0
        %3047 = vmatprep.subr.mxu0 0.0
        %3048 = vmatpush1.msra.mxu0 0.0
        %3049 = vmatprep.subr.mxu0 0.0
        %3050 = vmatpush1.msra.mxu0 0.0
        %3051 = vmatprep.subr.mxu0 0.0
        %3052 = vmatpush1.msra.mxu0 0.0
        %3053 = vmatprep.subr.mxu0 0.0
        %3054 = vmatpush1.msra.mxu0 0.0
        %3055 = vmatprep.subr.mxu0 0.0
        %3056 = vmatpush1.msra.mxu0 0.0
        %3057 = vmatprep.subr.mxu0 0.0
        %3058 = vmatpush1.msra.mxu0 0.0
        %3059 = vmatprep.subr.mxu0 0.0
        %3060 = vmatpush1.msra.mxu0 0.0
        %3061 = vmatprep.subr.mxu0 0.0
        %3062 = vmatpush1.msra.mxu0 0.0
        %3063 = vmatprep.subr.mxu0 0.0
        %3064 = vmatpush1.msra.mxu0 0.0
        %3065 = vmatprep.subr.mxu0 0.0
        %3066 = vmatpush1.msra.mxu0 0.0
        %3067 = vmatprep.subr.mxu0 0.0
        %3068 = vmatpush1.msra.mxu0 0.0
        %3069 = vmatprep.subr.mxu0 0.0
        %3070 = vmatpush1.msra.mxu0 0.0
        %3071 = vmatprep.subr.mxu0 0.0
        %3072 = vmatpush1.msra.mxu0 0.0
        %3073 = vmatprep.subr.mxu0 0.0
        %3074 = vmatpush1.msra.mxu0 0.0
        %3075 = vmatprep.subr.mxu0 0.0
        %3076 = vmatpush1.msra.mxu0 0.0
        %3077 = vmatprep.subr.mxu0 0.0
        %3078 = vmatpush1.msra.mxu0 0.0
        %3079 = vmatprep.subr.mxu0 0.0
        %3080 = vmatpush1.msra.mxu0 0.0
        %3081 = vmatprep.subr.mxu0 0.0
        %3082 = vmatpush1.msra.mxu0 0.0
        %3083 = vmatprep.subr.mxu0 0.0
        %3084 = vmatpush1.msra.mxu0 0.0
        %3085 = vmatprep.subr.mxu0 0.0
        %3086 = vmatpush1.msra.mxu0 0.0
        %3087 = vmatprep.mubr.f32.mxu0 0.0
        %3088 = vmatmul.mubr.f32.gmra.mrb[0].mxu0 %v3021
        %v3089 = vpop.f32.mrb[0].mxu0
        %v3090 = vadd.f32 0.0, %v3089
        %v3091 = vpop.f32.mrb[0].mxu0
        %3092 = vdwg.mxu0
        %v3093 = vsel %vm2429, %v3009, 0
        %3095 = vmatprep.subr.mxu0 0.0
        %3096 = vmatpush1.msra.mxu0 %v3010
        %3097 = vmatprep.subr.mxu0 0.0
        %3098 = vmatpush1.msra.mxu0 %v3011
        %3099 = vmatprep.subr.mxu0 0.0
        %3100 = vmatpush1.msra.mxu0 %v3012
        %3101 = vmatprep.subr.mxu0 0.0
        %3102 = vmatpush1.msra.mxu0 %v3013
        %3103 = vmatprep.subr.mxu0 0.0
        %3104 = vmatpush1.msra.mxu0 0.0
        %3105 = vmatprep.subr.mxu0 0.0
        %3106 = vmatpush1.msra.mxu0 0.0
        %3107 = vmatprep.subr.mxu0 0.0
        %3108 = vmatpush1.msra.mxu0 0.0
        %3109 = vmatprep.subr.mxu0 0.0
        %3110 = vmatpush1.msra.mxu0 0.0
        %3111 = vmatprep.subr.mxu0 0.0
        %3112 = vmatpush1.msra.mxu0 0.0
        %3113 = vmatprep.subr.mxu0 0.0
        %3114 = vmatpush1.msra.mxu0 0.0
        %3115 = vmatprep.subr.mxu0 0.0
        %3116 = vmatpush1.msra.mxu0 0.0
        %3117 = vmatprep.subr.mxu0 0.0
        %3118 = vmatpush1.msra.mxu0 0.0
        %3119 = vmatprep.subr.mxu0 0.0
        %3120 = vmatpush1.msra.mxu0 0.0
        %3121 = vmatprep.subr.mxu0 0.0
        %3122 = vmatpush1.msra.mxu0 0.0
        %3123 = vmatprep.subr.mxu0 0.0
        %3124 = vmatpush1.msra.mxu0 0.0
        %3125 = vmatprep.subr.mxu0 0.0
        %3126 = vmatpush1.msra.mxu0 0.0
        %3127 = vmatprep.subr.mxu0 0.0
        %3128 = vmatpush1.msra.mxu0 0.0
        %3129 = vmatprep.subr.mxu0 0.0
        %3130 = vmatpush1.msra.mxu0 0.0
        %3131 = vmatprep.subr.mxu0 0.0
        %3132 = vmatpush1.msra.mxu0 0.0
        %3133 = vmatprep.subr.mxu0 0.0
        %3134 = vmatpush1.msra.mxu0 0.0
        %3135 = vmatprep.subr.mxu0 0.0
        %3136 = vmatpush1.msra.mxu0 0.0
        %3137 = vmatprep.subr.mxu0 0.0
        %3138 = vmatpush1.msra.mxu0 0.0
        %3139 = vmatprep.subr.mxu0 0.0
        %3140 = vmatpush1.msra.mxu0 0.0
        %3141 = vmatprep.subr.mxu0 0.0
        %3142 = vmatpush1.msra.mxu0 0.0
        %3143 = vmatprep.subr.mxu0 0.0
        %3144 = vmatpush1.msra.mxu0 0.0
        %3145 = vmatprep.subr.mxu0 0.0
        %3146 = vmatpush1.msra.mxu0 0.0
        %3147 = vmatprep.subr.mxu0 0.0
        %3148 = vmatpush1.msra.mxu0 0.0
        %3149 = vmatprep.subr.mxu0 0.0
        %3150 = vmatpush1.msra.mxu0 0.0
        %3151 = vmatprep.subr.mxu0 0.0
        %3152 = vmatpush1.msra.mxu0 0.0
        %3153 = vmatprep.subr.mxu0 0.0
        %3154 = vmatpush1.msra.mxu0 0.0
        %3155 = vmatprep.subr.mxu0 0.0
        %3156 = vmatpush1.msra.mxu0 0.0
        %3157 = vmatprep.subr.mxu0 0.0
        %3158 = vmatpush1.msra.mxu0 0.0
        %3159 = vmatprep.mubr.f32.mxu0 0.0
        %3160 = vmatmul.mubr.f32.gmra.mrb[0].mxu0 %v3093
        %v3161 = vpop.f32.mrb[0].mxu0
        %v3162 = vadd.f32 %v3090, %v3161
        %v3163 = vpop.f32.mrb[0].mxu0
        %3164 = vdwg.mxu0
        %s3165 = scalar_lea.vmem [#allocation21], 64
        %v3166 = vld [vmem:[%s3165] sm:$0xff]
        %v3167 = vld [vmem:[%s3165 + $0x8] sm:$0xff]
        %v3168 = vld [vmem:[%s3165 + $0x10] sm:$0xff]
        %v3169 = vld [vmem:[%s3165 + $0x18] sm:$0xff]
        %v3170 = vrot.slane %v3009, 2
        %v3171 = vsel %vm2429, %v3170, 0
        %3173 = vmatprep.subr.mxu0 0.0
        %3174 = vmatpush1.msra.mxu0 %v3166
        %3175 = vmatprep.subr.mxu0 0.0
        %3176 = vmatpush1.msra.mxu0 %v3167
        %3177 = vmatprep.subr.mxu0 0.0
        %3178 = vmatpush1.msra.mxu0 %v3168
        %3179 = vmatprep.subr.mxu0 0.0
        %3180 = vmatpush1.msra.mxu0 %v3169
        %3181 = vmatprep.subr.mxu0 0.0
        %3182 = vmatpush1.msra.mxu0 0.0
        %3183 = vmatprep.subr.mxu0 0.0
        %3184 = vmatpush1.msra.mxu0 0.0
        %3185 = vmatprep.subr.mxu0 0.0
        %3186 = vmatpush1.msra.mxu0 0.0
        %3187 = vmatprep.subr.mxu0 0.0
        %3188 = vmatpush1.msra.mxu0 0.0
        %3189 = vmatprep.subr.mxu0 0.0
        %3190 = vmatpush1.msra.mxu0 0.0
        %3191 = vmatprep.subr.mxu0 0.0
        %3192 = vmatpush1.msra.mxu0 0.0
        %3193 = vmatprep.subr.mxu0 0.0
        %3194 = vmatpush1.msra.mxu0 0.0
        %3195 = vmatprep.subr.mxu0 0.0
        %3196 = vmatpush1.msra.mxu0 0.0
        %3197 = vmatprep.subr.mxu0 0.0
        %3198 = vmatpush1.msra.mxu0 0.0
        %3199 = vmatprep.subr.mxu0 0.0
        %3200 = vmatpush1.msra.mxu0 0.0
        %3201 = vmatprep.subr.mxu0 0.0
        %3202 = vmatpush1.msra.mxu0 0.0
        %3203 = vmatprep.subr.mxu0 0.0
        %3204 = vmatpush1.msra.mxu0 0.0
        %3205 = vmatprep.subr.mxu0 0.0
        %3206 = vmatpush1.msra.mxu0 0.0
        %3207 = vmatprep.subr.mxu0 0.0
        %3208 = vmatpush1.msra.mxu0 0.0
        %3209 = vmatprep.subr.mxu0 0.0
        %3210 = vmatpush1.msra.mxu0 0.0
        %3211 = vmatprep.subr.mxu0 0.0
        %3212 = vmatpush1.msra.mxu0 0.0
        %3213 = vmatprep.subr.mxu0 0.0
        %3214 = vmatpush1.msra.mxu0 0.0
        %3215 = vmatprep.subr.mxu0 0.0
        %3216 = vmatpush1.msra.mxu0 0.0
        %3217 = vmatprep.subr.mxu0 0.0
        %3218 = vmatpush1.msra.mxu0 0.0
        %3219 = vmatprep.subr.mxu0 0.0
        %3220 = vmatpush1.msra.mxu0 0.0
        %3221 = vmatprep.subr.mxu0 0.0
        %3222 = vmatpush1.msra.mxu0 0.0
        %3223 = vmatprep.subr.mxu0 0.0
        %3224 = vmatpush1.msra.mxu0 0.0
        %3225 = vmatprep.subr.mxu0 0.0
        %3226 = vmatpush1.msra.mxu0 0.0
        %3227 = vmatprep.subr.mxu0 0.0
        %3228 = vmatpush1.msra.mxu0 0.0
        %3229 = vmatprep.subr.mxu0 0.0
        %3230 = vmatpush1.msra.mxu0 0.0
        %3231 = vmatprep.subr.mxu0 0.0
        %3232 = vmatpush1.msra.mxu0 0.0
        %3233 = vmatprep.subr.mxu0 0.0
        %3234 = vmatpush1.msra.mxu0 0.0
        %3235 = vmatprep.subr.mxu0 0.0
        %3236 = vmatpush1.msra.mxu0 0.0
        %3237 = vmatprep.mubr.f32.mxu0 0.0
        %3238 = vmatmul.mubr.f32.gmra.mrb[0].mxu0 %v3171
        %v3239 = vpop.f32.mrb[0].mxu0
        %v3240 = vadd.f32 0.0, %v3239
        %v3241 = vpop.f32.mrb[0].mxu0
        %3242 = vdwg.mxu0
        %v3243 = vadd.f32 %v3162, %v3240
        %v3244 = vld [vmem:[#allocation22] sm:$0x3]
        %v3245 = vlaneseq
        %v3246 = vshrl.u32 %v3245, 7
        %v3247 = vsub.s32 0, %v3246
        %v3248 = vrot.slane %v3244, %v3247
        %v3249 = vmul.f32 %v3243, %v3248
        %v3250 = vlaneseq
        %v3251 = vshrl.u32 %v3250, 7
        %v3252 = vsub.s32 1, %v3251
        %v3253 = vrot.slane %v3244, %v3252
        %v3254 = vadd.f32 %v3249, %v3253
        %vm3255 = vcmp.ge.f32.partialorder %v3254, 0.0
        %v3256 = vmul.f32 %v3254, 0.1
        %v3257 = vsel %vm3255, %v3254, %v3256
        %3258 = vrot.lane.b32.xlu0 %v2998, 8
        %v3259 = vpop.permute.xlu0 %3258
        %3262 = vrot.lane.b32.xlu0 %v3257, 8
        %v3263 = vpop.permute.xlu0 %3262
        %3265 = vrot.lane.b32.xlu0 %v2998, 16
        %v3266 = vpop.permute.xlu0 %3265
        %v3268 = vsel %vm1244, %v3257, %v3259
        %v3269 = vsel %vm1277, %v3268, %v3263
        %v3270 = vsel %vm1279, %v3269, %v3266
        %v3272 = vrot.slane %v3270, 7
        %v3274 = vsel %vm858, 0.0, %v3272
        %v3275 = vsel %vm1208, %v3274, 0.0
        %3277 = vrot.lane.b32.xlu0 %v3275, 16
        %v3278 = vpop.permute.xlu0 %3277
        %v3280 = vsel %vm1277, 0.0, %v3278
        %v3281 = vsel %vm1345, %v3280, 0.0
        %v3282 = vld [vmem:[#allocation24] sm:$0xff]
        %v3283 = vld [vmem:[#allocation24 + $0x8] sm:$0xff]
        %v3284 = vld [vmem:[#allocation24 + $0x10] sm:$0xff]
        %v3285 = vld [vmem:[#allocation24 + $0x18] sm:$0xff]
        %v3286 = vld [vmem:[#allocation24 + $0x20] sm:$0xff]
        %v3287 = vld [vmem:[#allocation24 + $0x28] sm:$0xff]
        %v3288 = vld [vmem:[#allocation24 + $0x30] sm:$0xff]
        %v3289 = vld [vmem:[#allocation24 + $0x38] sm:$0xff]
        %s3290 = scalar_lea.vmem [#allocation24], 64
        %v3291 = vld [vmem:[%s3290] sm:$0xff]
        %v3292 = vld [vmem:[%s3290 + $0x8] sm:$0xff]
        %v3293 = vld [vmem:[%s3290 + $0x10] sm:$0xff]
        %v3294 = vld [vmem:[%s3290 + $0x18] sm:$0xff]
        %v3295 = vld [vmem:[%s3290 + $0x20] sm:$0xff]
        %v3296 = vld [vmem:[%s3290 + $0x28] sm:$0xff]
        %v3297 = vld [vmem:[%s3290 + $0x30] sm:$0xff]
        %v3298 = vld [vmem:[%s3290 + $0x38] sm:$0xff]
        %v3300 = vrot.slane %v3281, 1
        %v3301 = vsel %vm2757, %v3300, 0
        %3303 = vmatprep.subr.mxu0 0.0
        %3304 = vmatpush1.msra.mxu0 %v3291
        %3305 = vmatprep.subr.mxu0 0.0
        %3306 = vmatpush1.msra.mxu0 %v3292
        %3307 = vmatprep.subr.mxu0 0.0
        %3308 = vmatpush1.msra.mxu0 %v3293
        %3309 = vmatprep.subr.mxu0 0.0
        %3310 = vmatpush1.msra.mxu0 %v3294
        %3311 = vmatprep.subr.mxu0 0.0
        %3312 = vmatpush1.msra.mxu0 %v3295
        %3313 = vmatprep.subr.mxu0 0.0
        %3314 = vmatpush1.msra.mxu0 %v3296
        %3315 = vmatprep.subr.mxu0 0.0
        %3316 = vmatpush1.msra.mxu0 %v3297
        %3317 = vmatprep.subr.mxu0 0.0
        %3318 = vmatpush1.msra.mxu0 %v3298
        %3319 = vmatprep.subr.mxu0 0.0
        %3320 = vmatpush1.msra.mxu0 0.0
        %3321 = vmatprep.subr.mxu0 0.0
        %3322 = vmatpush1.msra.mxu0 0.0
        %3323 = vmatprep.subr.mxu0 0.0
        %3324 = vmatpush1.msra.mxu0 0.0
        %3325 = vmatprep.subr.mxu0 0.0
        %3326 = vmatpush1.msra.mxu0 0.0
        %3327 = vmatprep.subr.mxu0 0.0
        %3328 = vmatpush1.msra.mxu0 0.0
        %3329 = vmatprep.subr.mxu0 0.0
        %3330 = vmatpush1.msra.mxu0 0.0
        %3331 = vmatprep.subr.mxu0 0.0
        %3332 = vmatpush1.msra.mxu0 0.0
        %3333 = vmatprep.subr.mxu0 0.0
        %3334 = vmatpush1.msra.mxu0 0.0
        %3335 = vmatprep.subr.mxu0 0.0
        %3336 = vmatpush1.msra.mxu0 0.0
        %3337 = vmatprep.subr.mxu0 0.0
        %3338 = vmatpush1.msra.mxu0 0.0
        %3339 = vmatprep.subr.mxu0 0.0
        %3340 = vmatpush1.msra.mxu0 0.0
        %3341 = vmatprep.subr.mxu0 0.0
        %3342 = vmatpush1.msra.mxu0 0.0
        %3343 = vmatprep.subr.mxu0 0.0
        %3344 = vmatpush1.msra.mxu0 0.0
        %3345 = vmatprep.subr.mxu0 0.0
        %3346 = vmatpush1.msra.mxu0 0.0
        %3347 = vmatprep.subr.mxu0 0.0
        %3348 = vmatpush1.msra.mxu0 0.0
        %3349 = vmatprep.subr.mxu0 0.0
        %3350 = vmatpush1.msra.mxu0 0.0
        %3351 = vmatprep.subr.mxu0 0.0
        %3352 = vmatpush1.msra.mxu0 0.0
        %3353 = vmatprep.subr.mxu0 0.0
        %3354 = vmatpush1.msra.mxu0 0.0
        %3355 = vmatprep.subr.mxu0 0.0
        %3356 = vmatpush1.msra.mxu0 0.0
        %3357 = vmatprep.subr.mxu0 0.0
        %3358 = vmatpush1.msra.mxu0 0.0
        %3359 = vmatprep.subr.mxu0 0.0
        %3360 = vmatpush1.msra.mxu0 0.0
        %3361 = vmatprep.subr.mxu0 0.0
        %3362 = vmatpush1.msra.mxu0 0.0
        %3363 = vmatprep.subr.mxu0 0.0
        %3364 = vmatpush1.msra.mxu0 0.0
        %3365 = vmatprep.subr.mxu0 0.0
        %3366 = vmatpush1.msra.mxu0 0.0
        %3367 = vmatprep.mubr.f32.mxu0 0.0
        %3368 = vmatmul.mubr.f32.gmra.mrb[0].mxu0 %v3301
        %v3369 = vpop.f32.mrb[0].mxu0
        %v3370 = vadd.f32 0.0, %v3369
        %v3371 = vpop.f32.mrb[0].mxu0
        %3372 = vdwg.mxu0
        %v3373 = vsel %vm2757, %v3281, 0
        %3375 = vmatprep.subr.mxu0 0.0
        %3376 = vmatpush1.msra.mxu0 %v3282
        %3377 = vmatprep.subr.mxu0 0.0
        %3378 = vmatpush1.msra.mxu0 %v3283
        %3379 = vmatprep.subr.mxu0 0.0
        %3380 = vmatpush1.msra.mxu0 %v3284
        %3381 = vmatprep.subr.mxu0 0.0
        %3382 = vmatpush1.msra.mxu0 %v3285
        %3383 = vmatprep.subr.mxu0 0.0
        %3384 = vmatpush1.msra.mxu0 %v3286
        %3385 = vmatprep.subr.mxu0 0.0
        %3386 = vmatpush1.msra.mxu0 %v3287
        %3387 = vmatprep.subr.mxu0 0.0
        %3388 = vmatpush1.msra.mxu0 %v3288
        %3389 = vmatprep.subr.mxu0 0.0
        %3390 = vmatpush1.msra.mxu0 %v3289
        %3391 = vmatprep.subr.mxu0 0.0
        %3392 = vmatpush1.msra.mxu0 0.0
        %3393 = vmatprep.subr.mxu0 0.0
        %3394 = vmatpush1.msra.mxu0 0.0
        %3395 = vmatprep.subr.mxu0 0.0
        %3396 = vmatpush1.msra.mxu0 0.0
        %3397 = vmatprep.subr.mxu0 0.0
        %3398 = vmatpush1.msra.mxu0 0.0
        %3399 = vmatprep.subr.mxu0 0.0
        %3400 = vmatpush1.msra.mxu0 0.0
        %3401 = vmatprep.subr.mxu0 0.0
        %3402 = vmatpush1.msra.mxu0 0.0
        %3403 = vmatprep.subr.mxu0 0.0
        %3404 = vmatpush1.msra.mxu0 0.0
        %3405 = vmatprep.subr.mxu0 0.0
        %3406 = vmatpush1.msra.mxu0 0.0
        %3407 = vmatprep.subr.mxu0 0.0
        %3408 = vmatpush1.msra.mxu0 0.0
        %3409 = vmatprep.subr.mxu0 0.0
        %3410 = vmatpush1.msra.mxu0 0.0
        %3411 = vmatprep.subr.mxu0 0.0
        %3412 = vmatpush1.msra.mxu0 0.0
        %3413 = vmatprep.subr.mxu0 0.0
        %3414 = vmatpush1.msra.mxu0 0.0
        %3415 = vmatprep.subr.mxu0 0.0
        %3416 = vmatpush1.msra.mxu0 0.0
        %3417 = vmatprep.subr.mxu0 0.0
        %3418 = vmatpush1.msra.mxu0 0.0
        %3419 = vmatprep.subr.mxu0 0.0
        %3420 = vmatpush1.msra.mxu0 0.0
        %3421 = vmatprep.subr.mxu0 0.0
        %3422 = vmatpush1.msra.mxu0 0.0
        %3423 = vmatprep.subr.mxu0 0.0
        %3424 = vmatpush1.msra.mxu0 0.0
        %3425 = vmatprep.subr.mxu0 0.0
        %3426 = vmatpush1.msra.mxu0 0.0
        %3427 = vmatprep.subr.mxu0 0.0
        %3428 = vmatpush1.msra.mxu0 0.0
        %3429 = vmatprep.subr.mxu0 0.0
        %3430 = vmatpush1.msra.mxu0 0.0
        %3431 = vmatprep.subr.mxu0 0.0
        %3432 = vmatpush1.msra.mxu0 0.0
        %3433 = vmatprep.subr.mxu0 0.0
        %3434 = vmatpush1.msra.mxu0 0.0
        %3435 = vmatprep.subr.mxu0 0.0
        %3436 = vmatpush1.msra.mxu0 0.0
        %3437 = vmatprep.subr.mxu0 0.0
        %3438 = vmatpush1.msra.mxu0 0.0
        %3439 = vmatprep.mubr.f32.mxu0 0.0
        %3440 = vmatmul.mubr.f32.gmra.mrb[0].mxu0 %v3373
        %v3441 = vpop.f32.mrb[0].mxu0
        %v3442 = vadd.f32 %v3370, %v3441
        %v3443 = vpop.f32.mrb[0].mxu0
        %3444 = vdwg.mxu0
        %s3445 = scalar_lea.vmem [#allocation24], 128
        %v3446 = vld [vmem:[%s3445] sm:$0xff]
        %v3447 = vld [vmem:[%s3445 + $0x8] sm:$0xff]
        %v3448 = vld [vmem:[%s3445 + $0x10] sm:$0xff]
        %v3449 = vld [vmem:[%s3445 + $0x18] sm:$0xff]
        %v3450 = vld [vmem:[%s3445 + $0x20] sm:$0xff]
        %v3451 = vld [vmem:[%s3445 + $0x28] sm:$0xff]
        %v3452 = vld [vmem:[%s3445 + $0x30] sm:$0xff]
        %v3453 = vld [vmem:[%s3445 + $0x38] sm:$0xff]
        %v3454 = vrot.slane %v3281, 2
        %v3455 = vsel %vm2757, %v3454, 0
        %3457 = vmatprep.subr.mxu0 0.0
        %3458 = vmatpush1.msra.mxu0 %v3446
        %3459 = vmatprep.subr.mxu0 0.0
        %3460 = vmatpush1.msra.mxu0 %v3447
        %3461 = vmatprep.subr.mxu0 0.0
        %3462 = vmatpush1.msra.mxu0 %v3448
        %3463 = vmatprep.subr.mxu0 0.0
        %3464 = vmatpush1.msra.mxu0 %v3449
        %3465 = vmatprep.subr.mxu0 0.0
        %3466 = vmatpush1.msra.mxu0 %v3450
        %3467 = vmatprep.subr.mxu0 0.0
        %3468 = vmatpush1.msra.mxu0 %v3451
        %3469 = vmatprep.subr.mxu0 0.0
        %3470 = vmatpush1.msra.mxu0 %v3452
        %3471 = vmatprep.subr.mxu0 0.0
        %3472 = vmatpush1.msra.mxu0 %v3453
        %3473 = vmatprep.subr.mxu0 0.0
        %3474 = vmatpush1.msra.mxu0 0.0
        %3475 = vmatprep.subr.mxu0 0.0
        %3476 = vmatpush1.msra.mxu0 0.0
        %3477 = vmatprep.subr.mxu0 0.0
        %3478 = vmatpush1.msra.mxu0 0.0
        %3479 = vmatprep.subr.mxu0 0.0
        %3480 = vmatpush1.msra.mxu0 0.0
        %3481 = vmatprep.subr.mxu0 0.0
        %3482 = vmatpush1.msra.mxu0 0.0
        %3483 = vmatprep.subr.mxu0 0.0
        %3484 = vmatpush1.msra.mxu0 0.0
        %3485 = vmatprep.subr.mxu0 0.0
        %3486 = vmatpush1.msra.mxu0 0.0
        %3487 = vmatprep.subr.mxu0 0.0
        %3488 = vmatpush1.msra.mxu0 0.0
        %3489 = vmatprep.subr.mxu0 0.0
        %3490 = vmatpush1.msra.mxu0 0.0
        %3491 = vmatprep.subr.mxu0 0.0
        %3492 = vmatpush1.msra.mxu0 0.0
        %3493 = vmatprep.subr.mxu0 0.0
        %3494 = vmatpush1.msra.mxu0 0.0
        %3495 = vmatprep.subr.mxu0 0.0
        %3496 = vmatpush1.msra.mxu0 0.0
        %3497 = vmatprep.subr.mxu0 0.0
        %3498 = vmatpush1.msra.mxu0 0.0
        %3499 = vmatprep.subr.mxu0 0.0
        %3500 = vmatpush1.msra.mxu0 0.0
        %3501 = vmatprep.subr.mxu0 0.0
        %3502 = vmatpush1.msra.mxu0 0.0
        %3503 = vmatprep.subr.mxu0 0.0
        %3504 = vmatpush1.msra.mxu0 0.0
        %3505 = vmatprep.subr.mxu0 0.0
        %3506 = vmatpush1.msra.mxu0 0.0
        %3507 = vmatprep.subr.mxu0 0.0
        %3508 = vmatpush1.msra.mxu0 0.0
        %3509 = vmatprep.subr.mxu0 0.0
        %3510 = vmatpush1.msra.mxu0 0.0
        %3511 = vmatprep.subr.mxu0 0.0
        %3512 = vmatpush1.msra.mxu0 0.0
        %3513 = vmatprep.subr.mxu0 0.0
        %3514 = vmatpush1.msra.mxu0 0.0
        %3515 = vmatprep.subr.mxu0 0.0
        %3516 = vmatpush1.msra.mxu0 0.0
        %3517 = vmatprep.subr.mxu0 0.0
        %3518 = vmatpush1.msra.mxu0 0.0
        %3519 = vmatprep.subr.mxu0 0.0
        %3520 = vmatpush1.msra.mxu0 0.0
        %3521 = vmatprep.mubr.f32.mxu0 0.0
        %3522 = vmatmul.mubr.f32.gmra.mrb[0].mxu0 %v3455
        %v3523 = vpop.f32.mrb[0].mxu0
        %v3524 = vadd.f32 0.0, %v3523
        %v3525 = vpop.f32.mrb[0].mxu0
        %3526 = vdwg.mxu0
        %v3527 = vadd.f32 %v3442, %v3524
        %v3528 = vld [vmem:[#allocation25] sm:$0x3]
        %v3529 = vlaneseq
        %v3530 = vshrl.u32 %v3529, 7
        %v3531 = vsub.s32 0, %v3530
        %v3532 = vrot.slane %v3528, %v3531
        %v3533 = vmul.f32 %v3527, %v3532
        %v3534 = vlaneseq
        %v3535 = vshrl.u32 %v3534, 7
        %v3536 = vsub.s32 1, %v3535
        %v3537 = vrot.slane %v3528, %v3536
        %v3538 = vadd.f32 %v3533, %v3537
        %vm3539 = vcmp.ge.f32.partialorder %v3538, 0.0
        %v3540 = vmul.f32 %v3538, 0.1
        %v3541 = vsel %vm3539, %v3538, %v3540
        %3542 = vrot.lane.b32.xlu0 %v2726, 16
        %v3543 = vpop.permute.xlu0 %3542
        %3546 = vrot.lane.b32.xlu0 %v3541, 16
        %v3547 = vpop.permute.xlu0 %3546
        %3549 = vrot.lane.b32.xlu0 %v2726, 32
        %v3550 = vpop.permute.xlu0 %3549
        %v3552 = vsel %vm1277, %v3541, %v3543
        %v3553 = vsel %vm2429, %v3552, %v3547
        %v3554 = vsel %vm1345, %v3553, %v3550
        %vm3555 = vcmask 517120
        %3556 = vst.msk [vmem:[%s853] sm:$0x3] %vm3555, %v3554
        %p3557 = scmp.lt.s32.totalorder %s41, 1
        %s3558 = scalar_select %p3557, %s41, 1
        %s3559 = smul.addr %s3558, 4
        %s3560 = scalar_lea.vmem %s19, %s3559
        %p3561 = scmp.lt.s32.totalorder %s41, 1
        %s3562 = scalar_select %p3561, %s41, 1
        %s3563 = smul.addr %s3562, 2
        %s3564 = scalar_lea.vmem %s20, %s3563
        // Predicated region
        $region161: #{_lambda_.1} parent=95 // pred_check
          %p3565 = pneg %p463
        $region162: #{_lambda_.1} parent=95 // pred_check_branch
          %3567 = sbr.rel (%p3565) target = $region164
        $region163: #{_lambda_.1} parent=95 // pred_region
          _
        $region164: #{_lambda_.1} parent=95 // pred_fallthru
          _
        // Predicated region
        $region165: #{_lambda_.1} parent=95 // pred_check
          %p3568 = pneg %p489
        $region166: #{_lambda_.1} parent=95 // pred_check_branch
          %3570 = sbr.rel (%p3568) target = $region168
        $region167: #{_lambda_.1} parent=95 // pred_region
          _
        $region168: #{_lambda_.1} parent=95 // pred_fallthru
          _
      $region96: #{_lambda_.1} parent=5 // pred_fallthru
        _
      %p3571 = scmp.le.s32.totalorder 2, %s36
      // Predicated region
      $region169: #{_lambda_.1} parent=5 // pred_check
        %p3572 = pneg %p3571
      $region170: #{_lambda_.1} parent=5 // pred_check_branch
        %3574 = sbr.rel (%p3572) target = $region172
      $region171: #{_lambda_.1} parent=5 // pred_region
        %s3575 = ssub.s32 %s36, 2
        // Predicated region
        $region173: #{_lambda_.1} parent=171 // pred_check
          %p3576 = pneg %p469
        $region174: #{_lambda_.1} parent=171 // pred_check_branch
          %3578 = sbr.rel (%p3576) target = $region176
        $region175: #{_lambda_.1} parent=171 // pred_region
          %p3579 = scmp.lt.s32.totalorder %s42, 1
          %s3580 = scalar_select %p3579, %s42, 1
          %s3581 = smul.addr %s3580, 4
          %s3582 = scalar_lea.vmem %s19, %s3581
        $region176: #{_lambda_.1} parent=171 // pred_fallthru
          _
        // Predicated region
        $region177: #{_lambda_.1} parent=171 // pred_check
          %p3583 = pneg %p495
        $region178: #{_lambda_.1} parent=171 // pred_check_branch
          %3585 = sbr.rel (%p3583) target = $region180
        $region179: #{_lambda_.1} parent=171 // pred_region
          %p3586 = scmp.lt.s32.totalorder %s42, 1
          %s3587 = scalar_select %p3586, %s42, 1
          %s3588 = smul.addr %s3587, 2
          %s3589 = scalar_lea.vmem %s20, %s3588
        $region180: #{_lambda_.1} parent=171 // pred_fallthru
          _
      $region172: #{_lambda_.1} parent=5 // pred_fallthru
        _
    $region6: #{_lambda_.1} parent=1 // loop_footer
      %s40 = sadd.s32 1, %s36
    $region7: #{_lambda_.1} parent=1 // loop_footer_branch
      %35 = sbr.rel target = $region3
    $region8: #{_lambda_.1} parent=1 // loop_exit
      _
    %3590 = vsyncpa [#allocation3], 1
    %s3591 = scalar_lea.sflag [#allocation3], 1
    %3592 = vsyncpa %s3591, 1
    %3593 = vsyncpa [#allocation5], 1
    %3594 = vsyncpa [#allocation8], 1
    %3595 = vsyncpa [#allocation11], 1
    %3596 = vsyncpa [#allocation14], 1
    %3597 = vsyncpa [#allocation17], 1
    %3598 = vsyncpa [#allocation20], 1
    %3599 = vsyncpa [#allocation23], 1
    %3600 = vsyncpa [#allocation26], 1

</llo_original>
